<compile_context>
chip_gen: v7x
topology: tpu7x:2x2x1
jax: 0.10.0
libtpu: 0.0.40
codegen_flags: <defaults>
</compile_context>

<pallas_src>
import jax
import jax.numpy as jnp
import numpy as np
from jax.experimental import pallas as pl
from jax.experimental.pallas import tpu as pltpu

LANE = 128   # lane-dense width for K / F / num_classes *inside the kernel / weights only*
TB = 8       # samples per grid step -> (8, 128) unmasked output stores, M = TB*HW per matmul


# ----------------------------- Pallas kernel ------------------------------ #
def _base_model_kernel(patches_ref, convw_ref, fcw_ref, fcb_ref, out_ref, pk_scratch):
    """TB samples per grid step, everything lane-dense (128) inside the kernel:
         lane-pad patches 37->128 in VMEM -> conv-as-matmul (bf16 MXU, f32 acc,
         bias folded via ones column) -> ReLU (f32 VPU) -> per-sample sum pool
         (1/HW folded into fc_w) -> FC matmul (bf16 MXU, f32 acc) + fc_b -> store."""
    m, k_real = patches_ref.shape          # (TB*HW, 37)
    tb = out_ref.shape[0]                  # TB
    hw = m // tb                           # HW

    # Lane-pad the narrow HBM patches into a lane-dense VMEM operand.
    # Re-zero every step (cheap) so padded lanes are 0 on every core under
    # "parallel" megacore sharding, not just on program_id 0.
    pk_scratch[...] = jnp.zeros_like(pk_scratch)
    pk_scratch[:, :k_real] = patches_ref[...]

    # Conv-as-matmul: [TB*HW, 128] x [128, 128], bf16 operands, f32 accumulation.
    feat = jnp.dot(pk_scratch[...], convw_ref[...],
                   preferred_element_type=jnp.float32)          # [TB*HW, FP] f32
    feat = jnp.maximum(feat, 0.0)                               # ReLU (bias already folded)

    # Per-sample global pool (mean's 1/HW is folded into fc_w): sum over HW only.
    pooled = jnp.sum(feat.reshape(tb, hw, feat.shape[-1]), axis=1)   # [TB, FP] f32

    # FC: [TB, 128] x [128, 128] bf16 MXU with f32 accumulation, f32 bias add.
    logits = jnp.dot(pooled.astype(fcw_ref.dtype), fcw_ref[...],
                     preferred_element_type=jnp.float32) + fcb_ref[...]
    out_ref[...] = logits.astype(out_ref.dtype)                 # unmasked (TB, 128) store


# ------------------------------ JAX wrapper -------------------------------- #
def _im2col_3x3_same(x_nhwc):
    """3x3 'SAME' patches. Returns [N, H*W, 9*C], tap order (kh, kw, C)."""
    n, h, w, c = x_nhwc.shape
    xp = jnp.pad(x_nhwc, ((0, 0), (1, 1), (1, 1), (0, 0)))
    cols = [xp[:, i:i + h, j:j + w, :] for i in range(3) for j in range(3)]
    patches = jnp.concatenate(cols, axis=-1)                # [N, H, W, 9*C]
    return patches.reshape(n, h * w, 9 * c)


@jax.jit
def base_model_forward(x_nchw, conv_w, conv_b, fc_w, fc_b):
    """Base_Model.forward(x) == model(x).  x is NCHW like PyTorch."""
    n, c, h, w = x_nchw.shape
    k_in, f = conv_w.shape            # 9*C, F
    nc = fc_w.shape[1]                # num_classes
    hw = h * w
    kp = fp = cp = LANE               # lane-dense K / F / classes (kernel-side)
    k_real = k_in + 1                 # +1 constant-1 column carrying the conv bias
    n_pad = pl.cdiv(n, TB) * TB       # pad batch to a multiple of TB

    # --- preprocessing (XLA): NCHW->NHWC, 3x3 im2col, bias column, bf16 cast ---
    x_nhwc = jnp.transpose(x_nchw, (0, 2, 3, 1)).astype(jnp.float32)
    patches = _im2col_3x3_same(x_nhwc)                              # [N, HW, 9C] f32
    ones = jnp.ones((n, hw, 1), jnp.float32)                        # bias column
    patches = jnp.concatenate([patches, ones], axis=-1)             # [N, HW, 9C+1]
    patches = patches.astype(jnp.bfloat16)                          # bf16 MXU operand
    patches = jnp.pad(patches, ((0, n_pad - n), (0, 0), (0, 0)))    # pad batch only
    patches = patches.reshape(n_pad * hw, k_real)                   # [N_pad*HW, 37] bf16

    # Zero-padded, lane-dense parameters (padding contributes exactly 0 to logits).
    conv_w_p = jnp.zeros((kp, fp), jnp.float32)
    conv_w_p = conv_w_p.at[:k_in, :f].set(conv_w)
    conv_w_p = conv_w_p.at[k_in, :f].set(conv_b)                    # bias row (ones column)
    conv_w_p = conv_w_p.astype(jnp.bfloat16)                        # bf16 MXU operand
    fc_w_p = jnp.zeros((fp, cp), jnp.float32).at[:f, :nc].set(fc_w / hw)  # fold mean-pool (f32)
    fc_w_p = fc_w_p.astype(jnp.bfloat16)                            # bf16 MXU operand
    fc_b_p = jnp.zeros((1, cp), jnp.float32).at[0, :nc].set(fc_b)   # f32 bias add

    grid_len = n_pad // TB
    cost = pl.CostEstimate(
        flops=2 * n_pad * hw * kp * fp + 2 * n_pad * fp * cp,
        transcendentals=0,
        bytes_accessed=(patches.size * 2 + (kp * fp + fp * cp) * 2
                        + cp * 4 + n_pad * cp * 4),
    )

    out = pl.pallas_call(
        _base_model_kernel,
        out_shape=jax.ShapeDtypeStruct((n_pad, cp), jnp.float32),
        grid_spec=pltpu.PrefetchScalarGridSpec(
            num_scalar_prefetch=0,
            grid=(grid_len,),                                       # TB samples per step
            in_specs=[
                pl.BlockSpec((TB * hw, k_real), lambda i: (i, 0)),  # narrow (37-lane) patches
                pl.BlockSpec((kp, fp), lambda i: (0, 0)),           # conv_w (+bias row), resident
                pl.BlockSpec((fp, cp), lambda i: (0, 0)),           # fc_w (pre-scaled, bf16)
                pl.BlockSpec((1, cp), lambda i: (0, 0)),            # fc_b (f32)
            ],
            out_specs=pl.BlockSpec((TB, cp), lambda i: (i, 0)),     # sublane-dense store
            scratch_shapes=[pltpu.VMEM((TB * hw, kp), jnp.bfloat16)],  # lane-pad staging
        ),
        compiler_params=pltpu.CompilerParams(
            dimension_semantics=("parallel",)),                     # megacore on v7x
        cost_estimate=cost,
    )(patches, conv_w_p, fc_w_p, fc_b_p)

    return out[:n, :nc]                                             # un-pad batch & classes


def base_model_loss(logits, target):
    """Base_Model.loss: criterion (cross-entropy) -> {'cls_loss': loss}.
    The criterion is an injected dependency (glue), kept in plain JAX."""
    logz = jax.nn.log_softmax(logits, axis=-1)
    nll = -jnp.take_along_axis(logz, target[:, None], axis=-1).mean()
    return {"cls_loss": nll}


# ------------------------------- Reference --------------------------------- #
def _reference_forward(x_nchw, conv_w, conv_b, fc_w, fc_b):
    """Pure-f32 reference with PyTorch semantics (conv -> ReLU -> GAP -> FC)."""
    x_nhwc = jnp.transpose(x_nchw, (0, 2, 3, 1)).astype(jnp.float32)
    c = x_nhwc.shape[-1]
    f = conv_w.shape[1]
    w_hwio = conv_w.reshape(3, 3, c, f)             # matches (kh, kw, C) tap order
    y = jax.lax.conv_general_dilated(
        x_nhwc, w_hwio, window_strides=(1, 1), padding="SAME",
        dimension_numbers=("NHWC", "HWIO", "NHWC"))
    y = jnp.maximum(y + conv_b[None, None, None, :], 0.0)
    pooled = jnp.mean(y, axis=(1, 2))
    return pooled @ fc_w + fc_b[None, :]


# --------------------------------- Main ------------------------------------ #
if __name__ == "__main__":
    N, C, H, W = 2, 4, 16, 16
    F_OUT, NUM_CLASSES = 8, 10

    key = jax.random.PRNGKey(0)
    k_x, k_cw, k_cb, k_fw, k_fb = jax.random.split(key, 5)

    x = jax.random.normal(k_x, (N, C, H, W), dtype=jnp.float32)
    conv_w = jax.random.normal(k_cw, (3 * 3 * C, F_OUT), jnp.float32) * 0.1
    conv_b = jax.random.normal(k_cb, (F_OUT,), jnp.float32) * 0.1
    fc_w = jax.random.normal(k_fw, (F_OUT, NUM_CLASSES), jnp.float32) * 0.1
    fc_b = jax.random.normal(k_fb, (NUM_CLASSES,), jnp.float32) * 0.1

    logits = jax.block_until_ready(base_model_forward(x, conv_w, conv_b, fc_w, fc_b))
    ref = jax.block_until_ready(_reference_forward(x, conv_w, conv_b, fc_w, fc_b))

    # Tolerance sized for bf16 MXU operands (conv + FC) with f32 accumulation
    # (reference is pure f32); real semantic bugs would be orders of magnitude larger.
    np.testing.assert_allclose(np.asarray(logits), np.asarray(ref),
                               rtol=2e-2, atol=1e-2)

    # Exercise loss() path as well (mirrors Base_Model.loss API).
    target = jnp.array([1, 7], dtype=jnp.int32)
    _ = jax.block_until_ready(base_model_loss(logits, target)["cls_loss"])

    print("KERNEL_OK")
</pallas_src>

<mosaic_0001>
module attributes {stable_mosaic.version = 11 : i64} {
  func.func @_base_model_kernel(%arg0: i32, %arg1: memref<2048x37xbf16, #tpu.memory_space<vmem>>, %arg2: memref<128x128xbf16, #tpu.memory_space<vmem>>, %arg3: memref<128x128xbf16, #tpu.memory_space<vmem>>, %arg4: memref<1x128xf32, #tpu.memory_space<vmem>>, %arg5: memref<8x128xf32, #tpu.memory_space<vmem>>, %arg6: memref<2048x128xbf16, #tpu.memory_space<vmem>>) attributes {dimension_semantics = [#tpu.dimension_semantics<parallel>], iteration_bounds = array<i64: 1>, scalar_prefetch = 0 : i64, scratch_operands = 1 : i64, tpu.core_type = #tpu.core_type<tc>, window_params = [{transform_indices = @transform_0, window_bounds = array<i64: 2048, 37>}, {pipeline_mode = #tpu.pipeline_mode<synchronous>, transform_indices = @transform_1, window_bounds = array<i64: 128, 128>}, {pipeline_mode = #tpu.pipeline_mode<synchronous>, transform_indices = @transform_2, window_bounds = array<i64: 128, 128>}, {pipeline_mode = #tpu.pipeline_mode<synchronous>, transform_indices = @transform_3, window_bounds = array<i64: 1, 128>}, {transform_indices = @transform_4, window_bounds = array<i64: 8, 128>}]} {
    %cst = arith.constant 0.000000e+00 : bf16
    %0 = vector.broadcast %cst : bf16 to vector<2048x128xbf16>
    %c0 = arith.constant 0 : index
    %c0_0 = arith.constant 0 : index
    %1 = vector.load %arg6[%c0, %c0_0] : memref<2048x128xbf16, #tpu.memory_space<vmem>>, vector<2048x128xbf16>
    tpu.vector_store %arg6[%c0, %c0_0], %0 {strides = array<i32>} : memref<2048x128xbf16, #tpu.memory_space<vmem>>, vector<2048x128xbf16>,
    %c0_1 = arith.constant 0 : index
    %c0_2 = arith.constant 0 : index
    %2 = vector.load %arg1[%c0_1, %c0_2] : memref<2048x37xbf16, #tpu.memory_space<vmem>>, vector<2048x37xbf16>
    %c0_3 = arith.constant 0 : index
    %c0_4 = arith.constant 0 : index
    %3 = vector.load %arg6[%c0_3, %c0_4] : memref<2048x128xbf16, #tpu.memory_space<vmem>>, vector<2048x37xbf16>
    tpu.vector_store %arg6[%c0_3, %c0_4], %2 {strides = array<i32>} : memref<2048x128xbf16, #tpu.memory_space<vmem>>, vector<2048x37xbf16>,
    %c0_5 = arith.constant 0 : index
    %c0_6 = arith.constant 0 : index
    %4 = vector.load %arg6[%c0_5, %c0_6] : memref<2048x128xbf16, #tpu.memory_space<vmem>>, vector<2048x128xbf16>
    %c0_7 = arith.constant 0 : index
    %c0_8 = arith.constant 0 : index
    %5 = vector.load %arg2[%c0_7, %c0_8] : memref<128x128xbf16, #tpu.memory_space<vmem>>, vector<128x128xbf16>
    %cst_9 = arith.constant dense<0.000000e+00> : vector<2048x128xf32>
    %6 = tpu.matmul %4, %5, %cst_9 {dimension_numbers = #tpu.dot_dimension_numbers<[1], [0], [0], [1], [0, 0, 1, 1], [], []>} : vector<2048x128xbf16>, vector<128x128xbf16>, vector<2048x128xf32> -> vector<2048x128xf32>
    %cst_10 = arith.constant 0.000000e+00 : f32
    %7 = vector.broadcast %cst_10 : f32 to vector<2048x128xf32>
    %8 = arith.maximumf %6, %7 : vector<2048x128xf32>
    %9 = vector.shape_cast %8 : vector<2048x128xf32> to vector<8x256x128xf32>
    %cst_11 = arith.constant dense<0.000000e+00> : vector<8x128xf32>
    %10 = vector.multi_reduction <add>, %9, %cst_11 [1] : vector<8x256x128xf32> to vector<8x128xf32>
    %11 = arith.truncf %10 : vector<8x128xf32> to vector<8x128xbf16>
    %c0_12 = arith.constant 0 : index
    %c0_13 = arith.constant 0 : index
    %12 = vector.load %arg3[%c0_12, %c0_13] : memref<128x128xbf16, #tpu.memory_space<vmem>>, vector<128x128xbf16>
    %cst_14 = arith.constant dense<0.000000e+00> : vector<8x128xf32>
    %13 = tpu.matmul %11, %12, %cst_14 {dimension_numbers = #tpu.dot_dimension_numbers<[1], [0], [0], [1], [0, 0, 1, 1], [], []>} : vector<8x128xbf16>, vector<128x128xbf16>, vector<8x128xf32> -> vector<8x128xf32>
    %c0_15 = arith.constant 0 : index
    %c0_16 = arith.constant 0 : index
    %14 = vector.load %arg4[%c0_15, %c0_16] : memref<1x128xf32, #tpu.memory_space<vmem>>, vector<1x128xf32>
    %15 = vector.broadcast %14 : vector<1x128xf32> to vector<8x128xf32>
    %16 = arith.addf %13, %15 : vector<8x128xf32>
    %c0_17 = arith.constant 0 : index
    %c0_18 = arith.constant 0 : index
    %17 = vector.load %arg5[%c0_17, %c0_18] : memref<8x128xf32, #tpu.memory_space<vmem>>, vector<8x128xf32>
    tpu.vector_store %arg5[%c0_17, %c0_18], %16 {strides = array<i32>} : memref<8x128xf32, #tpu.memory_space<vmem>>, vector<8x128xf32>,
    return
  }
  func.func @transform_0(%arg0: i32) -> (i32, i32) {
    %c0_i32 = arith.constant 0 : i32
    %c0_i32_0 = arith.constant 0 : i32
    return %arg0, %c0_i32 : i32, i32
  }
  func.func @transform_1(%arg0: i32) -> (i32, i32) {
    %c0_i32 = arith.constant 0 : i32
    %c0_i32_0 = arith.constant 0 : i32
    %c0_i32_1 = arith.constant 0 : i32
    return %c0_i32, %c0_i32_0 : i32, i32
  }
  func.func @transform_2(%arg0: i32) -> (i32, i32) {
    %c0_i32 = arith.constant 0 : i32
    %c0_i32_0 = arith.constant 0 : i32
    %c0_i32_1 = arith.constant 0 : i32
    return %c0_i32, %c0_i32_0 : i32, i32
  }
  func.func @transform_3(%arg0: i32) -> (i32, i32) {
    %c0_i32 = arith.constant 0 : i32
    %c0_i32_0 = arith.constant 0 : i32
    %c0_i32_1 = arith.constant 0 : i32
    return %c0_i32, %c0_i32_0 : i32, i32
  }
  func.func @transform_4(%arg0: i32) -> (i32, i32) {
    %c0_i32 = arith.constant 0 : i32
    %c0_i32_0 = arith.constant 0 : i32
    return %arg0, %c0_i32 : i32, i32
  }
}

</mosaic_0001>

<llo_original>
// kernel: base_model_forward.1
$region0: #{base_model_forward.1}
  #allocation0 [shape = 'u32[]', space=smem, size = 0x4, offset = 0x4, fixed_abs, tag = 'smem constant byte address 0x4 - core index']
  #allocation1 [shape = 'u32[144,128]{1,0:T(1,128)}', space=vmem, size = 0x12000, scoped, tag = 'internal scratch']
  #allocation2 [shape = 'bf16[2048,128]{1,0:T(16,128)(2,1)}', space=vmem, size = 0x80000, scoped, tag = 'scratch operand']
  %s0 = inlined_call_operand.vmem [shape: bf16[2048,37], index: 0, kind: input, shape index: {}]
  %s1 = inlined_call_operand.vmem [shape: bf16[128,128], index: 1, kind: input, shape index: {}]
  %s2 = inlined_call_operand.vmem [shape: bf16[128,128], index: 2, kind: input, shape index: {}]
  %s3 = inlined_call_operand.vmem [shape: f32[1,128], index: 3, kind: input, shape index: {}]
  %s4 = inlined_call_operand.vmem [shape: f32[8,128], index: 4, kind: output, shape index: {}]
  %s5 = sld [smem:[#allocation0]]
  $region26: #{base_model_forward.1} parent=0
    _
  %s7 = ssub.s32 1, %s5
  %s8 = scalar_select 0, %s7, %s5
  // Predicated region
  $region2: #{base_model_forward.1} parent=0 // pred_check
    _
  $region3: #{base_model_forward.1} parent=0 // pred_check_branch
    %10 = sbr.rel (0) target = $region5
  $region4: #{base_model_forward.1} parent=0 // pred_region
    _
  $region5: #{base_model_forward.1} parent=0 // pred_fallthru
    _
  // Predicated region
  $region6: #{base_model_forward.1} parent=0 // pred_check
    _
  $region7: #{base_model_forward.1} parent=0 // pred_check_branch
    %12 = sbr.rel (0) target = $region9
  $region8: #{base_model_forward.1} parent=0 // pred_region
    _
  $region9: #{base_model_forward.1} parent=0 // pred_fallthru
    _
  // Predicated region
  $region10: #{base_model_forward.1} parent=0 // pred_check
    _
  $region11: #{base_model_forward.1} parent=0 // pred_check_branch
    %14 = sbr.rel (0) target = $region13
  $region12: #{base_model_forward.1} parent=0 // pred_region
    _
  $region13: #{base_model_forward.1} parent=0 // pred_fallthru
    _
  // Predicated region
  $region14: #{base_model_forward.1} parent=0 // pred_check
    _
  $region15: #{base_model_forward.1} parent=0 // pred_check_branch
    %16 = sbr.rel (0) target = $region17
  $region16: #{base_model_forward.1} parent=0 // pred_region
    _
  $region17: #{base_model_forward.1} parent=0 // pred_fallthru
    _
  %18 = vst [vmem:[#allocation2] sm:$0xff] 0
  %19 = vst [vmem:[#allocation2 + $0x8] sm:$0xff] 0
  %20 = vst [vmem:[#allocation2 + $0x10] sm:$0xff] 0
  %21 = vst [vmem:[#allocation2 + $0x18] sm:$0xff] 0
  %22 = vst [vmem:[#allocation2 + $0x20] sm:$0xff] 0
  %23 = vst [vmem:[#allocation2 + $0x28] sm:$0xff] 0
  %24 = vst [vmem:[#allocation2 + $0x30] sm:$0xff] 0
  %25 = vst [vmem:[#allocation2 + $0x38] sm:$0xff] 0
  %26 = vst [vmem:[#allocation2 + $0x40] sm:$0xff] 0
  %27 = vst [vmem:[#allocation2 + $0x48] sm:$0xff] 0
  %28 = vst [vmem:[#allocation2 + $0x50] sm:$0xff] 0
  %29 = vst [vmem:[#allocation2 + $0x58] sm:$0xff] 0
  %30 = vst [vmem:[#allocation2 + $0x60] sm:$0xff] 0
  %31 = vst [vmem:[#allocation2 + $0x68] sm:$0xff] 0
  %32 = vst [vmem:[#allocation2 + $0x70] sm:$0xff] 0
  %33 = vst [vmem:[#allocation2 + $0x78] sm:$0xff] 0
  %34 = vst [vmem:[#allocation2 + $0x80] sm:$0xff] 0
  %35 = vst [vmem:[#allocation2 + $0x88] sm:$0xff] 0
  %36 = vst [vmem:[#allocation2 + $0x90] sm:$0xff] 0
  %37 = vst [vmem:[#allocation2 + $0x98] sm:$0xff] 0
  %38 = vst [vmem:[#allocation2 + $0xa0] sm:$0xff] 0
  %39 = vst [vmem:[#allocation2 + $0xa8] sm:$0xff] 0
  %40 = vst [vmem:[#allocation2 + $0xb0] sm:$0xff] 0
  %41 = vst [vmem:[#allocation2 + $0xb8] sm:$0xff] 0
  %42 = vst [vmem:[#allocation2 + $0xc0] sm:$0xff] 0
  %43 = vst [vmem:[#allocation2 + $0xc8] sm:$0xff] 0
  %44 = vst [vmem:[#allocation2 + $0xd0] sm:$0xff] 0
  %45 = vst [vmem:[#allocation2 + $0xd8] sm:$0xff] 0
  %46 = vst [vmem:[#allocation2 + $0xe0] sm:$0xff] 0
  %47 = vst [vmem:[#allocation2 + $0xe8] sm:$0xff] 0
  %48 = vst [vmem:[#allocation2 + $0xf0] sm:$0xff] 0
  %49 = vst [vmem:[#allocation2 + $0xf8] sm:$0xff] 0
  %50 = vst [vmem:[#allocation2 + $0x100] sm:$0xff] 0
  %51 = vst [vmem:[#allocation2 + $0x108] sm:$0xff] 0
  %52 = vst [vmem:[#allocation2 + $0x110] sm:$0xff] 0
  %53 = vst [vmem:[#allocation2 + $0x118] sm:$0xff] 0
  %54 = vst [vmem:[#allocation2 + $0x120] sm:$0xff] 0
  %55 = vst [vmem:[#allocation2 + $0x128] sm:$0xff] 0
  %56 = vst [vmem:[#allocation2 + $0x130] sm:$0xff] 0
  %57 = vst [vmem:[#allocation2 + $0x138] sm:$0xff] 0
  %58 = vst [vmem:[#allocation2 + $0x140] sm:$0xff] 0
  %59 = vst [vmem:[#allocation2 + $0x148] sm:$0xff] 0
  %60 = vst [vmem:[#allocation2 + $0x150] sm:$0xff] 0
  %61 = vst [vmem:[#allocation2 + $0x158] sm:$0xff] 0
  %62 = vst [vmem:[#allocation2 + $0x160] sm:$0xff] 0
  %63 = vst [vmem:[#allocation2 + $0x168] sm:$0xff] 0
  %64 = vst [vmem:[#allocation2 + $0x170] sm:$0xff] 0
  %65 = vst [vmem:[#allocation2 + $0x178] sm:$0xff] 0
  %66 = vst [vmem:[#allocation2 + $0x180] sm:$0xff] 0
  %67 = vst [vmem:[#allocation2 + $0x188] sm:$0xff] 0
  %68 = vst [vmem:[#allocation2 + $0x190] sm:$0xff] 0
  %69 = vst [vmem:[#allocation2 + $0x198] sm:$0xff] 0
  %70 = vst [vmem:[#allocation2 + $0x1a0] sm:$0xff] 0
  %71 = vst [vmem:[#allocation2 + $0x1a8] sm:$0xff] 0
  %72 = vst [vmem:[#allocation2 + $0x1b0] sm:$0xff] 0
  %73 = vst [vmem:[#allocation2 + $0x1b8] sm:$0xff] 0
  %74 = vst [vmem:[#allocation2 + $0x1c0] sm:$0xff] 0
  %75 = vst [vmem:[#allocation2 + $0x1c8] sm:$0xff] 0
  %76 = vst [vmem:[#allocation2 + $0x1d0] sm:$0xff] 0
  %77 = vst [vmem:[#allocation2 + $0x1d8] sm:$0xff] 0
  %78 = vst [vmem:[#allocation2 + $0x1e0] sm:$0xff] 0
  %79 = vst [vmem:[#allocation2 + $0x1e8] sm:$0xff] 0
  %80 = vst [vmem:[#allocation2 + $0x1f0] sm:$0xff] 0
  %81 = vst [vmem:[#allocation2 + $0x1f8] sm:$0xff] 0
  %82 = vst [vmem:[#allocation2 + $0x200] sm:$0xff] 0
  %83 = vst [vmem:[#allocation2 + $0x208] sm:$0xff] 0
  %84 = vst [vmem:[#allocation2 + $0x210] sm:$0xff] 0
  %85 = vst [vmem:[#allocation2 + $0x218] sm:$0xff] 0
  %86 = vst [vmem:[#allocation2 + $0x220] sm:$0xff] 0
  %87 = vst [vmem:[#allocation2 + $0x228] sm:$0xff] 0
  %88 = vst [vmem:[#allocation2 + $0x230] sm:$0xff] 0
  %89 = vst [vmem:[#allocation2 + $0x238] sm:$0xff] 0
  %90 = vst [vmem:[#allocation2 + $0x240] sm:$0xff] 0
  %91 = vst [vmem:[#allocation2 + $0x248] sm:$0xff] 0
  %92 = vst [vmem:[#allocation2 + $0x250] sm:$0xff] 0
  %93 = vst [vmem:[#allocation2 + $0x258] sm:$0xff] 0
  %94 = vst [vmem:[#allocation2 + $0x260] sm:$0xff] 0
  %95 = vst [vmem:[#allocation2 + $0x268] sm:$0xff] 0
  %96 = vst [vmem:[#allocation2 + $0x270] sm:$0xff] 0
  %97 = vst [vmem:[#allocation2 + $0x278] sm:$0xff] 0
  %98 = vst [vmem:[#allocation2 + $0x280] sm:$0xff] 0
  %99 = vst [vmem:[#allocation2 + $0x288] sm:$0xff] 0
  %100 = vst [vmem:[#allocation2 + $0x290] sm:$0xff] 0
  %101 = vst [vmem:[#allocation2 + $0x298] sm:$0xff] 0
  %102 = vst [vmem:[#allocation2 + $0x2a0] sm:$0xff] 0
  %103 = vst [vmem:[#allocation2 + $0x2a8] sm:$0xff] 0
  %104 = vst [vmem:[#allocation2 + $0x2b0] sm:$0xff] 0
  %105 = vst [vmem:[#allocation2 + $0x2b8] sm:$0xff] 0
  %106 = vst [vmem:[#allocation2 + $0x2c0] sm:$0xff] 0
  %107 = vst [vmem:[#allocation2 + $0x2c8] sm:$0xff] 0
  %108 = vst [vmem:[#allocation2 + $0x2d0] sm:$0xff] 0
  %109 = vst [vmem:[#allocation2 + $0x2d8] sm:$0xff] 0
  %110 = vst [vmem:[#allocation2 + $0x2e0] sm:$0xff] 0
  %111 = vst [vmem:[#allocation2 + $0x2e8] sm:$0xff] 0
  %112 = vst [vmem:[#allocation2 + $0x2f0] sm:$0xff] 0
  %113 = vst [vmem:[#allocation2 + $0x2f8] sm:$0xff] 0
  %114 = vst [vmem:[#allocation2 + $0x300] sm:$0xff] 0
  %115 = vst [vmem:[#allocation2 + $0x308] sm:$0xff] 0
  %116 = vst [vmem:[#allocation2 + $0x310] sm:$0xff] 0
  %117 = vst [vmem:[#allocation2 + $0x318] sm:$0xff] 0
  %118 = vst [vmem:[#allocation2 + $0x320] sm:$0xff] 0
  %119 = vst [vmem:[#allocation2 + $0x328] sm:$0xff] 0
  %120 = vst [vmem:[#allocation2 + $0x330] sm:$0xff] 0
  %121 = vst [vmem:[#allocation2 + $0x338] sm:$0xff] 0
  %122 = vst [vmem:[#allocation2 + $0x340] sm:$0xff] 0
  %123 = vst [vmem:[#allocation2 + $0x348] sm:$0xff] 0
  %124 = vst [vmem:[#allocation2 + $0x350] sm:$0xff] 0
  %125 = vst [vmem:[#allocation2 + $0x358] sm:$0xff] 0
  %126 = vst [vmem:[#allocation2 + $0x360] sm:$0xff] 0
  %127 = vst [vmem:[#allocation2 + $0x368] sm:$0xff] 0
  %128 = vst [vmem:[#allocation2 + $0x370] sm:$0xff] 0
  %129 = vst [vmem:[#allocation2 + $0x378] sm:$0xff] 0
  %130 = vst [vmem:[#allocation2 + $0x380] sm:$0xff] 0
  %131 = vst [vmem:[#allocation2 + $0x388] sm:$0xff] 0
  %132 = vst [vmem:[#allocation2 + $0x390] sm:$0xff] 0
  %133 = vst [vmem:[#allocation2 + $0x398] sm:$0xff] 0
  %134 = vst [vmem:[#allocation2 + $0x3a0] sm:$0xff] 0
  %135 = vst [vmem:[#allocation2 + $0x3a8] sm:$0xff] 0
  %136 = vst [vmem:[#allocation2 + $0x3b0] sm:$0xff] 0
  %137 = vst [vmem:[#allocation2 + $0x3b8] sm:$0xff] 0
  %138 = vst [vmem:[#allocation2 + $0x3c0] sm:$0xff] 0
  %139 = vst [vmem:[#allocation2 + $0x3c8] sm:$0xff] 0
  %140 = vst [vmem:[#allocation2 + $0x3d0] sm:$0xff] 0
  %141 = vst [vmem:[#allocation2 + $0x3d8] sm:$0xff] 0
  %142 = vst [vmem:[#allocation2 + $0x3e0] sm:$0xff] 0
  %143 = vst [vmem:[#allocation2 + $0x3e8] sm:$0xff] 0
  %144 = vst [vmem:[#allocation2 + $0x3f0] sm:$0xff] 0
  %145 = vst [vmem:[#allocation2 + $0x3f8] sm:$0xff] 0
  %v146 = vld [vmem:[%s0] sm:$0xf]
  %v147 = vld [vmem:[%s0 + $0x4] sm:$0xf]
  %v148 = vld [vmem:[%s0 + $0x8] sm:$0xf]
  %v149 = vld [vmem:[%s0 + $0xc] sm:$0xf]
  %v150 = vld [vmem:[%s0 + $0x10] sm:$0xf]
  %v151 = vld [vmem:[%s0 + $0x14] sm:$0xf]
  %v152 = vld [vmem:[%s0 + $0x18] sm:$0xf]
  %v153 = vld [vmem:[%s0 + $0x1c] sm:$0xf]
  %v154 = vld [vmem:[%s0 + $0x20] sm:$0xf]
  %v155 = vld [vmem:[%s0 + $0x24] sm:$0xf]
  %v156 = vld [vmem:[%s0 + $0x28] sm:$0xf]
  %v157 = vld [vmem:[%s0 + $0x2c] sm:$0xf]
  %v158 = vld [vmem:[%s0 + $0x30] sm:$0xf]
  %v159 = vld [vmem:[%s0 + $0x34] sm:$0xf]
  %v160 = vld [vmem:[%s0 + $0x38] sm:$0xf]
  %v161 = vld [vmem:[%s0 + $0x3c] sm:$0xf]
  %v162 = vld [vmem:[%s0 + $0x40] sm:$0xf]
  %v163 = vld [vmem:[%s0 + $0x44] sm:$0xf]
  %v164 = vld [vmem:[%s0 + $0x48] sm:$0xf]
  %v165 = vld [vmem:[%s0 + $0x4c] sm:$0xf]
  %v166 = vld [vmem:[%s0 + $0x50] sm:$0xf]
  %v167 = vld [vmem:[%s0 + $0x54] sm:$0xf]
  %v168 = vld [vmem:[%s0 + $0x58] sm:$0xf]
  %v169 = vld [vmem:[%s0 + $0x5c] sm:$0xf]
  %v170 = vld [vmem:[%s0 + $0x60] sm:$0xf]
  %v171 = vld [vmem:[%s0 + $0x64] sm:$0xf]
  %v172 = vld [vmem:[%s0 + $0x68] sm:$0xf]
  %v173 = vld [vmem:[%s0 + $0x6c] sm:$0xf]
  %v174 = vld [vmem:[%s0 + $0x70] sm:$0xf]
  %v175 = vld [vmem:[%s0 + $0x74] sm:$0xf]
  %v176 = vld [vmem:[%s0 + $0x78] sm:$0xf]
  %v177 = vld [vmem:[%s0 + $0x7c] sm:$0xf]
  %v178 = vld [vmem:[%s0 + $0x80] sm:$0xf]
  %v179 = vld [vmem:[%s0 + $0x84] sm:$0xf]
  %v180 = vld [vmem:[%s0 + $0x88] sm:$0xf]
  %v181 = vld [vmem:[%s0 + $0x8c] sm:$0xf]
  %v182 = vld [vmem:[%s0 + $0x90] sm:$0xf]
  %v183 = vld [vmem:[%s0 + $0x94] sm:$0xf]
  %v184 = vld [vmem:[%s0 + $0x98] sm:$0xf]
  %v185 = vld [vmem:[%s0 + $0x9c] sm:$0xf]
  %v186 = vld [vmem:[%s0 + $0xa0] sm:$0xf]
  %v187 = vld [vmem:[%s0 + $0xa4] sm:$0xf]
  %v188 = vld [vmem:[%s0 + $0xa8] sm:$0xf]
  %v189 = vld [vmem:[%s0 + $0xac] sm:$0xf]
  %v190 = vld [vmem:[%s0 + $0xb0] sm:$0xf]
  %v191 = vld [vmem:[%s0 + $0xb4] sm:$0xf]
  %v192 = vld [vmem:[%s0 + $0xb8] sm:$0xf]
  %v193 = vld [vmem:[%s0 + $0xbc] sm:$0xf]
  %v194 = vld [vmem:[%s0 + $0xc0] sm:$0xf]
  %v195 = vld [vmem:[%s0 + $0xc4] sm:$0xf]
  %v196 = vld [vmem:[%s0 + $0xc8] sm:$0xf]
  %v197 = vld [vmem:[%s0 + $0xcc] sm:$0xf]
  %v198 = vld [vmem:[%s0 + $0xd0] sm:$0xf]
  %v199 = vld [vmem:[%s0 + $0xd4] sm:$0xf]
  %v200 = vld [vmem:[%s0 + $0xd8] sm:$0xf]
  %v201 = vld [vmem:[%s0 + $0xdc] sm:$0xf]
  %v202 = vld [vmem:[%s0 + $0xe0] sm:$0xf]
  %v203 = vld [vmem:[%s0 + $0xe4] sm:$0xf]
  %v204 = vld [vmem:[%s0 + $0xe8] sm:$0xf]
  %v205 = vld [vmem:[%s0 + $0xec] sm:$0xf]
  %v206 = vld [vmem:[%s0 + $0xf0] sm:$0xf]
  %v207 = vld [vmem:[%s0 + $0xf4] sm:$0xf]
  %v208 = vld [vmem:[%s0 + $0xf8] sm:$0xf]
  %v209 = vld [vmem:[%s0 + $0xfc] sm:$0xf]
  %v210 = vld [vmem:[%s0 + $0x100] sm:$0xf]
  %v211 = vld [vmem:[%s0 + $0x104] sm:$0xf]
  %v212 = vld [vmem:[%s0 + $0x108] sm:$0xf]
  %v213 = vld [vmem:[%s0 + $0x10c] sm:$0xf]
  %v214 = vld [vmem:[%s0 + $0x110] sm:$0xf]
  %v215 = vld [vmem:[%s0 + $0x114] sm:$0xf]
  %v216 = vld [vmem:[%s0 + $0x118] sm:$0xf]
  %v217 = vld [vmem:[%s0 + $0x11c] sm:$0xf]
  %v218 = vld [vmem:[%s0 + $0x120] sm:$0xf]
  %v219 = vld [vmem:[%s0 + $0x124] sm:$0xf]
  %v220 = vld [vmem:[%s0 + $0x128] sm:$0xf]
  %v221 = vld [vmem:[%s0 + $0x12c] sm:$0xf]
  %v222 = vld [vmem:[%s0 + $0x130] sm:$0xf]
  %v223 = vld [vmem:[%s0 + $0x134] sm:$0xf]
  %v224 = vld [vmem:[%s0 + $0x138] sm:$0xf]
  %v225 = vld [vmem:[%s0 + $0x13c] sm:$0xf]
  %v226 = vld [vmem:[%s0 + $0x140] sm:$0xf]
  %v227 = vld [vmem:[%s0 + $0x144] sm:$0xf]
  %v228 = vld [vmem:[%s0 + $0x148] sm:$0xf]
  %v229 = vld [vmem:[%s0 + $0x14c] sm:$0xf]
  %v230 = vld [vmem:[%s0 + $0x150] sm:$0xf]
  %v231 = vld [vmem:[%s0 + $0x154] sm:$0xf]
  %v232 = vld [vmem:[%s0 + $0x158] sm:$0xf]
  %v233 = vld [vmem:[%s0 + $0x15c] sm:$0xf]
  %v234 = vld [vmem:[%s0 + $0x160] sm:$0xf]
  %v235 = vld [vmem:[%s0 + $0x164] sm:$0xf]
  %v236 = vld [vmem:[%s0 + $0x168] sm:$0xf]
  %v237 = vld [vmem:[%s0 + $0x16c] sm:$0xf]
  %v238 = vld [vmem:[%s0 + $0x170] sm:$0xf]
  %v239 = vld [vmem:[%s0 + $0x174] sm:$0xf]
  %v240 = vld [vmem:[%s0 + $0x178] sm:$0xf]
  %v241 = vld [vmem:[%s0 + $0x17c] sm:$0xf]
  %v242 = vld [vmem:[%s0 + $0x180] sm:$0xf]
  %v243 = vld [vmem:[%s0 + $0x184] sm:$0xf]
  %v244 = vld [vmem:[%s0 + $0x188] sm:$0xf]
  %v245 = vld [vmem:[%s0 + $0x18c] sm:$0xf]
  %v246 = vld [vmem:[%s0 + $0x190] sm:$0xf]
  %v247 = vld [vmem:[%s0 + $0x194] sm:$0xf]
  %v248 = vld [vmem:[%s0 + $0x198] sm:$0xf]
  %v249 = vld [vmem:[%s0 + $0x19c] sm:$0xf]
  %v250 = vld [vmem:[%s0 + $0x1a0] sm:$0xf]
  %v251 = vld [vmem:[%s0 + $0x1a4] sm:$0xf]
  %v252 = vld [vmem:[%s0 + $0x1a8] sm:$0xf]
  %v253 = vld [vmem:[%s0 + $0x1ac] sm:$0xf]
  %v254 = vld [vmem:[%s0 + $0x1b0] sm:$0xf]
  %v255 = vld [vmem:[%s0 + $0x1b4] sm:$0xf]
  %v256 = vld [vmem:[%s0 + $0x1b8] sm:$0xf]
  %v257 = vld [vmem:[%s0 + $0x1bc] sm:$0xf]
  %v258 = vld [vmem:[%s0 + $0x1c0] sm:$0xf]
  %v259 = vld [vmem:[%s0 + $0x1c4] sm:$0xf]
  %v260 = vld [vmem:[%s0 + $0x1c8] sm:$0xf]
  %v261 = vld [vmem:[%s0 + $0x1cc] sm:$0xf]
  %v262 = vld [vmem:[%s0 + $0x1d0] sm:$0xf]
  %v263 = vld [vmem:[%s0 + $0x1d4] sm:$0xf]
  %v264 = vld [vmem:[%s0 + $0x1d8] sm:$0xf]
  %v265 = vld [vmem:[%s0 + $0x1dc] sm:$0xf]
  %v266 = vld [vmem:[%s0 + $0x1e0] sm:$0xf]
  %v267 = vld [vmem:[%s0 + $0x1e4] sm:$0xf]
  %v268 = vld [vmem:[%s0 + $0x1e8] sm:$0xf]
  %v269 = vld [vmem:[%s0 + $0x1ec] sm:$0xf]
  %v270 = vld [vmem:[%s0 + $0x1f0] sm:$0xf]
  %v271 = vld [vmem:[%s0 + $0x1f4] sm:$0xf]
  %v272 = vld [vmem:[%s0 + $0x1f8] sm:$0xf]
  %v273 = vld [vmem:[%s0 + $0x1fc] sm:$0xf]
  %v274 = vld [vmem:[%s0 + $0x200] sm:$0xf]
  %v275 = vld [vmem:[%s0 + $0x204] sm:$0xf]
  %v276 = vld [vmem:[%s0 + $0x208] sm:$0xf]
  %v277 = vld [vmem:[%s0 + $0x20c] sm:$0xf]
  %v278 = vld [vmem:[%s0 + $0x210] sm:$0xf]
  %v279 = vld [vmem:[%s0 + $0x214] sm:$0xf]
  %v280 = vld [vmem:[%s0 + $0x218] sm:$0xf]
  %v281 = vld [vmem:[%s0 + $0x21c] sm:$0xf]
  %v282 = vld [vmem:[%s0 + $0x220] sm:$0xf]
  %v283 = vld [vmem:[%s0 + $0x224] sm:$0xf]
  %v284 = vld [vmem:[%s0 + $0x228] sm:$0xf]
  %v285 = vld [vmem:[%s0 + $0x22c] sm:$0xf]
  %v286 = vld [vmem:[%s0 + $0x230] sm:$0xf]
  %v287 = vld [vmem:[%s0 + $0x234] sm:$0xf]
  %v288 = vld [vmem:[%s0 + $0x238] sm:$0xf]
  %v289 = vld [vmem:[%s0 + $0x23c] sm:$0xf]
  %v290 = vld [vmem:[%s0 + $0x240] sm:$0xf]
  %v291 = vld [vmem:[%s0 + $0x244] sm:$0xf]
  %v292 = vld [vmem:[%s0 + $0x248] sm:$0xf]
  %v293 = vld [vmem:[%s0 + $0x24c] sm:$0xf]
  %v294 = vld [vmem:[%s0 + $0x250] sm:$0xf]
  %v295 = vld [vmem:[%s0 + $0x254] sm:$0xf]
  %v296 = vld [vmem:[%s0 + $0x258] sm:$0xf]
  %v297 = vld [vmem:[%s0 + $0x25c] sm:$0xf]
  %v298 = vld [vmem:[%s0 + $0x260] sm:$0xf]
  %v299 = vld [vmem:[%s0 + $0x264] sm:$0xf]
  %v300 = vld [vmem:[%s0 + $0x268] sm:$0xf]
  %v301 = vld [vmem:[%s0 + $0x26c] sm:$0xf]
  %v302 = vld [vmem:[%s0 + $0x270] sm:$0xf]
  %v303 = vld [vmem:[%s0 + $0x274] sm:$0xf]
  %v304 = vld [vmem:[%s0 + $0x278] sm:$0xf]
  %v305 = vld [vmem:[%s0 + $0x27c] sm:$0xf]
  %v306 = vld [vmem:[%s0 + $0x280] sm:$0xf]
  %v307 = vld [vmem:[%s0 + $0x284] sm:$0xf]
  %v308 = vld [vmem:[%s0 + $0x288] sm:$0xf]
  %v309 = vld [vmem:[%s0 + $0x28c] sm:$0xf]
  %v310 = vld [vmem:[%s0 + $0x290] sm:$0xf]
  %v311 = vld [vmem:[%s0 + $0x294] sm:$0xf]
  %v312 = vld [vmem:[%s0 + $0x298] sm:$0xf]
  %v313 = vld [vmem:[%s0 + $0x29c] sm:$0xf]
  %v314 = vld [vmem:[%s0 + $0x2a0] sm:$0xf]
  %v315 = vld [vmem:[%s0 + $0x2a4] sm:$0xf]
  %v316 = vld [vmem:[%s0 + $0x2a8] sm:$0xf]
  %v317 = vld [vmem:[%s0 + $0x2ac] sm:$0xf]
  %v318 = vld [vmem:[%s0 + $0x2b0] sm:$0xf]
  %v319 = vld [vmem:[%s0 + $0x2b4] sm:$0xf]
  %v320 = vld [vmem:[%s0 + $0x2b8] sm:$0xf]
  %v321 = vld [vmem:[%s0 + $0x2bc] sm:$0xf]
  %v322 = vld [vmem:[%s0 + $0x2c0] sm:$0xf]
  %v323 = vld [vmem:[%s0 + $0x2c4] sm:$0xf]
  %v324 = vld [vmem:[%s0 + $0x2c8] sm:$0xf]
  %v325 = vld [vmem:[%s0 + $0x2cc] sm:$0xf]
  %v326 = vld [vmem:[%s0 + $0x2d0] sm:$0xf]
  %v327 = vld [vmem:[%s0 + $0x2d4] sm:$0xf]
  %v328 = vld [vmem:[%s0 + $0x2d8] sm:$0xf]
  %v329 = vld [vmem:[%s0 + $0x2dc] sm:$0xf]
  %v330 = vld [vmem:[%s0 + $0x2e0] sm:$0xf]
  %v331 = vld [vmem:[%s0 + $0x2e4] sm:$0xf]
  %v332 = vld [vmem:[%s0 + $0x2e8] sm:$0xf]
  %v333 = vld [vmem:[%s0 + $0x2ec] sm:$0xf]
  %v334 = vld [vmem:[%s0 + $0x2f0] sm:$0xf]
  %v335 = vld [vmem:[%s0 + $0x2f4] sm:$0xf]
  %v336 = vld [vmem:[%s0 + $0x2f8] sm:$0xf]
  %v337 = vld [vmem:[%s0 + $0x2fc] sm:$0xf]
  %v338 = vld [vmem:[%s0 + $0x300] sm:$0xf]
  %v339 = vld [vmem:[%s0 + $0x304] sm:$0xf]
  %v340 = vld [vmem:[%s0 + $0x308] sm:$0xf]
  %v341 = vld [vmem:[%s0 + $0x30c] sm:$0xf]
  %v342 = vld [vmem:[%s0 + $0x310] sm:$0xf]
  %v343 = vld [vmem:[%s0 + $0x314] sm:$0xf]
  %v344 = vld [vmem:[%s0 + $0x318] sm:$0xf]
  %v345 = vld [vmem:[%s0 + $0x31c] sm:$0xf]
  %v346 = vld [vmem:[%s0 + $0x320] sm:$0xf]
  %v347 = vld [vmem:[%s0 + $0x324] sm:$0xf]
  %v348 = vld [vmem:[%s0 + $0x328] sm:$0xf]
  %v349 = vld [vmem:[%s0 + $0x32c] sm:$0xf]
  %v350 = vld [vmem:[%s0 + $0x330] sm:$0xf]
  %v351 = vld [vmem:[%s0 + $0x334] sm:$0xf]
  %v352 = vld [vmem:[%s0 + $0x338] sm:$0xf]
  %v353 = vld [vmem:[%s0 + $0x33c] sm:$0xf]
  %v354 = vld [vmem:[%s0 + $0x340] sm:$0xf]
  %v355 = vld [vmem:[%s0 + $0x344] sm:$0xf]
  %v356 = vld [vmem:[%s0 + $0x348] sm:$0xf]
  %v357 = vld [vmem:[%s0 + $0x34c] sm:$0xf]
  %v358 = vld [vmem:[%s0 + $0x350] sm:$0xf]
  %v359 = vld [vmem:[%s0 + $0x354] sm:$0xf]
  %v360 = vld [vmem:[%s0 + $0x358] sm:$0xf]
  %v361 = vld [vmem:[%s0 + $0x35c] sm:$0xf]
  %v362 = vld [vmem:[%s0 + $0x360] sm:$0xf]
  %v363 = vld [vmem:[%s0 + $0x364] sm:$0xf]
  %v364 = vld [vmem:[%s0 + $0x368] sm:$0xf]
  %v365 = vld [vmem:[%s0 + $0x36c] sm:$0xf]
  %v366 = vld [vmem:[%s0 + $0x370] sm:$0xf]
  %v367 = vld [vmem:[%s0 + $0x374] sm:$0xf]
  %v368 = vld [vmem:[%s0 + $0x378] sm:$0xf]
  %v369 = vld [vmem:[%s0 + $0x37c] sm:$0xf]
  %v370 = vld [vmem:[%s0 + $0x380] sm:$0xf]
  %v371 = vld [vmem:[%s0 + $0x384] sm:$0xf]
  %v372 = vld [vmem:[%s0 + $0x388] sm:$0xf]
  %v373 = vld [vmem:[%s0 + $0x38c] sm:$0xf]
  %v374 = vld [vmem:[%s0 + $0x390] sm:$0xf]
  %v375 = vld [vmem:[%s0 + $0x394] sm:$0xf]
  %v376 = vld [vmem:[%s0 + $0x398] sm:$0xf]
  %v377 = vld [vmem:[%s0 + $0x39c] sm:$0xf]
  %v378 = vld [vmem:[%s0 + $0x3a0] sm:$0xf]
  %v379 = vld [vmem:[%s0 + $0x3a4] sm:$0xf]
  %v380 = vld [vmem:[%s0 + $0x3a8] sm:$0xf]
  %v381 = vld [vmem:[%s0 + $0x3ac] sm:$0xf]
  %v382 = vld [vmem:[%s0 + $0x3b0] sm:$0xf]
  %v383 = vld [vmem:[%s0 + $0x3b4] sm:$0xf]
  %v384 = vld [vmem:[%s0 + $0x3b8] sm:$0xf]
  %v385 = vld [vmem:[%s0 + $0x3bc] sm:$0xf]
  %v386 = vld [vmem:[%s0 + $0x3c0] sm:$0xf]
  %v387 = vld [vmem:[%s0 + $0x3c4] sm:$0xf]
  %v388 = vld [vmem:[%s0 + $0x3c8] sm:$0xf]
  %v389 = vld [vmem:[%s0 + $0x3cc] sm:$0xf]
  %v390 = vld [vmem:[%s0 + $0x3d0] sm:$0xf]
  %v391 = vld [vmem:[%s0 + $0x3d4] sm:$0xf]
  %v392 = vld [vmem:[%s0 + $0x3d8] sm:$0xf]
  %v393 = vld [vmem:[%s0 + $0x3dc] sm:$0xf]
  %v394 = vld [vmem:[%s0 + $0x3e0] sm:$0xf]
  %v395 = vld [vmem:[%s0 + $0x3e4] sm:$0xf]
  %v396 = vld [vmem:[%s0 + $0x3e8] sm:$0xf]
  %v397 = vld [vmem:[%s0 + $0x3ec] sm:$0xf]
  %v398 = vld [vmem:[%s0 + $0x3f0] sm:$0xf]
  %v399 = vld [vmem:[%s0 + $0x3f4] sm:$0xf]
  %v400 = vld [vmem:[%s0 + $0x3f8] sm:$0xf]
  %v401 = vld [vmem:[%s0 + $0x3fc] sm:$0xf]
  %v658 = vunpack.c.l.b16 %v146
  %v659 = vunpack.c.l.b16 %v147
  %v660 = vunpack.c.l.b16 %v148
  %v661 = vunpack.c.l.b16 %v149
  %v662 = vunpack.c.l.b16 %v150
  %v663 = vunpack.c.l.b16 %v151
  %v664 = vunpack.c.l.b16 %v152
  %v665 = vunpack.c.l.b16 %v153
  %v666 = vunpack.c.l.b16 %v154
  %v667 = vunpack.c.l.b16 %v155
  %v668 = vunpack.c.l.b16 %v156
  %v669 = vunpack.c.l.b16 %v157
  %v670 = vunpack.c.l.b16 %v158
  %v671 = vunpack.c.l.b16 %v159
  %v672 = vunpack.c.l.b16 %v160
  %v673 = vunpack.c.l.b16 %v161
  %v674 = vunpack.c.l.b16 %v162
  %v675 = vunpack.c.l.b16 %v163
  %v676 = vunpack.c.l.b16 %v164
  %v677 = vunpack.c.l.b16 %v165
  %v678 = vunpack.c.l.b16 %v166
  %v679 = vunpack.c.l.b16 %v167
  %v680 = vunpack.c.l.b16 %v168
  %v681 = vunpack.c.l.b16 %v169
  %v682 = vunpack.c.l.b16 %v170
  %v683 = vunpack.c.l.b16 %v171
  %v684 = vunpack.c.l.b16 %v172
  %v685 = vunpack.c.l.b16 %v173
  %v686 = vunpack.c.l.b16 %v174
  %v687 = vunpack.c.l.b16 %v175
  %v688 = vunpack.c.l.b16 %v176
  %v689 = vunpack.c.l.b16 %v177
  %v690 = vunpack.c.l.b16 %v178
  %v691 = vunpack.c.l.b16 %v179
  %v692 = vunpack.c.l.b16 %v180
  %v693 = vunpack.c.l.b16 %v181
  %v694 = vunpack.c.l.b16 %v182
  %v695 = vunpack.c.l.b16 %v183
  %v696 = vunpack.c.l.b16 %v184
  %v697 = vunpack.c.l.b16 %v185
  %v698 = vunpack.c.l.b16 %v186
  %v699 = vunpack.c.l.b16 %v187
  %v700 = vunpack.c.l.b16 %v188
  %v701 = vunpack.c.l.b16 %v189
  %v702 = vunpack.c.l.b16 %v190
  %v703 = vunpack.c.l.b16 %v191
  %v704 = vunpack.c.l.b16 %v192
  %v705 = vunpack.c.l.b16 %v193
  %v706 = vunpack.c.l.b16 %v194
  %v707 = vunpack.c.l.b16 %v195
  %v708 = vunpack.c.l.b16 %v196
  %v709 = vunpack.c.l.b16 %v197
  %v710 = vunpack.c.l.b16 %v198
  %v711 = vunpack.c.l.b16 %v199
  %v712 = vunpack.c.l.b16 %v200
  %v713 = vunpack.c.l.b16 %v201
  %v714 = vunpack.c.l.b16 %v202
  %v715 = vunpack.c.l.b16 %v203
  %v716 = vunpack.c.l.b16 %v204
  %v717 = vunpack.c.l.b16 %v205
  %v718 = vunpack.c.l.b16 %v206
  %v719 = vunpack.c.l.b16 %v207
  %v720 = vunpack.c.l.b16 %v208
  %v721 = vunpack.c.l.b16 %v209
  %v722 = vunpack.c.l.b16 %v210
  %v723 = vunpack.c.l.b16 %v211
  %v724 = vunpack.c.l.b16 %v212
  %v725 = vunpack.c.l.b16 %v213
  %v726 = vunpack.c.l.b16 %v214
  %v727 = vunpack.c.l.b16 %v215
  %v728 = vunpack.c.l.b16 %v216
  %v729 = vunpack.c.l.b16 %v217
  %v730 = vunpack.c.l.b16 %v218
  %v731 = vunpack.c.l.b16 %v219
  %v732 = vunpack.c.l.b16 %v220
  %v733 = vunpack.c.l.b16 %v221
  %v734 = vunpack.c.l.b16 %v222
  %v735 = vunpack.c.l.b16 %v223
  %v736 = vunpack.c.l.b16 %v224
  %v737 = vunpack.c.l.b16 %v225
  %v738 = vunpack.c.l.b16 %v226
  %v739 = vunpack.c.l.b16 %v227
  %v740 = vunpack.c.l.b16 %v228
  %v741 = vunpack.c.l.b16 %v229
  %v742 = vunpack.c.l.b16 %v230
  %v743 = vunpack.c.l.b16 %v231
  %v744 = vunpack.c.l.b16 %v232
  %v745 = vunpack.c.l.b16 %v233
  %v746 = vunpack.c.l.b16 %v234
  %v747 = vunpack.c.l.b16 %v235
  %v748 = vunpack.c.l.b16 %v236
  %v749 = vunpack.c.l.b16 %v237
  %v750 = vunpack.c.l.b16 %v238
  %v751 = vunpack.c.l.b16 %v239
  %v752 = vunpack.c.l.b16 %v240
  %v753 = vunpack.c.l.b16 %v241
  %v754 = vunpack.c.l.b16 %v242
  %v755 = vunpack.c.l.b16 %v243
  %v756 = vunpack.c.l.b16 %v244
  %v757 = vunpack.c.l.b16 %v245
  %v758 = vunpack.c.l.b16 %v246
  %v759 = vunpack.c.l.b16 %v247
  %v760 = vunpack.c.l.b16 %v248
  %v761 = vunpack.c.l.b16 %v249
  %v762 = vunpack.c.l.b16 %v250
  %v763 = vunpack.c.l.b16 %v251
  %v764 = vunpack.c.l.b16 %v252
  %v765 = vunpack.c.l.b16 %v253
  %v766 = vunpack.c.l.b16 %v254
  %v767 = vunpack.c.l.b16 %v255
  %v768 = vunpack.c.l.b16 %v256
  %v769 = vunpack.c.l.b16 %v257
  %v770 = vunpack.c.l.b16 %v258
  %v771 = vunpack.c.l.b16 %v259
  %v772 = vunpack.c.l.b16 %v260
  %v773 = vunpack.c.l.b16 %v261
  %v774 = vunpack.c.l.b16 %v262
  %v775 = vunpack.c.l.b16 %v263
  %v776 = vunpack.c.l.b16 %v264
  %v777 = vunpack.c.l.b16 %v265
  %v778 = vunpack.c.l.b16 %v266
  %v779 = vunpack.c.l.b16 %v267
  %v780 = vunpack.c.l.b16 %v268
  %v781 = vunpack.c.l.b16 %v269
  %v782 = vunpack.c.l.b16 %v270
  %v783 = vunpack.c.l.b16 %v271
  %v784 = vunpack.c.l.b16 %v272
  %v785 = vunpack.c.l.b16 %v273
  %v786 = vunpack.c.l.b16 %v274
  %v787 = vunpack.c.l.b16 %v275
  %v788 = vunpack.c.l.b16 %v276
  %v789 = vunpack.c.l.b16 %v277
  %v790 = vunpack.c.l.b16 %v278
  %v791 = vunpack.c.l.b16 %v279
  %v792 = vunpack.c.l.b16 %v280
  %v793 = vunpack.c.l.b16 %v281
  %v794 = vunpack.c.l.b16 %v282
  %v795 = vunpack.c.l.b16 %v283
  %v796 = vunpack.c.l.b16 %v284
  %v797 = vunpack.c.l.b16 %v285
  %v798 = vunpack.c.l.b16 %v286
  %v799 = vunpack.c.l.b16 %v287
  %v800 = vunpack.c.l.b16 %v288
  %v801 = vunpack.c.l.b16 %v289
  %v802 = vunpack.c.l.b16 %v290
  %v803 = vunpack.c.l.b16 %v291
  %v804 = vunpack.c.l.b16 %v292
  %v805 = vunpack.c.l.b16 %v293
  %v806 = vunpack.c.l.b16 %v294
  %v807 = vunpack.c.l.b16 %v295
  %v808 = vunpack.c.l.b16 %v296
  %v809 = vunpack.c.l.b16 %v297
  %v810 = vunpack.c.l.b16 %v298
  %v811 = vunpack.c.l.b16 %v299
  %v812 = vunpack.c.l.b16 %v300
  %v813 = vunpack.c.l.b16 %v301
  %v814 = vunpack.c.l.b16 %v302
  %v815 = vunpack.c.l.b16 %v303
  %v816 = vunpack.c.l.b16 %v304
  %v817 = vunpack.c.l.b16 %v305
  %v818 = vunpack.c.l.b16 %v306
  %v819 = vunpack.c.l.b16 %v307
  %v820 = vunpack.c.l.b16 %v308
  %v821 = vunpack.c.l.b16 %v309
  %v822 = vunpack.c.l.b16 %v310
  %v823 = vunpack.c.l.b16 %v311
  %v824 = vunpack.c.l.b16 %v312
  %v825 = vunpack.c.l.b16 %v313
  %v826 = vunpack.c.l.b16 %v314
  %v827 = vunpack.c.l.b16 %v315
  %v828 = vunpack.c.l.b16 %v316
  %v829 = vunpack.c.l.b16 %v317
  %v830 = vunpack.c.l.b16 %v318
  %v831 = vunpack.c.l.b16 %v319
  %v832 = vunpack.c.l.b16 %v320
  %v833 = vunpack.c.l.b16 %v321
  %v834 = vunpack.c.l.b16 %v322
  %v835 = vunpack.c.l.b16 %v323
  %v836 = vunpack.c.l.b16 %v324
  %v837 = vunpack.c.l.b16 %v325
  %v838 = vunpack.c.l.b16 %v326
  %v839 = vunpack.c.l.b16 %v327
  %v840 = vunpack.c.l.b16 %v328
  %v841 = vunpack.c.l.b16 %v329
  %v842 = vunpack.c.l.b16 %v330
  %v843 = vunpack.c.l.b16 %v331
  %v844 = vunpack.c.l.b16 %v332
  %v845 = vunpack.c.l.b16 %v333
  %v846 = vunpack.c.l.b16 %v334
  %v847 = vunpack.c.l.b16 %v335
  %v848 = vunpack.c.l.b16 %v336
  %v849 = vunpack.c.l.b16 %v337
  %v850 = vunpack.c.l.b16 %v338
  %v851 = vunpack.c.l.b16 %v339
  %v852 = vunpack.c.l.b16 %v340
  %v853 = vunpack.c.l.b16 %v341
  %v854 = vunpack.c.l.b16 %v342
  %v855 = vunpack.c.l.b16 %v343
  %v856 = vunpack.c.l.b16 %v344
  %v857 = vunpack.c.l.b16 %v345
  %v858 = vunpack.c.l.b16 %v346
  %v859 = vunpack.c.l.b16 %v347
  %v860 = vunpack.c.l.b16 %v348
  %v861 = vunpack.c.l.b16 %v349
  %v862 = vunpack.c.l.b16 %v350
  %v863 = vunpack.c.l.b16 %v351
  %v864 = vunpack.c.l.b16 %v352
  %v865 = vunpack.c.l.b16 %v353
  %v866 = vunpack.c.l.b16 %v354
  %v867 = vunpack.c.l.b16 %v355
  %v868 = vunpack.c.l.b16 %v356
  %v869 = vunpack.c.l.b16 %v357
  %v870 = vunpack.c.l.b16 %v358
  %v871 = vunpack.c.l.b16 %v359
  %v872 = vunpack.c.l.b16 %v360
  %v873 = vunpack.c.l.b16 %v361
  %v874 = vunpack.c.l.b16 %v362
  %v875 = vunpack.c.l.b16 %v363
  %v876 = vunpack.c.l.b16 %v364
  %v877 = vunpack.c.l.b16 %v365
  %v878 = vunpack.c.l.b16 %v366
  %v879 = vunpack.c.l.b16 %v367
  %v880 = vunpack.c.l.b16 %v368
  %v881 = vunpack.c.l.b16 %v369
  %v882 = vunpack.c.l.b16 %v370
  %v883 = vunpack.c.l.b16 %v371
  %v884 = vunpack.c.l.b16 %v372
  %v885 = vunpack.c.l.b16 %v373
  %v886 = vunpack.c.l.b16 %v374
  %v887 = vunpack.c.l.b16 %v375
  %v888 = vunpack.c.l.b16 %v376
  %v889 = vunpack.c.l.b16 %v377
  %v890 = vunpack.c.l.b16 %v378
  %v891 = vunpack.c.l.b16 %v379
  %v892 = vunpack.c.l.b16 %v380
  %v893 = vunpack.c.l.b16 %v381
  %v894 = vunpack.c.l.b16 %v382
  %v895 = vunpack.c.l.b16 %v383
  %v896 = vunpack.c.l.b16 %v384
  %v897 = vunpack.c.l.b16 %v385
  %v898 = vunpack.c.l.b16 %v386
  %v899 = vunpack.c.l.b16 %v387
  %v900 = vunpack.c.l.b16 %v388
  %v901 = vunpack.c.l.b16 %v389
  %v902 = vunpack.c.l.b16 %v390
  %v903 = vunpack.c.l.b16 %v391
  %v904 = vunpack.c.l.b16 %v392
  %v905 = vunpack.c.l.b16 %v393
  %v906 = vunpack.c.l.b16 %v394
  %v907 = vunpack.c.l.b16 %v395
  %v908 = vunpack.c.l.b16 %v396
  %v909 = vunpack.c.l.b16 %v397
  %v910 = vunpack.c.l.b16 %v398
  %v911 = vunpack.c.l.b16 %v399
  %v912 = vunpack.c.l.b16 %v400
  %v913 = vunpack.c.l.b16 %v401
  %v914 = vpack.c.b16 %v659, %v658
  %v915 = vpack.c.b16 %v661, %v660
  %v916 = vpack.c.b16 %v663, %v662
  %v917 = vpack.c.b16 %v665, %v664
  %v918 = vpack.c.b16 %v667, %v666
  %v919 = vpack.c.b16 %v669, %v668
  %v920 = vpack.c.b16 %v671, %v670
  %v921 = vpack.c.b16 %v673, %v672
  %v922 = vpack.c.b16 %v675, %v674
  %v923 = vpack.c.b16 %v677, %v676
  %v924 = vpack.c.b16 %v679, %v678
  %v925 = vpack.c.b16 %v681, %v680
  %v926 = vpack.c.b16 %v683, %v682
  %v927 = vpack.c.b16 %v685, %v684
  %v928 = vpack.c.b16 %v687, %v686
  %v929 = vpack.c.b16 %v689, %v688
  %v930 = vpack.c.b16 %v691, %v690
  %v931 = vpack.c.b16 %v693, %v692
  %v932 = vpack.c.b16 %v695, %v694
  %v933 = vpack.c.b16 %v697, %v696
  %v934 = vpack.c.b16 %v699, %v698
  %v935 = vpack.c.b16 %v701, %v700
  %v936 = vpack.c.b16 %v703, %v702
  %v937 = vpack.c.b16 %v705, %v704
  %v938 = vpack.c.b16 %v707, %v706
  %v939 = vpack.c.b16 %v709, %v708
  %v940 = vpack.c.b16 %v711, %v710
  %v941 = vpack.c.b16 %v713, %v712
  %v942 = vpack.c.b16 %v715, %v714
  %v943 = vpack.c.b16 %v717, %v716
  %v944 = vpack.c.b16 %v719, %v718
  %v945 = vpack.c.b16 %v721, %v720
  %v946 = vpack.c.b16 %v723, %v722
  %v947 = vpack.c.b16 %v725, %v724
  %v948 = vpack.c.b16 %v727, %v726
  %v949 = vpack.c.b16 %v729, %v728
  %v950 = vpack.c.b16 %v731, %v730
  %v951 = vpack.c.b16 %v733, %v732
  %v952 = vpack.c.b16 %v735, %v734
  %v953 = vpack.c.b16 %v737, %v736
  %v954 = vpack.c.b16 %v739, %v738
  %v955 = vpack.c.b16 %v741, %v740
  %v956 = vpack.c.b16 %v743, %v742
  %v957 = vpack.c.b16 %v745, %v744
  %v958 = vpack.c.b16 %v747, %v746
  %v959 = vpack.c.b16 %v749, %v748
  %v960 = vpack.c.b16 %v751, %v750
  %v961 = vpack.c.b16 %v753, %v752
  %v962 = vpack.c.b16 %v755, %v754
  %v963 = vpack.c.b16 %v757, %v756
  %v964 = vpack.c.b16 %v759, %v758
  %v965 = vpack.c.b16 %v761, %v760
  %v966 = vpack.c.b16 %v763, %v762
  %v967 = vpack.c.b16 %v765, %v764
  %v968 = vpack.c.b16 %v767, %v766
  %v969 = vpack.c.b16 %v769, %v768
  %v970 = vpack.c.b16 %v771, %v770
  %v971 = vpack.c.b16 %v773, %v772
  %v972 = vpack.c.b16 %v775, %v774
  %v973 = vpack.c.b16 %v777, %v776
  %v974 = vpack.c.b16 %v779, %v778
  %v975 = vpack.c.b16 %v781, %v780
  %v976 = vpack.c.b16 %v783, %v782
  %v977 = vpack.c.b16 %v785, %v784
  %v978 = vpack.c.b16 %v787, %v786
  %v979 = vpack.c.b16 %v789, %v788
  %v980 = vpack.c.b16 %v791, %v790
  %v981 = vpack.c.b16 %v793, %v792
  %v982 = vpack.c.b16 %v795, %v794
  %v983 = vpack.c.b16 %v797, %v796
  %v984 = vpack.c.b16 %v799, %v798
  %v985 = vpack.c.b16 %v801, %v800
  %v986 = vpack.c.b16 %v803, %v802
  %v987 = vpack.c.b16 %v805, %v804
  %v988 = vpack.c.b16 %v807, %v806
  %v989 = vpack.c.b16 %v809, %v808
  %v990 = vpack.c.b16 %v811, %v810
  %v991 = vpack.c.b16 %v813, %v812
  %v992 = vpack.c.b16 %v815, %v814
  %v993 = vpack.c.b16 %v817, %v816
  %v994 = vpack.c.b16 %v819, %v818
  %v995 = vpack.c.b16 %v821, %v820
  %v996 = vpack.c.b16 %v823, %v822
  %v997 = vpack.c.b16 %v825, %v824
  %v998 = vpack.c.b16 %v827, %v826
  %v999 = vpack.c.b16 %v829, %v828
  %v1000 = vpack.c.b16 %v831, %v830
  %v1001 = vpack.c.b16 %v833, %v832
  %v1002 = vpack.c.b16 %v835, %v834
  %v1003 = vpack.c.b16 %v837, %v836
  %v1004 = vpack.c.b16 %v839, %v838
  %v1005 = vpack.c.b16 %v841, %v840
  %v1006 = vpack.c.b16 %v843, %v842
  %v1007 = vpack.c.b16 %v845, %v844
  %v1008 = vpack.c.b16 %v847, %v846
  %v1009 = vpack.c.b16 %v849, %v848
  %v1010 = vpack.c.b16 %v851, %v850
  %v1011 = vpack.c.b16 %v853, %v852
  %v1012 = vpack.c.b16 %v855, %v854
  %v1013 = vpack.c.b16 %v857, %v856
  %v1014 = vpack.c.b16 %v859, %v858
  %v1015 = vpack.c.b16 %v861, %v860
  %v1016 = vpack.c.b16 %v863, %v862
  %v1017 = vpack.c.b16 %v865, %v864
  %v1018 = vpack.c.b16 %v867, %v866
  %v1019 = vpack.c.b16 %v869, %v868
  %v1020 = vpack.c.b16 %v871, %v870
  %v1021 = vpack.c.b16 %v873, %v872
  %v1022 = vpack.c.b16 %v875, %v874
  %v1023 = vpack.c.b16 %v877, %v876
  %v1024 = vpack.c.b16 %v879, %v878
  %v1025 = vpack.c.b16 %v881, %v880
  %v1026 = vpack.c.b16 %v883, %v882
  %v1027 = vpack.c.b16 %v885, %v884
  %v1028 = vpack.c.b16 %v887, %v886
  %v1029 = vpack.c.b16 %v889, %v888
  %v1030 = vpack.c.b16 %v891, %v890
  %v1031 = vpack.c.b16 %v893, %v892
  %v1032 = vpack.c.b16 %v895, %v894
  %v1033 = vpack.c.b16 %v897, %v896
  %v1034 = vpack.c.b16 %v899, %v898
  %v1035 = vpack.c.b16 %v901, %v900
  %v1036 = vpack.c.b16 %v903, %v902
  %v1037 = vpack.c.b16 %v905, %v904
  %v1038 = vpack.c.b16 %v907, %v906
  %v1039 = vpack.c.b16 %v909, %v908
  %v1040 = vpack.c.b16 %v911, %v910
  %v1041 = vpack.c.b16 %v913, %v912
  %vm1170 = vcmask 302080
  %1171 = vst.msk [vmem:[#allocation2] sm:$0xff] %vm1170, %v914
  %1172 = vst.msk [vmem:[#allocation2 + $0x8] sm:$0xff] %vm1170, %v915
  %1173 = vst.msk [vmem:[#allocation2 + $0x10] sm:$0xff] %vm1170, %v916
  %1174 = vst.msk [vmem:[#allocation2 + $0x18] sm:$0xff] %vm1170, %v917
  %1175 = vst.msk [vmem:[#allocation2 + $0x20] sm:$0xff] %vm1170, %v918
  %1176 = vst.msk [vmem:[#allocation2 + $0x28] sm:$0xff] %vm1170, %v919
  %1177 = vst.msk [vmem:[#allocation2 + $0x30] sm:$0xff] %vm1170, %v920
  %1178 = vst.msk [vmem:[#allocation2 + $0x38] sm:$0xff] %vm1170, %v921
  %1179 = vst.msk [vmem:[#allocation2 + $0x40] sm:$0xff] %vm1170, %v922
  %1180 = vst.msk [vmem:[#allocation2 + $0x48] sm:$0xff] %vm1170, %v923
  %1181 = vst.msk [vmem:[#allocation2 + $0x50] sm:$0xff] %vm1170, %v924
  %1182 = vst.msk [vmem:[#allocation2 + $0x58] sm:$0xff] %vm1170, %v925
  %1183 = vst.msk [vmem:[#allocation2 + $0x60] sm:$0xff] %vm1170, %v926
  %1184 = vst.msk [vmem:[#allocation2 + $0x68] sm:$0xff] %vm1170, %v927
  %1185 = vst.msk [vmem:[#allocation2 + $0x70] sm:$0xff] %vm1170, %v928
  %1186 = vst.msk [vmem:[#allocation2 + $0x78] sm:$0xff] %vm1170, %v929
  %1187 = vst.msk [vmem:[#allocation2 + $0x80] sm:$0xff] %vm1170, %v930
  %1188 = vst.msk [vmem:[#allocation2 + $0x88] sm:$0xff] %vm1170, %v931
  %1189 = vst.msk [vmem:[#allocation2 + $0x90] sm:$0xff] %vm1170, %v932
  %1190 = vst.msk [vmem:[#allocation2 + $0x98] sm:$0xff] %vm1170, %v933
  %1191 = vst.msk [vmem:[#allocation2 + $0xa0] sm:$0xff] %vm1170, %v934
  %1192 = vst.msk [vmem:[#allocation2 + $0xa8] sm:$0xff] %vm1170, %v935
  %1193 = vst.msk [vmem:[#allocation2 + $0xb0] sm:$0xff] %vm1170, %v936
  %1194 = vst.msk [vmem:[#allocation2 + $0xb8] sm:$0xff] %vm1170, %v937
  %1195 = vst.msk [vmem:[#allocation2 + $0xc0] sm:$0xff] %vm1170, %v938
  %1196 = vst.msk [vmem:[#allocation2 + $0xc8] sm:$0xff] %vm1170, %v939
  %1197 = vst.msk [vmem:[#allocation2 + $0xd0] sm:$0xff] %vm1170, %v940
  %1198 = vst.msk [vmem:[#allocation2 + $0xd8] sm:$0xff] %vm1170, %v941
  %1199 = vst.msk [vmem:[#allocation2 + $0xe0] sm:$0xff] %vm1170, %v942
  %1200 = vst.msk [vmem:[#allocation2 + $0xe8] sm:$0xff] %vm1170, %v943
  %1201 = vst.msk [vmem:[#allocation2 + $0xf0] sm:$0xff] %vm1170, %v944
  %1202 = vst.msk [vmem:[#allocation2 + $0xf8] sm:$0xff] %vm1170, %v945
  %1203 = vst.msk [vmem:[#allocation2 + $0x100] sm:$0xff] %vm1170, %v946
  %1204 = vst.msk [vmem:[#allocation2 + $0x108] sm:$0xff] %vm1170, %v947
  %1205 = vst.msk [vmem:[#allocation2 + $0x110] sm:$0xff] %vm1170, %v948
  %1206 = vst.msk [vmem:[#allocation2 + $0x118] sm:$0xff] %vm1170, %v949
  %1207 = vst.msk [vmem:[#allocation2 + $0x120] sm:$0xff] %vm1170, %v950
  %1208 = vst.msk [vmem:[#allocation2 + $0x128] sm:$0xff] %vm1170, %v951
  %1209 = vst.msk [vmem:[#allocation2 + $0x130] sm:$0xff] %vm1170, %v952
  %1210 = vst.msk [vmem:[#allocation2 + $0x138] sm:$0xff] %vm1170, %v953
  %1211 = vst.msk [vmem:[#allocation2 + $0x140] sm:$0xff] %vm1170, %v954
  %1212 = vst.msk [vmem:[#allocation2 + $0x148] sm:$0xff] %vm1170, %v955
  %1213 = vst.msk [vmem:[#allocation2 + $0x150] sm:$0xff] %vm1170, %v956
  %1214 = vst.msk [vmem:[#allocation2 + $0x158] sm:$0xff] %vm1170, %v957
  %1215 = vst.msk [vmem:[#allocation2 + $0x160] sm:$0xff] %vm1170, %v958
  %1216 = vst.msk [vmem:[#allocation2 + $0x168] sm:$0xff] %vm1170, %v959
  %1217 = vst.msk [vmem:[#allocation2 + $0x170] sm:$0xff] %vm1170, %v960
  %1218 = vst.msk [vmem:[#allocation2 + $0x178] sm:$0xff] %vm1170, %v961
  %1219 = vst.msk [vmem:[#allocation2 + $0x180] sm:$0xff] %vm1170, %v962
  %1220 = vst.msk [vmem:[#allocation2 + $0x188] sm:$0xff] %vm1170, %v963
  %1221 = vst.msk [vmem:[#allocation2 + $0x190] sm:$0xff] %vm1170, %v964
  %1222 = vst.msk [vmem:[#allocation2 + $0x198] sm:$0xff] %vm1170, %v965
  %1223 = vst.msk [vmem:[#allocation2 + $0x1a0] sm:$0xff] %vm1170, %v966
  %1224 = vst.msk [vmem:[#allocation2 + $0x1a8] sm:$0xff] %vm1170, %v967
  %1225 = vst.msk [vmem:[#allocation2 + $0x1b0] sm:$0xff] %vm1170, %v968
  %1226 = vst.msk [vmem:[#allocation2 + $0x1b8] sm:$0xff] %vm1170, %v969
  %1227 = vst.msk [vmem:[#allocation2 + $0x1c0] sm:$0xff] %vm1170, %v970
  %1228 = vst.msk [vmem:[#allocation2 + $0x1c8] sm:$0xff] %vm1170, %v971
  %1229 = vst.msk [vmem:[#allocation2 + $0x1d0] sm:$0xff] %vm1170, %v972
  %1230 = vst.msk [vmem:[#allocation2 + $0x1d8] sm:$0xff] %vm1170, %v973
  %1231 = vst.msk [vmem:[#allocation2 + $0x1e0] sm:$0xff] %vm1170, %v974
  %1232 = vst.msk [vmem:[#allocation2 + $0x1e8] sm:$0xff] %vm1170, %v975
  %1233 = vst.msk [vmem:[#allocation2 + $0x1f0] sm:$0xff] %vm1170, %v976
  %1234 = vst.msk [vmem:[#allocation2 + $0x1f8] sm:$0xff] %vm1170, %v977
  %1235 = vst.msk [vmem:[#allocation2 + $0x200] sm:$0xff] %vm1170, %v978
  %1236 = vst.msk [vmem:[#allocation2 + $0x208] sm:$0xff] %vm1170, %v979
  %1237 = vst.msk [vmem:[#allocation2 + $0x210] sm:$0xff] %vm1170, %v980
  %1238 = vst.msk [vmem:[#allocation2 + $0x218] sm:$0xff] %vm1170, %v981
  %1239 = vst.msk [vmem:[#allocation2 + $0x220] sm:$0xff] %vm1170, %v982
  %1240 = vst.msk [vmem:[#allocation2 + $0x228] sm:$0xff] %vm1170, %v983
  %1241 = vst.msk [vmem:[#allocation2 + $0x230] sm:$0xff] %vm1170, %v984
  %1242 = vst.msk [vmem:[#allocation2 + $0x238] sm:$0xff] %vm1170, %v985
  %1243 = vst.msk [vmem:[#allocation2 + $0x240] sm:$0xff] %vm1170, %v986
  %1244 = vst.msk [vmem:[#allocation2 + $0x248] sm:$0xff] %vm1170, %v987
  %1245 = vst.msk [vmem:[#allocation2 + $0x250] sm:$0xff] %vm1170, %v988
  %1246 = vst.msk [vmem:[#allocation2 + $0x258] sm:$0xff] %vm1170, %v989
  %1247 = vst.msk [vmem:[#allocation2 + $0x260] sm:$0xff] %vm1170, %v990
  %1248 = vst.msk [vmem:[#allocation2 + $0x268] sm:$0xff] %vm1170, %v991
  %1249 = vst.msk [vmem:[#allocation2 + $0x270] sm:$0xff] %vm1170, %v992
  %1250 = vst.msk [vmem:[#allocation2 + $0x278] sm:$0xff] %vm1170, %v993
  %1251 = vst.msk [vmem:[#allocation2 + $0x280] sm:$0xff] %vm1170, %v994
  %1252 = vst.msk [vmem:[#allocation2 + $0x288] sm:$0xff] %vm1170, %v995
  %1253 = vst.msk [vmem:[#allocation2 + $0x290] sm:$0xff] %vm1170, %v996
  %1254 = vst.msk [vmem:[#allocation2 + $0x298] sm:$0xff] %vm1170, %v997
  %1255 = vst.msk [vmem:[#allocation2 + $0x2a0] sm:$0xff] %vm1170, %v998
  %1256 = vst.msk [vmem:[#allocation2 + $0x2a8] sm:$0xff] %vm1170, %v999
  %1257 = vst.msk [vmem:[#allocation2 + $0x2b0] sm:$0xff] %vm1170, %v1000
  %1258 = vst.msk [vmem:[#allocation2 + $0x2b8] sm:$0xff] %vm1170, %v1001
  %1259 = vst.msk [vmem:[#allocation2 + $0x2c0] sm:$0xff] %vm1170, %v1002
  %1260 = vst.msk [vmem:[#allocation2 + $0x2c8] sm:$0xff] %vm1170, %v1003
  %1261 = vst.msk [vmem:[#allocation2 + $0x2d0] sm:$0xff] %vm1170, %v1004
  %1262 = vst.msk [vmem:[#allocation2 + $0x2d8] sm:$0xff] %vm1170, %v1005
  %1263 = vst.msk [vmem:[#allocation2 + $0x2e0] sm:$0xff] %vm1170, %v1006
  %1264 = vst.msk [vmem:[#allocation2 + $0x2e8] sm:$0xff] %vm1170, %v1007
  %1265 = vst.msk [vmem:[#allocation2 + $0x2f0] sm:$0xff] %vm1170, %v1008
  %1266 = vst.msk [vmem:[#allocation2 + $0x2f8] sm:$0xff] %vm1170, %v1009
  %1267 = vst.msk [vmem:[#allocation2 + $0x300] sm:$0xff] %vm1170, %v1010
  %1268 = vst.msk [vmem:[#allocation2 + $0x308] sm:$0xff] %vm1170, %v1011
  %1269 = vst.msk [vmem:[#allocation2 + $0x310] sm:$0xff] %vm1170, %v1012
  %1270 = vst.msk [vmem:[#allocation2 + $0x318] sm:$0xff] %vm1170, %v1013
  %1271 = vst.msk [vmem:[#allocation2 + $0x320] sm:$0xff] %vm1170, %v1014
  %1272 = vst.msk [vmem:[#allocation2 + $0x328] sm:$0xff] %vm1170, %v1015
  %1273 = vst.msk [vmem:[#allocation2 + $0x330] sm:$0xff] %vm1170, %v1016
  %1274 = vst.msk [vmem:[#allocation2 + $0x338] sm:$0xff] %vm1170, %v1017
  %1275 = vst.msk [vmem:[#allocation2 + $0x340] sm:$0xff] %vm1170, %v1018
  %1276 = vst.msk [vmem:[#allocation2 + $0x348] sm:$0xff] %vm1170, %v1019
  %1277 = vst.msk [vmem:[#allocation2 + $0x350] sm:$0xff] %vm1170, %v1020
  %1278 = vst.msk [vmem:[#allocation2 + $0x358] sm:$0xff] %vm1170, %v1021
  %1279 = vst.msk [vmem:[#allocation2 + $0x360] sm:$0xff] %vm1170, %v1022
  %1280 = vst.msk [vmem:[#allocation2 + $0x368] sm:$0xff] %vm1170, %v1023
  %1281 = vst.msk [vmem:[#allocation2 + $0x370] sm:$0xff] %vm1170, %v1024
  %1282 = vst.msk [vmem:[#allocation2 + $0x378] sm:$0xff] %vm1170, %v1025
  %1283 = vst.msk [vmem:[#allocation2 + $0x380] sm:$0xff] %vm1170, %v1026
  %1284 = vst.msk [vmem:[#allocation2 + $0x388] sm:$0xff] %vm1170, %v1027
  %1285 = vst.msk [vmem:[#allocation2 + $0x390] sm:$0xff] %vm1170, %v1028
  %1286 = vst.msk [vmem:[#allocation2 + $0x398] sm:$0xff] %vm1170, %v1029
  %1287 = vst.msk [vmem:[#allocation2 + $0x3a0] sm:$0xff] %vm1170, %v1030
  %1288 = vst.msk [vmem:[#allocation2 + $0x3a8] sm:$0xff] %vm1170, %v1031
  %1289 = vst.msk [vmem:[#allocation2 + $0x3b0] sm:$0xff] %vm1170, %v1032
  %1290 = vst.msk [vmem:[#allocation2 + $0x3b8] sm:$0xff] %vm1170, %v1033
  %1291 = vst.msk [vmem:[#allocation2 + $0x3c0] sm:$0xff] %vm1170, %v1034
  %1292 = vst.msk [vmem:[#allocation2 + $0x3c8] sm:$0xff] %vm1170, %v1035
  %1293 = vst.msk [vmem:[#allocation2 + $0x3d0] sm:$0xff] %vm1170, %v1036
  %1294 = vst.msk [vmem:[#allocation2 + $0x3d8] sm:$0xff] %vm1170, %v1037
  %1295 = vst.msk [vmem:[#allocation2 + $0x3e0] sm:$0xff] %vm1170, %v1038
  %1296 = vst.msk [vmem:[#allocation2 + $0x3e8] sm:$0xff] %vm1170, %v1039
  %1297 = vst.msk [vmem:[#allocation2 + $0x3f0] sm:$0xff] %vm1170, %v1040
  %1298 = vst.msk [vmem:[#allocation2 + $0x3f8] sm:$0xff] %vm1170, %v1041
  %v1299 = vld [vmem:[#allocation2] sm:$0xff]
  %v1300 = vld [vmem:[#allocation2 + $0x8] sm:$0xff]
  %v1301 = vld [vmem:[#allocation2 + $0x10] sm:$0xff]
  %v1302 = vld [vmem:[#allocation2 + $0x18] sm:$0xff]
  %v1303 = vld [vmem:[#allocation2 + $0x20] sm:$0xff]
  %v1304 = vld [vmem:[#allocation2 + $0x28] sm:$0xff]
  %v1305 = vld [vmem:[#allocation2 + $0x30] sm:$0xff]
  %v1306 = vld [vmem:[#allocation2 + $0x38] sm:$0xff]
  %v1307 = vld [vmem:[#allocation2 + $0x40] sm:$0xff]
  %v1308 = vld [vmem:[#allocation2 + $0x48] sm:$0xff]
  %v1309 = vld [vmem:[#allocation2 + $0x50] sm:$0xff]
  %v1310 = vld [vmem:[#allocation2 + $0x58] sm:$0xff]
  %v1311 = vld [vmem:[#allocation2 + $0x60] sm:$0xff]
  %v1312 = vld [vmem:[#allocation2 + $0x68] sm:$0xff]
  %v1313 = vld [vmem:[#allocation2 + $0x70] sm:$0xff]
  %v1314 = vld [vmem:[#allocation2 + $0x78] sm:$0xff]
  %v1315 = vld [vmem:[#allocation2 + $0x80] sm:$0xff]
  %v1316 = vld [vmem:[#allocation2 + $0x88] sm:$0xff]
  %v1317 = vld [vmem:[#allocation2 + $0x90] sm:$0xff]
  %v1318 = vld [vmem:[#allocation2 + $0x98] sm:$0xff]
  %v1319 = vld [vmem:[#allocation2 + $0xa0] sm:$0xff]
  %v1320 = vld [vmem:[#allocation2 + $0xa8] sm:$0xff]
  %v1321 = vld [vmem:[#allocation2 + $0xb0] sm:$0xff]
  %v1322 = vld [vmem:[#allocation2 + $0xb8] sm:$0xff]
  %v1323 = vld [vmem:[#allocation2 + $0xc0] sm:$0xff]
  %v1324 = vld [vmem:[#allocation2 + $0xc8] sm:$0xff]
  %v1325 = vld [vmem:[#allocation2 + $0xd0] sm:$0xff]
  %v1326 = vld [vmem:[#allocation2 + $0xd8] sm:$0xff]
  %v1327 = vld [vmem:[#allocation2 + $0xe0] sm:$0xff]
  %v1328 = vld [vmem:[#allocation2 + $0xe8] sm:$0xff]
  %v1329 = vld [vmem:[#allocation2 + $0xf0] sm:$0xff]
  %v1330 = vld [vmem:[#allocation2 + $0xf8] sm:$0xff]
  %v1331 = vld [vmem:[#allocation2 + $0x100] sm:$0xff]
  %v1332 = vld [vmem:[#allocation2 + $0x108] sm:$0xff]
  %v1333 = vld [vmem:[#allocation2 + $0x110] sm:$0xff]
  %v1334 = vld [vmem:[#allocation2 + $0x118] sm:$0xff]
  %v1335 = vld [vmem:[#allocation2 + $0x120] sm:$0xff]
  %v1336 = vld [vmem:[#allocation2 + $0x128] sm:$0xff]
  %v1337 = vld [vmem:[#allocation2 + $0x130] sm:$0xff]
  %v1338 = vld [vmem:[#allocation2 + $0x138] sm:$0xff]
  %v1339 = vld [vmem:[#allocation2 + $0x140] sm:$0xff]
  %v1340 = vld [vmem:[#allocation2 + $0x148] sm:$0xff]
  %v1341 = vld [vmem:[#allocation2 + $0x150] sm:$0xff]
  %v1342 = vld [vmem:[#allocation2 + $0x158] sm:$0xff]
  %v1343 = vld [vmem:[#allocation2 + $0x160] sm:$0xff]
  %v1344 = vld [vmem:[#allocation2 + $0x168] sm:$0xff]
  %v1345 = vld [vmem:[#allocation2 + $0x170] sm:$0xff]
  %v1346 = vld [vmem:[#allocation2 + $0x178] sm:$0xff]
  %v1347 = vld [vmem:[#allocation2 + $0x180] sm:$0xff]
  %v1348 = vld [vmem:[#allocation2 + $0x188] sm:$0xff]
  %v1349 = vld [vmem:[#allocation2 + $0x190] sm:$0xff]
  %v1350 = vld [vmem:[#allocation2 + $0x198] sm:$0xff]
  %v1351 = vld [vmem:[#allocation2 + $0x1a0] sm:$0xff]
  %v1352 = vld [vmem:[#allocation2 + $0x1a8] sm:$0xff]
  %v1353 = vld [vmem:[#allocation2 + $0x1b0] sm:$0xff]
  %v1354 = vld [vmem:[#allocation2 + $0x1b8] sm:$0xff]
  %v1355 = vld [vmem:[#allocation2 + $0x1c0] sm:$0xff]
  %v1356 = vld [vmem:[#allocation2 + $0x1c8] sm:$0xff]
  %v1357 = vld [vmem:[#allocation2 + $0x1d0] sm:$0xff]
  %v1358 = vld [vmem:[#allocation2 + $0x1d8] sm:$0xff]
  %v1359 = vld [vmem:[#allocation2 + $0x1e0] sm:$0xff]
  %v1360 = vld [vmem:[#allocation2 + $0x1e8] sm:$0xff]
  %v1361 = vld [vmem:[#allocation2 + $0x1f0] sm:$0xff]
  %v1362 = vld [vmem:[#allocation2 + $0x1f8] sm:$0xff]
  %v1363 = vld [vmem:[#allocation2 + $0x200] sm:$0xff]
  %v1364 = vld [vmem:[#allocation2 + $0x208] sm:$0xff]
  %v1365 = vld [vmem:[#allocation2 + $0x210] sm:$0xff]
  %v1366 = vld [vmem:[#allocation2 + $0x218] sm:$0xff]
  %v1367 = vld [vmem:[#allocation2 + $0x220] sm:$0xff]
  %v1368 = vld [vmem:[#allocation2 + $0x228] sm:$0xff]
  %v1369 = vld [vmem:[#allocation2 + $0x230] sm:$0xff]
  %v1370 = vld [vmem:[#allocation2 + $0x238] sm:$0xff]
  %v1371 = vld [vmem:[#allocation2 + $0x240] sm:$0xff]
  %v1372 = vld [vmem:[#allocation2 + $0x248] sm:$0xff]
  %v1373 = vld [vmem:[#allocation2 + $0x250] sm:$0xff]
  %v1374 = vld [vmem:[#allocation2 + $0x258] sm:$0xff]
  %v1375 = vld [vmem:[#allocation2 + $0x260] sm:$0xff]
  %v1376 = vld [vmem:[#allocation2 + $0x268] sm:$0xff]
  %v1377 = vld [vmem:[#allocation2 + $0x270] sm:$0xff]
  %v1378 = vld [vmem:[#allocation2 + $0x278] sm:$0xff]
  %v1379 = vld [vmem:[#allocation2 + $0x280] sm:$0xff]
  %v1380 = vld [vmem:[#allocation2 + $0x288] sm:$0xff]
  %v1381 = vld [vmem:[#allocation2 + $0x290] sm:$0xff]
  %v1382 = vld [vmem:[#allocation2 + $0x298] sm:$0xff]
  %v1383 = vld [vmem:[#allocation2 + $0x2a0] sm:$0xff]
  %v1384 = vld [vmem:[#allocation2 + $0x2a8] sm:$0xff]
  %v1385 = vld [vmem:[#allocation2 + $0x2b0] sm:$0xff]
  %v1386 = vld [vmem:[#allocation2 + $0x2b8] sm:$0xff]
  %v1387 = vld [vmem:[#allocation2 + $0x2c0] sm:$0xff]
  %v1388 = vld [vmem:[#allocation2 + $0x2c8] sm:$0xff]
  %v1389 = vld [vmem:[#allocation2 + $0x2d0] sm:$0xff]
  %v1390 = vld [vmem:[#allocation2 + $0x2d8] sm:$0xff]
  %v1391 = vld [vmem:[#allocation2 + $0x2e0] sm:$0xff]
  %v1392 = vld [vmem:[#allocation2 + $0x2e8] sm:$0xff]
  %v1393 = vld [vmem:[#allocation2 + $0x2f0] sm:$0xff]
  %v1394 = vld [vmem:[#allocation2 + $0x2f8] sm:$0xff]
  %v1395 = vld [vmem:[#allocation2 + $0x300] sm:$0xff]
  %v1396 = vld [vmem:[#allocation2 + $0x308] sm:$0xff]
  %v1397 = vld [vmem:[#allocation2 + $0x310] sm:$0xff]
  %v1398 = vld [vmem:[#allocation2 + $0x318] sm:$0xff]
  %v1399 = vld [vmem:[#allocation2 + $0x320] sm:$0xff]
  %v1400 = vld [vmem:[#allocation2 + $0x328] sm:$0xff]
  %v1401 = vld [vmem:[#allocation2 + $0x330] sm:$0xff]
  %v1402 = vld [vmem:[#allocation2 + $0x338] sm:$0xff]
  %v1403 = vld [vmem:[#allocation2 + $0x340] sm:$0xff]
  %v1404 = vld [vmem:[#allocation2 + $0x348] sm:$0xff]
  %v1405 = vld [vmem:[#allocation2 + $0x350] sm:$0xff]
  %v1406 = vld [vmem:[#allocation2 + $0x358] sm:$0xff]
  %v1407 = vld [vmem:[#allocation2 + $0x360] sm:$0xff]
  %v1408 = vld [vmem:[#allocation2 + $0x368] sm:$0xff]
  %v1409 = vld [vmem:[#allocation2 + $0x370] sm:$0xff]
  %v1410 = vld [vmem:[#allocation2 + $0x378] sm:$0xff]
  %v1411 = vld [vmem:[#allocation2 + $0x380] sm:$0xff]
  %v1412 = vld [vmem:[#allocation2 + $0x388] sm:$0xff]
  %v1413 = vld [vmem:[#allocation2 + $0x390] sm:$0xff]
  %v1414 = vld [vmem:[#allocation2 + $0x398] sm:$0xff]
  %v1415 = vld [vmem:[#allocation2 + $0x3a0] sm:$0xff]
  %v1416 = vld [vmem:[#allocation2 + $0x3a8] sm:$0xff]
  %v1417 = vld [vmem:[#allocation2 + $0x3b0] sm:$0xff]
  %v1418 = vld [vmem:[#allocation2 + $0x3b8] sm:$0xff]
  %v1419 = vld [vmem:[#allocation2 + $0x3c0] sm:$0xff]
  %v1420 = vld [vmem:[#allocation2 + $0x3c8] sm:$0xff]
  %v1421 = vld [vmem:[#allocation2 + $0x3d0] sm:$0xff]
  %v1422 = vld [vmem:[#allocation2 + $0x3d8] sm:$0xff]
  %v1423 = vld [vmem:[#allocation2 + $0x3e0] sm:$0xff]
  %v1424 = vld [vmem:[#allocation2 + $0x3e8] sm:$0xff]
  %v1425 = vld [vmem:[#allocation2 + $0x3f0] sm:$0xff]
  %v1426 = vld [vmem:[#allocation2 + $0x3f8] sm:$0xff]
  %v1427 = vld [vmem:[%s1] sm:$0xf]
  %v1428 = vld [vmem:[%s1 + $0x4] sm:$0xf]
  %v1429 = vld [vmem:[%s1 + $0x8] sm:$0xf]
  %v1430 = vld [vmem:[%s1 + $0xc] sm:$0xf]
  %v1431 = vld [vmem:[%s1 + $0x10] sm:$0xf]
  %v1432 = vld [vmem:[%s1 + $0x14] sm:$0xf]
  %v1433 = vld [vmem:[%s1 + $0x18] sm:$0xf]
  %v1434 = vld [vmem:[%s1 + $0x1c] sm:$0xf]
  %v1435 = vld [vmem:[%s1 + $0x20] sm:$0xf]
  %v1436 = vld [vmem:[%s1 + $0x24] sm:$0xf]
  %v1437 = vld [vmem:[%s1 + $0x28] sm:$0xf]
  %v1438 = vld [vmem:[%s1 + $0x2c] sm:$0xf]
  %v1439 = vld [vmem:[%s1 + $0x30] sm:$0xf]
  %v1440 = vld [vmem:[%s1 + $0x34] sm:$0xf]
  %v1441 = vld [vmem:[%s1 + $0x38] sm:$0xf]
  %v1442 = vld [vmem:[%s1 + $0x3c] sm:$0xf]
  %v1459 = vunpack.c.l.b16 %v1427
  %v1460 = vunpack.c.l.b16 %v1428
  %v1461 = vunpack.c.l.b16 %v1429
  %v1462 = vunpack.c.l.b16 %v1430
  %v1463 = vunpack.c.l.b16 %v1431
  %v1464 = vunpack.c.l.b16 %v1432
  %v1465 = vunpack.c.l.b16 %v1433
  %v1466 = vunpack.c.l.b16 %v1434
  %v1467 = vunpack.c.l.b16 %v1435
  %v1468 = vunpack.c.l.b16 %v1436
  %v1469 = vunpack.c.l.b16 %v1437
  %v1470 = vunpack.c.l.b16 %v1438
  %v1471 = vunpack.c.l.b16 %v1439
  %v1472 = vunpack.c.l.b16 %v1440
  %v1473 = vunpack.c.l.b16 %v1441
  %v1474 = vunpack.c.l.b16 %v1442
  %v1475 = vpack.c.b16 %v1460, %v1459
  %v1476 = vpack.c.b16 %v1462, %v1461
  %v1477 = vpack.c.b16 %v1464, %v1463
  %v1478 = vpack.c.b16 %v1466, %v1465
  %v1479 = vpack.c.b16 %v1468, %v1467
  %v1480 = vpack.c.b16 %v1470, %v1469
  %v1481 = vpack.c.b16 %v1472, %v1471
  %v1482 = vpack.c.b16 %v1474, %v1473
  %1491 = vmatprep.subr.bf16.mxu0 0
  %1492 = vmatpush1.bf16.msra.mxu0 %v1475
  %1493 = vmatprep.subr.bf16.mxu0 0
  %1494 = vmatpush1.bf16.msra.mxu0 %v1476
  %1495 = vmatprep.subr.bf16.mxu0 0
  %1496 = vmatpush1.bf16.msra.mxu0 %v1477
  %1497 = vmatprep.subr.bf16.mxu0 0
  %1498 = vmatpush1.bf16.msra.mxu0 %v1478
  %1499 = vmatprep.subr.bf16.mxu0 0
  %1500 = vmatpush1.bf16.msra.mxu0 %v1479
  %1501 = vmatprep.subr.bf16.mxu0 0
  %1502 = vmatpush1.bf16.msra.mxu0 %v1480
  %1503 = vmatprep.subr.bf16.mxu0 0
  %1504 = vmatpush1.bf16.msra.mxu0 %v1481
  %1505 = vmatprep.subr.bf16.mxu0 0
  %1506 = vmatpush1.bf16.msra.mxu0 %v1482
  %1507 = vmatprep.subr.bf16.mxu0 0
  %1508 = vmatpush1.bf16.msra.mxu0 0
  %1509 = vmatprep.subr.bf16.mxu0 0
  %1510 = vmatpush1.bf16.msra.mxu0 0
  %1511 = vmatprep.subr.bf16.mxu0 0
  %1512 = vmatpush1.bf16.msra.mxu0 0
  %1513 = vmatprep.subr.bf16.mxu0 0
  %1514 = vmatpush1.bf16.msra.mxu0 0
  %1515 = vmatprep.subr.bf16.mxu0 0
  %1516 = vmatpush1.bf16.msra.mxu0 0
  %1517 = vmatprep.subr.bf16.mxu0 0
  %1518 = vmatpush1.bf16.msra.mxu0 0
  %1519 = vmatprep.subr.bf16.mxu0 0
  %1520 = vmatpush1.bf16.msra.mxu0 0
  %1521 = vmatprep.subr.bf16.mxu0 0
  %1522 = vmatpush1.bf16.msra.mxu0 0
  %1523 = vmatprep.mubr.bf16.mxu0 0
  %1524 = vmatmul.mubr.bf16.gmra.mrb[0].mxu0 %v1299
  %v1525 = vpop.f32.mrb[0].mxu0
  %v1526 = vadd.f32 0.0, %v1525
  %v1527 = vpop.f32.mrb[0].mxu0
  %v1528 = vpop.f32.mrb[0].mxu0
  %v1529 = vadd.f32 0.0, %v1528
  %v1530 = vpop.f32.mrb[0].mxu0
  %1531 = vmatprep.mubr.bf16.mxu0 0
  %1532 = vmatmul.mubr.bf16.gmra.mrb[0].mxu0 %v1300
  %v1533 = vpop.f32.mrb[0].mxu0
  %v1534 = vadd.f32 0.0, %v1533
  %v1535 = vpop.f32.mrb[0].mxu0
  %v1536 = vpop.f32.mrb[0].mxu0
  %v1537 = vadd.f32 0.0, %v1536
  %v1538 = vpop.f32.mrb[0].mxu0
  %1539 = vmatprep.mubr.bf16.mxu0 0
  %1540 = vmatmul.mubr.bf16.gmra.mrb[0].mxu0 %v1301
  %v1541 = vpop.f32.mrb[0].mxu0
  %v1542 = vadd.f32 0.0, %v1541
  %v1543 = vpop.f32.mrb[0].mxu0
  %v1544 = vpop.f32.mrb[0].mxu0
  %v1545 = vadd.f32 0.0, %v1544
  %v1546 = vpop.f32.mrb[0].mxu0
  %1547 = vmatprep.mubr.bf16.mxu0 0
  %1548 = vmatmul.mubr.bf16.gmra.mrb[0].mxu0 %v1302
  %v1549 = vpop.f32.mrb[0].mxu0
  %v1550 = vadd.f32 0.0, %v1549
  %v1551 = vpop.f32.mrb[0].mxu0
  %v1552 = vpop.f32.mrb[0].mxu0
  %v1553 = vadd.f32 0.0, %v1552
  %v1554 = vpop.f32.mrb[0].mxu0
  %1555 = vmatprep.mubr.bf16.mxu0 0
  %1556 = vmatmul.mubr.bf16.gmra.mrb[0].mxu0 %v1303
  %v1557 = vpop.f32.mrb[0].mxu0
  %v1558 = vadd.f32 0.0, %v1557
  %v1559 = vpop.f32.mrb[0].mxu0
  %v1560 = vpop.f32.mrb[0].mxu0
  %v1561 = vadd.f32 0.0, %v1560
  %v1562 = vpop.f32.mrb[0].mxu0
  %1563 = vmatprep.mubr.bf16.mxu0 0
  %1564 = vmatmul.mubr.bf16.gmra.mrb[0].mxu0 %v1304
  %v1565 = vpop.f32.mrb[0].mxu0
  %v1566 = vadd.f32 0.0, %v1565
  %v1567 = vpop.f32.mrb[0].mxu0
  %v1568 = vpop.f32.mrb[0].mxu0
  %v1569 = vadd.f32 0.0, %v1568
  %v1570 = vpop.f32.mrb[0].mxu0
  %1571 = vmatprep.mubr.bf16.mxu0 0
  %1572 = vmatmul.mubr.bf16.gmra.mrb[0].mxu0 %v1305
  %v1573 = vpop.f32.mrb[0].mxu0
  %v1574 = vadd.f32 0.0, %v1573
  %v1575 = vpop.f32.mrb[0].mxu0
  %v1576 = vpop.f32.mrb[0].mxu0
  %v1577 = vadd.f32 0.0, %v1576
  %v1578 = vpop.f32.mrb[0].mxu0
  %1579 = vmatprep.mubr.bf16.mxu0 0
  %1580 = vmatmul.mubr.bf16.gmra.mrb[0].mxu0 %v1306
  %v1581 = vpop.f32.mrb[0].mxu0
  %v1582 = vadd.f32 0.0, %v1581
  %v1583 = vpop.f32.mrb[0].mxu0
  %v1584 = vpop.f32.mrb[0].mxu0
  %v1585 = vadd.f32 0.0, %v1584
  %v1586 = vpop.f32.mrb[0].mxu0
  %1587 = vmatprep.mubr.bf16.mxu0 0
  %1588 = vmatmul.mubr.bf16.gmra.mrb[0].mxu0 %v1307
  %v1589 = vpop.f32.mrb[0].mxu0
  %v1590 = vadd.f32 0.0, %v1589
  %v1591 = vpop.f32.mrb[0].mxu0
  %v1592 = vpop.f32.mrb[0].mxu0
  %v1593 = vadd.f32 0.0, %v1592
  %v1594 = vpop.f32.mrb[0].mxu0
  %1595 = vmatprep.mubr.bf16.mxu0 0
  %1596 = vmatmul.mubr.bf16.gmra.mrb[0].mxu0 %v1308
  %v1597 = vpop.f32.mrb[0].mxu0
  %v1598 = vadd.f32 0.0, %v1597
  %v1599 = vpop.f32.mrb[0].mxu0
  %v1600 = vpop.f32.mrb[0].mxu0
  %v1601 = vadd.f32 0.0, %v1600
  %v1602 = vpop.f32.mrb[0].mxu0
  %1603 = vmatprep.mubr.bf16.mxu0 0
  %1604 = vmatmul.mubr.bf16.gmra.mrb[0].mxu0 %v1309
  %v1605 = vpop.f32.mrb[0].mxu0
  %v1606 = vadd.f32 0.0, %v1605
  %v1607 = vpop.f32.mrb[0].mxu0
  %v1608 = vpop.f32.mrb[0].mxu0
  %v1609 = vadd.f32 0.0, %v1608
  %v1610 = vpop.f32.mrb[0].mxu0
  %1611 = vmatprep.mubr.bf16.mxu0 0
  %1612 = vmatmul.mubr.bf16.gmra.mrb[0].mxu0 %v1310
  %v1613 = vpop.f32.mrb[0].mxu0
  %v1614 = vadd.f32 0.0, %v1613
  %v1615 = vpop.f32.mrb[0].mxu0
  %v1616 = vpop.f32.mrb[0].mxu0
  %v1617 = vadd.f32 0.0, %v1616
  %v1618 = vpop.f32.mrb[0].mxu0
  %1619 = vmatprep.mubr.bf16.mxu0 0
  %1620 = vmatmul.mubr.bf16.gmra.mrb[0].mxu0 %v1311
  %v1621 = vpop.f32.mrb[0].mxu0
  %v1622 = vadd.f32 0.0, %v1621
  %v1623 = vpop.f32.mrb[0].mxu0
  %v1624 = vpop.f32.mrb[0].mxu0
  %v1625 = vadd.f32 0.0, %v1624
  %v1626 = vpop.f32.mrb[0].mxu0
  %1627 = vmatprep.mubr.bf16.mxu0 0
  %1628 = vmatmul.mubr.bf16.gmra.mrb[0].mxu0 %v1312
  %v1629 = vpop.f32.mrb[0].mxu0
  %v1630 = vadd.f32 0.0, %v1629
  %v1631 = vpop.f32.mrb[0].mxu0
  %v1632 = vpop.f32.mrb[0].mxu0
  %v1633 = vadd.f32 0.0, %v1632
  %v1634 = vpop.f32.mrb[0].mxu0
  %1635 = vmatprep.mubr.bf16.mxu0 0
  %1636 = vmatmul.mubr.bf16.gmra.mrb[0].mxu0 %v1313
  %v1637 = vpop.f32.mrb[0].mxu0
  %v1638 = vadd.f32 0.0, %v1637
  %v1639 = vpop.f32.mrb[0].mxu0
  %v1640 = vpop.f32.mrb[0].mxu0
  %v1641 = vadd.f32 0.0, %v1640
  %v1642 = vpop.f32.mrb[0].mxu0
  %1643 = vmatprep.mubr.bf16.mxu0 0
  %1644 = vmatmul.mubr.bf16.gmra.mrb[0].mxu0 %v1314
  %v1645 = vpop.f32.mrb[0].mxu0
  %v1646 = vadd.f32 0.0, %v1645
  %v1647 = vpop.f32.mrb[0].mxu0
  %v1648 = vpop.f32.mrb[0].mxu0
  %v1649 = vadd.f32 0.0, %v1648
  %v1650 = vpop.f32.mrb[0].mxu0
  %1651 = vmatprep.mubr.bf16.mxu0 0
  %1652 = vmatmul.mubr.bf16.gmra.mrb[0].mxu0 %v1315
  %v1653 = vpop.f32.mrb[0].mxu0
  %v1654 = vadd.f32 0.0, %v1653
  %v1655 = vpop.f32.mrb[0].mxu0
  %v1656 = vpop.f32.mrb[0].mxu0
  %v1657 = vadd.f32 0.0, %v1656
  %v1658 = vpop.f32.mrb[0].mxu0
  %1659 = vmatprep.mubr.bf16.mxu0 0
  %1660 = vmatmul.mubr.bf16.gmra.mrb[0].mxu0 %v1316
  %v1661 = vpop.f32.mrb[0].mxu0
  %v1662 = vadd.f32 0.0, %v1661
  %v1663 = vpop.f32.mrb[0].mxu0
  %v1664 = vpop.f32.mrb[0].mxu0
  %v1665 = vadd.f32 0.0, %v1664
  %v1666 = vpop.f32.mrb[0].mxu0
  %1667 = vmatprep.mubr.bf16.mxu0 0
  %1668 = vmatmul.mubr.bf16.gmra.mrb[0].mxu0 %v1317
  %v1669 = vpop.f32.mrb[0].mxu0
  %v1670 = vadd.f32 0.0, %v1669
  %v1671 = vpop.f32.mrb[0].mxu0
  %v1672 = vpop.f32.mrb[0].mxu0
  %v1673 = vadd.f32 0.0, %v1672
  %v1674 = vpop.f32.mrb[0].mxu0
  %1675 = vmatprep.mubr.bf16.mxu0 0
  %1676 = vmatmul.mubr.bf16.gmra.mrb[0].mxu0 %v1318
  %v1677 = vpop.f32.mrb[0].mxu0
  %v1678 = vadd.f32 0.0, %v1677
  %v1679 = vpop.f32.mrb[0].mxu0
  %v1680 = vpop.f32.mrb[0].mxu0
  %v1681 = vadd.f32 0.0, %v1680
  %v1682 = vpop.f32.mrb[0].mxu0
  %1683 = vmatprep.mubr.bf16.mxu0 0
  %1684 = vmatmul.mubr.bf16.gmra.mrb[0].mxu0 %v1319
  %v1685 = vpop.f32.mrb[0].mxu0
  %v1686 = vadd.f32 0.0, %v1685
  %v1687 = vpop.f32.mrb[0].mxu0
  %v1688 = vpop.f32.mrb[0].mxu0
  %v1689 = vadd.f32 0.0, %v1688
  %v1690 = vpop.f32.mrb[0].mxu0
  %1691 = vmatprep.mubr.bf16.mxu0 0
  %1692 = vmatmul.mubr.bf16.gmra.mrb[0].mxu0 %v1320
  %v1693 = vpop.f32.mrb[0].mxu0
  %v1694 = vadd.f32 0.0, %v1693
  %v1695 = vpop.f32.mrb[0].mxu0
  %v1696 = vpop.f32.mrb[0].mxu0
  %v1697 = vadd.f32 0.0, %v1696
  %v1698 = vpop.f32.mrb[0].mxu0
  %1699 = vmatprep.mubr.bf16.mxu0 0
  %1700 = vmatmul.mubr.bf16.gmra.mrb[0].mxu0 %v1321
  %v1701 = vpop.f32.mrb[0].mxu0
  %v1702 = vadd.f32 0.0, %v1701
  %v1703 = vpop.f32.mrb[0].mxu0
  %v1704 = vpop.f32.mrb[0].mxu0
  %v1705 = vadd.f32 0.0, %v1704
  %v1706 = vpop.f32.mrb[0].mxu0
  %1707 = vmatprep.mubr.bf16.mxu0 0
  %1708 = vmatmul.mubr.bf16.gmra.mrb[0].mxu0 %v1322
  %v1709 = vpop.f32.mrb[0].mxu0
  %v1710 = vadd.f32 0.0, %v1709
  %v1711 = vpop.f32.mrb[0].mxu0
  %v1712 = vpop.f32.mrb[0].mxu0
  %v1713 = vadd.f32 0.0, %v1712
  %v1714 = vpop.f32.mrb[0].mxu0
  %1715 = vmatprep.mubr.bf16.mxu0 0
  %1716 = vmatmul.mubr.bf16.gmra.mrb[0].mxu0 %v1323
  %v1717 = vpop.f32.mrb[0].mxu0
  %v1718 = vadd.f32 0.0, %v1717
  %v1719 = vpop.f32.mrb[0].mxu0
  %v1720 = vpop.f32.mrb[0].mxu0
  %v1721 = vadd.f32 0.0, %v1720
  %v1722 = vpop.f32.mrb[0].mxu0
  %1723 = vmatprep.mubr.bf16.mxu0 0
  %1724 = vmatmul.mubr.bf16.gmra.mrb[0].mxu0 %v1324
  %v1725 = vpop.f32.mrb[0].mxu0
  %v1726 = vadd.f32 0.0, %v1725
  %v1727 = vpop.f32.mrb[0].mxu0
  %v1728 = vpop.f32.mrb[0].mxu0
  %v1729 = vadd.f32 0.0, %v1728
  %v1730 = vpop.f32.mrb[0].mxu0
  %1731 = vmatprep.mubr.bf16.mxu0 0
  %1732 = vmatmul.mubr.bf16.gmra.mrb[0].mxu0 %v1325
  %v1733 = vpop.f32.mrb[0].mxu0
  %v1734 = vadd.f32 0.0, %v1733
  %v1735 = vpop.f32.mrb[0].mxu0
  %v1736 = vpop.f32.mrb[0].mxu0
  %v1737 = vadd.f32 0.0, %v1736
  %v1738 = vpop.f32.mrb[0].mxu0
  %1739 = vmatprep.mubr.bf16.mxu0 0
  %1740 = vmatmul.mubr.bf16.gmra.mrb[0].mxu0 %v1326
  %v1741 = vpop.f32.mrb[0].mxu0
  %v1742 = vadd.f32 0.0, %v1741
  %v1743 = vpop.f32.mrb[0].mxu0
  %v1744 = vpop.f32.mrb[0].mxu0
  %v1745 = vadd.f32 0.0, %v1744
  %v1746 = vpop.f32.mrb[0].mxu0
  %1747 = vmatprep.mubr.bf16.mxu0 0
  %1748 = vmatmul.mubr.bf16.gmra.mrb[0].mxu0 %v1327
  %v1749 = vpop.f32.mrb[0].mxu0
  %v1750 = vadd.f32 0.0, %v1749
  %v1751 = vpop.f32.mrb[0].mxu0
  %v1752 = vpop.f32.mrb[0].mxu0
  %v1753 = vadd.f32 0.0, %v1752
  %v1754 = vpop.f32.mrb[0].mxu0
  %1755 = vmatprep.mubr.bf16.mxu0 0
  %1756 = vmatmul.mubr.bf16.gmra.mrb[0].mxu0 %v1328
  %v1757 = vpop.f32.mrb[0].mxu0
  %v1758 = vadd.f32 0.0, %v1757
  %v1759 = vpop.f32.mrb[0].mxu0
  %v1760 = vpop.f32.mrb[0].mxu0
  %v1761 = vadd.f32 0.0, %v1760
  %v1762 = vpop.f32.mrb[0].mxu0
  %1763 = vmatprep.mubr.bf16.mxu0 0
  %1764 = vmatmul.mubr.bf16.gmra.mrb[0].mxu0 %v1329
  %v1765 = vpop.f32.mrb[0].mxu0
  %v1766 = vadd.f32 0.0, %v1765
  %v1767 = vpop.f32.mrb[0].mxu0
  %v1768 = vpop.f32.mrb[0].mxu0
  %v1769 = vadd.f32 0.0, %v1768
  %v1770 = vpop.f32.mrb[0].mxu0
  %1771 = vmatprep.mubr.bf16.mxu0 0
  %1772 = vmatmul.mubr.bf16.gmra.mrb[0].mxu0 %v1330
  %v1773 = vpop.f32.mrb[0].mxu0
  %v1774 = vadd.f32 0.0, %v1773
  %v1775 = vpop.f32.mrb[0].mxu0
  %v1776 = vpop.f32.mrb[0].mxu0
  %v1777 = vadd.f32 0.0, %v1776
  %v1778 = vpop.f32.mrb[0].mxu0
  %1779 = vmatprep.mubr.bf16.mxu0 0
  %1780 = vmatmul.mubr.bf16.gmra.mrb[0].mxu0 %v1331
  %v1781 = vpop.f32.mrb[0].mxu0
  %v1782 = vadd.f32 0.0, %v1781
  %v1783 = vpop.f32.mrb[0].mxu0
  %v1784 = vpop.f32.mrb[0].mxu0
  %v1785 = vadd.f32 0.0, %v1784
  %v1786 = vpop.f32.mrb[0].mxu0
  %1787 = vmatprep.mubr.bf16.mxu0 0
  %1788 = vmatmul.mubr.bf16.gmra.mrb[0].mxu0 %v1332
  %v1789 = vpop.f32.mrb[0].mxu0
  %v1790 = vadd.f32 0.0, %v1789
  %v1791 = vpop.f32.mrb[0].mxu0
  %v1792 = vpop.f32.mrb[0].mxu0
  %v1793 = vadd.f32 0.0, %v1792
  %v1794 = vpop.f32.mrb[0].mxu0
  %1795 = vmatprep.mubr.bf16.mxu0 0
  %1796 = vmatmul.mubr.bf16.gmra.mrb[0].mxu0 %v1333
  %v1797 = vpop.f32.mrb[0].mxu0
  %v1798 = vadd.f32 0.0, %v1797
  %v1799 = vpop.f32.mrb[0].mxu0
  %v1800 = vpop.f32.mrb[0].mxu0
  %v1801 = vadd.f32 0.0, %v1800
  %v1802 = vpop.f32.mrb[0].mxu0
  %1803 = vmatprep.mubr.bf16.mxu0 0
  %1804 = vmatmul.mubr.bf16.gmra.mrb[0].mxu0 %v1334
  %v1805 = vpop.f32.mrb[0].mxu0
  %v1806 = vadd.f32 0.0, %v1805
  %v1807 = vpop.f32.mrb[0].mxu0
  %v1808 = vpop.f32.mrb[0].mxu0
  %v1809 = vadd.f32 0.0, %v1808
  %v1810 = vpop.f32.mrb[0].mxu0
  %1811 = vmatprep.mubr.bf16.mxu0 0
  %1812 = vmatmul.mubr.bf16.gmra.mrb[0].mxu0 %v1335
  %v1813 = vpop.f32.mrb[0].mxu0
  %v1814 = vadd.f32 0.0, %v1813
  %v1815 = vpop.f32.mrb[0].mxu0
  %v1816 = vpop.f32.mrb[0].mxu0
  %v1817 = vadd.f32 0.0, %v1816
  %v1818 = vpop.f32.mrb[0].mxu0
  %1819 = vmatprep.mubr.bf16.mxu0 0
  %1820 = vmatmul.mubr.bf16.gmra.mrb[0].mxu0 %v1336
  %v1821 = vpop.f32.mrb[0].mxu0
  %v1822 = vadd.f32 0.0, %v1821
  %v1823 = vpop.f32.mrb[0].mxu0
  %v1824 = vpop.f32.mrb[0].mxu0
  %v1825 = vadd.f32 0.0, %v1824
  %v1826 = vpop.f32.mrb[0].mxu0
  %1827 = vmatprep.mubr.bf16.mxu0 0
  %1828 = vmatmul.mubr.bf16.gmra.mrb[0].mxu0 %v1337
  %v1829 = vpop.f32.mrb[0].mxu0
  %v1830 = vadd.f32 0.0, %v1829
  %v1831 = vpop.f32.mrb[0].mxu0
  %v1832 = vpop.f32.mrb[0].mxu0
  %v1833 = vadd.f32 0.0, %v1832
  %v1834 = vpop.f32.mrb[0].mxu0
  %1835 = vmatprep.mubr.bf16.mxu0 0
  %1836 = vmatmul.mubr.bf16.gmra.mrb[0].mxu0 %v1338
  %v1837 = vpop.f32.mrb[0].mxu0
  %v1838 = vadd.f32 0.0, %v1837
  %v1839 = vpop.f32.mrb[0].mxu0
  %v1840 = vpop.f32.mrb[0].mxu0
  %v1841 = vadd.f32 0.0, %v1840
  %v1842 = vpop.f32.mrb[0].mxu0
  %1843 = vmatprep.mubr.bf16.mxu0 0
  %1844 = vmatmul.mubr.bf16.gmra.mrb[0].mxu0 %v1339
  %v1845 = vpop.f32.mrb[0].mxu0
  %v1846 = vadd.f32 0.0, %v1845
  %v1847 = vpop.f32.mrb[0].mxu0
  %v1848 = vpop.f32.mrb[0].mxu0
  %v1849 = vadd.f32 0.0, %v1848
  %v1850 = vpop.f32.mrb[0].mxu0
  %1851 = vmatprep.mubr.bf16.mxu0 0
  %1852 = vmatmul.mubr.bf16.gmra.mrb[0].mxu0 %v1340
  %v1853 = vpop.f32.mrb[0].mxu0
  %v1854 = vadd.f32 0.0, %v1853
  %v1855 = vpop.f32.mrb[0].mxu0
  %v1856 = vpop.f32.mrb[0].mxu0
  %v1857 = vadd.f32 0.0, %v1856
  %v1858 = vpop.f32.mrb[0].mxu0
  %1859 = vmatprep.mubr.bf16.mxu0 0
  %1860 = vmatmul.mubr.bf16.gmra.mrb[0].mxu0 %v1341
  %v1861 = vpop.f32.mrb[0].mxu0
  %v1862 = vadd.f32 0.0, %v1861
  %v1863 = vpop.f32.mrb[0].mxu0
  %v1864 = vpop.f32.mrb[0].mxu0
  %v1865 = vadd.f32 0.0, %v1864
  %v1866 = vpop.f32.mrb[0].mxu0
  %1867 = vmatprep.mubr.bf16.mxu0 0
  %1868 = vmatmul.mubr.bf16.gmra.mrb[0].mxu0 %v1342
  %v1869 = vpop.f32.mrb[0].mxu0
  %v1870 = vadd.f32 0.0, %v1869
  %v1871 = vpop.f32.mrb[0].mxu0
  %v1872 = vpop.f32.mrb[0].mxu0
  %v1873 = vadd.f32 0.0, %v1872
  %v1874 = vpop.f32.mrb[0].mxu0
  %1875 = vmatprep.mubr.bf16.mxu0 0
  %1876 = vmatmul.mubr.bf16.gmra.mrb[0].mxu0 %v1343
  %v1877 = vpop.f32.mrb[0].mxu0
  %v1878 = vadd.f32 0.0, %v1877
  %v1879 = vpop.f32.mrb[0].mxu0
  %v1880 = vpop.f32.mrb[0].mxu0
  %v1881 = vadd.f32 0.0, %v1880
  %v1882 = vpop.f32.mrb[0].mxu0
  %1883 = vmatprep.mubr.bf16.mxu0 0
  %1884 = vmatmul.mubr.bf16.gmra.mrb[0].mxu0 %v1344
  %v1885 = vpop.f32.mrb[0].mxu0
  %v1886 = vadd.f32 0.0, %v1885
  %v1887 = vpop.f32.mrb[0].mxu0
  %v1888 = vpop.f32.mrb[0].mxu0
  %v1889 = vadd.f32 0.0, %v1888
  %v1890 = vpop.f32.mrb[0].mxu0
  %1891 = vmatprep.mubr.bf16.mxu0 0
  %1892 = vmatmul.mubr.bf16.gmra.mrb[0].mxu0 %v1345
  %v1893 = vpop.f32.mrb[0].mxu0
  %v1894 = vadd.f32 0.0, %v1893
  %v1895 = vpop.f32.mrb[0].mxu0
  %v1896 = vpop.f32.mrb[0].mxu0
  %v1897 = vadd.f32 0.0, %v1896
  %v1898 = vpop.f32.mrb[0].mxu0
  %1899 = vmatprep.mubr.bf16.mxu0 0
  %1900 = vmatmul.mubr.bf16.gmra.mrb[0].mxu0 %v1346
  %v1901 = vpop.f32.mrb[0].mxu0
  %v1902 = vadd.f32 0.0, %v1901
  %v1903 = vpop.f32.mrb[0].mxu0
  %v1904 = vpop.f32.mrb[0].mxu0
  %v1905 = vadd.f32 0.0, %v1904
  %v1906 = vpop.f32.mrb[0].mxu0
  %1907 = vmatprep.mubr.bf16.mxu0 0
  %1908 = vmatmul.mubr.bf16.gmra.mrb[0].mxu0 %v1347
  %v1909 = vpop.f32.mrb[0].mxu0
  %v1910 = vadd.f32 0.0, %v1909
  %v1911 = vpop.f32.mrb[0].mxu0
  %v1912 = vpop.f32.mrb[0].mxu0
  %v1913 = vadd.f32 0.0, %v1912
  %v1914 = vpop.f32.mrb[0].mxu0
  %1915 = vmatprep.mubr.bf16.mxu0 0
  %1916 = vmatmul.mubr.bf16.gmra.mrb[0].mxu0 %v1348
  %v1917 = vpop.f32.mrb[0].mxu0
  %v1918 = vadd.f32 0.0, %v1917
  %v1919 = vpop.f32.mrb[0].mxu0
  %v1920 = vpop.f32.mrb[0].mxu0
  %v1921 = vadd.f32 0.0, %v1920
  %v1922 = vpop.f32.mrb[0].mxu0
  %1923 = vmatprep.mubr.bf16.mxu0 0
  %1924 = vmatmul.mubr.bf16.gmra.mrb[0].mxu0 %v1349
  %v1925 = vpop.f32.mrb[0].mxu0
  %v1926 = vadd.f32 0.0, %v1925
  %v1927 = vpop.f32.mrb[0].mxu0
  %v1928 = vpop.f32.mrb[0].mxu0
  %v1929 = vadd.f32 0.0, %v1928
  %v1930 = vpop.f32.mrb[0].mxu0
  %1931 = vmatprep.mubr.bf16.mxu0 0
  %1932 = vmatmul.mubr.bf16.gmra.mrb[0].mxu0 %v1350
  %v1933 = vpop.f32.mrb[0].mxu0
  %v1934 = vadd.f32 0.0, %v1933
  %v1935 = vpop.f32.mrb[0].mxu0
  %v1936 = vpop.f32.mrb[0].mxu0
  %v1937 = vadd.f32 0.0, %v1936
  %v1938 = vpop.f32.mrb[0].mxu0
  %1939 = vmatprep.mubr.bf16.mxu0 0
  %1940 = vmatmul.mubr.bf16.gmra.mrb[0].mxu0 %v1351
  %v1941 = vpop.f32.mrb[0].mxu0
  %v1942 = vadd.f32 0.0, %v1941
  %v1943 = vpop.f32.mrb[0].mxu0
  %v1944 = vpop.f32.mrb[0].mxu0
  %v1945 = vadd.f32 0.0, %v1944
  %v1946 = vpop.f32.mrb[0].mxu0
  %1947 = vmatprep.mubr.bf16.mxu0 0
  %1948 = vmatmul.mubr.bf16.gmra.mrb[0].mxu0 %v1352
  %v1949 = vpop.f32.mrb[0].mxu0
  %v1950 = vadd.f32 0.0, %v1949
  %v1951 = vpop.f32.mrb[0].mxu0
  %v1952 = vpop.f32.mrb[0].mxu0
  %v1953 = vadd.f32 0.0, %v1952
  %v1954 = vpop.f32.mrb[0].mxu0
  %1955 = vmatprep.mubr.bf16.mxu0 0
  %1956 = vmatmul.mubr.bf16.gmra.mrb[0].mxu0 %v1353
  %v1957 = vpop.f32.mrb[0].mxu0
  %v1958 = vadd.f32 0.0, %v1957
  %v1959 = vpop.f32.mrb[0].mxu0
  %v1960 = vpop.f32.mrb[0].mxu0
  %v1961 = vadd.f32 0.0, %v1960
  %v1962 = vpop.f32.mrb[0].mxu0
  %1963 = vmatprep.mubr.bf16.mxu0 0
  %1964 = vmatmul.mubr.bf16.gmra.mrb[0].mxu0 %v1354
  %v1965 = vpop.f32.mrb[0].mxu0
  %v1966 = vadd.f32 0.0, %v1965
  %v1967 = vpop.f32.mrb[0].mxu0
  %v1968 = vpop.f32.mrb[0].mxu0
  %v1969 = vadd.f32 0.0, %v1968
  %v1970 = vpop.f32.mrb[0].mxu0
  %1971 = vmatprep.mubr.bf16.mxu0 0
  %1972 = vmatmul.mubr.bf16.gmra.mrb[0].mxu0 %v1355
  %v1973 = vpop.f32.mrb[0].mxu0
  %v1974 = vadd.f32 0.0, %v1973
  %v1975 = vpop.f32.mrb[0].mxu0
  %v1976 = vpop.f32.mrb[0].mxu0
  %v1977 = vadd.f32 0.0, %v1976
  %v1978 = vpop.f32.mrb[0].mxu0
  %1979 = vmatprep.mubr.bf16.mxu0 0
  %1980 = vmatmul.mubr.bf16.gmra.mrb[0].mxu0 %v1356
  %v1981 = vpop.f32.mrb[0].mxu0
  %v1982 = vadd.f32 0.0, %v1981
  %v1983 = vpop.f32.mrb[0].mxu0
  %v1984 = vpop.f32.mrb[0].mxu0
  %v1985 = vadd.f32 0.0, %v1984
  %v1986 = vpop.f32.mrb[0].mxu0
  %1987 = vmatprep.mubr.bf16.mxu0 0
  %1988 = vmatmul.mubr.bf16.gmra.mrb[0].mxu0 %v1357
  %v1989 = vpop.f32.mrb[0].mxu0
  %v1990 = vadd.f32 0.0, %v1989
  %v1991 = vpop.f32.mrb[0].mxu0
  %v1992 = vpop.f32.mrb[0].mxu0
  %v1993 = vadd.f32 0.0, %v1992
  %v1994 = vpop.f32.mrb[0].mxu0
  %1995 = vmatprep.mubr.bf16.mxu0 0
  %1996 = vmatmul.mubr.bf16.gmra.mrb[0].mxu0 %v1358
  %v1997 = vpop.f32.mrb[0].mxu0
  %v1998 = vadd.f32 0.0, %v1997
  %v1999 = vpop.f32.mrb[0].mxu0
  %v2000 = vpop.f32.mrb[0].mxu0
  %v2001 = vadd.f32 0.0, %v2000
  %v2002 = vpop.f32.mrb[0].mxu0
  %2003 = vmatprep.mubr.bf16.mxu0 0
  %2004 = vmatmul.mubr.bf16.gmra.mrb[0].mxu0 %v1359
  %v2005 = vpop.f32.mrb[0].mxu0
  %v2006 = vadd.f32 0.0, %v2005
  %v2007 = vpop.f32.mrb[0].mxu0
  %v2008 = vpop.f32.mrb[0].mxu0
  %v2009 = vadd.f32 0.0, %v2008
  %v2010 = vpop.f32.mrb[0].mxu0
  %2011 = vmatprep.mubr.bf16.mxu0 0
  %2012 = vmatmul.mubr.bf16.gmra.mrb[0].mxu0 %v1360
  %v2013 = vpop.f32.mrb[0].mxu0
  %v2014 = vadd.f32 0.0, %v2013
  %v2015 = vpop.f32.mrb[0].mxu0
  %v2016 = vpop.f32.mrb[0].mxu0
  %v2017 = vadd.f32 0.0, %v2016
  %v2018 = vpop.f32.mrb[0].mxu0
  %2019 = vmatprep.mubr.bf16.mxu0 0
  %2020 = vmatmul.mubr.bf16.gmra.mrb[0].mxu0 %v1361
  %v2021 = vpop.f32.mrb[0].mxu0
  %v2022 = vadd.f32 0.0, %v2021
  %v2023 = vpop.f32.mrb[0].mxu0
  %v2024 = vpop.f32.mrb[0].mxu0
  %v2025 = vadd.f32 0.0, %v2024
  %v2026 = vpop.f32.mrb[0].mxu0
  %2027 = vmatprep.mubr.bf16.mxu0 0
  %2028 = vmatmul.mubr.bf16.gmra.mrb[0].mxu0 %v1362
  %v2029 = vpop.f32.mrb[0].mxu0
  %v2030 = vadd.f32 0.0, %v2029
  %v2031 = vpop.f32.mrb[0].mxu0
  %v2032 = vpop.f32.mrb[0].mxu0
  %v2033 = vadd.f32 0.0, %v2032
  %v2034 = vpop.f32.mrb[0].mxu0
  %2035 = vmatprep.mubr.bf16.mxu0 0
  %2036 = vmatmul.mubr.bf16.gmra.mrb[0].mxu0 %v1363
  %v2037 = vpop.f32.mrb[0].mxu0
  %v2038 = vadd.f32 0.0, %v2037
  %v2039 = vpop.f32.mrb[0].mxu0
  %v2040 = vpop.f32.mrb[0].mxu0
  %v2041 = vadd.f32 0.0, %v2040
  %v2042 = vpop.f32.mrb[0].mxu0
  %2043 = vmatprep.mubr.bf16.mxu0 0
  %2044 = vmatmul.mubr.bf16.gmra.mrb[0].mxu0 %v1364
  %v2045 = vpop.f32.mrb[0].mxu0
  %v2046 = vadd.f32 0.0, %v2045
  %v2047 = vpop.f32.mrb[0].mxu0
  %v2048 = vpop.f32.mrb[0].mxu0
  %v2049 = vadd.f32 0.0, %v2048
  %v2050 = vpop.f32.mrb[0].mxu0
  %2051 = vmatprep.mubr.bf16.mxu0 0
  %2052 = vmatmul.mubr.bf16.gmra.mrb[0].mxu0 %v1365
  %v2053 = vpop.f32.mrb[0].mxu0
  %v2054 = vadd.f32 0.0, %v2053
  %v2055 = vpop.f32.mrb[0].mxu0
  %v2056 = vpop.f32.mrb[0].mxu0
  %v2057 = vadd.f32 0.0, %v2056
  %v2058 = vpop.f32.mrb[0].mxu0
  %2059 = vmatprep.mubr.bf16.mxu0 0
  %2060 = vmatmul.mubr.bf16.gmra.mrb[0].mxu0 %v1366
  %v2061 = vpop.f32.mrb[0].mxu0
  %v2062 = vadd.f32 0.0, %v2061
  %v2063 = vpop.f32.mrb[0].mxu0
  %v2064 = vpop.f32.mrb[0].mxu0
  %v2065 = vadd.f32 0.0, %v2064
  %v2066 = vpop.f32.mrb[0].mxu0
  %2067 = vmatprep.mubr.bf16.mxu0 0
  %2068 = vmatmul.mubr.bf16.gmra.mrb[0].mxu0 %v1367
  %v2069 = vpop.f32.mrb[0].mxu0
  %v2070 = vadd.f32 0.0, %v2069
  %v2071 = vpop.f32.mrb[0].mxu0
  %v2072 = vpop.f32.mrb[0].mxu0
  %v2073 = vadd.f32 0.0, %v2072
  %v2074 = vpop.f32.mrb[0].mxu0
  %2075 = vmatprep.mubr.bf16.mxu0 0
  %2076 = vmatmul.mubr.bf16.gmra.mrb[0].mxu0 %v1368
  %v2077 = vpop.f32.mrb[0].mxu0
  %v2078 = vadd.f32 0.0, %v2077
  %v2079 = vpop.f32.mrb[0].mxu0
  %v2080 = vpop.f32.mrb[0].mxu0
  %v2081 = vadd.f32 0.0, %v2080
  %v2082 = vpop.f32.mrb[0].mxu0
  %2083 = vmatprep.mubr.bf16.mxu0 0
  %2084 = vmatmul.mubr.bf16.gmra.mrb[0].mxu0 %v1369
  %v2085 = vpop.f32.mrb[0].mxu0
  %v2086 = vadd.f32 0.0, %v2085
  %v2087 = vpop.f32.mrb[0].mxu0
  %v2088 = vpop.f32.mrb[0].mxu0
  %v2089 = vadd.f32 0.0, %v2088
  %v2090 = vpop.f32.mrb[0].mxu0
  %2091 = vmatprep.mubr.bf16.mxu0 0
  %2092 = vmatmul.mubr.bf16.gmra.mrb[0].mxu0 %v1370
  %v2093 = vpop.f32.mrb[0].mxu0
  %v2094 = vadd.f32 0.0, %v2093
  %v2095 = vpop.f32.mrb[0].mxu0
  %v2096 = vpop.f32.mrb[0].mxu0
  %v2097 = vadd.f32 0.0, %v2096
  %v2098 = vpop.f32.mrb[0].mxu0
  %2099 = vmatprep.mubr.bf16.mxu0 0
  %2100 = vmatmul.mubr.bf16.gmra.mrb[0].mxu0 %v1371
  %v2101 = vpop.f32.mrb[0].mxu0
  %v2102 = vadd.f32 0.0, %v2101
  %v2103 = vpop.f32.mrb[0].mxu0
  %v2104 = vpop.f32.mrb[0].mxu0
  %v2105 = vadd.f32 0.0, %v2104
  %v2106 = vpop.f32.mrb[0].mxu0
  %2107 = vmatprep.mubr.bf16.mxu0 0
  %2108 = vmatmul.mubr.bf16.gmra.mrb[0].mxu0 %v1372
  %v2109 = vpop.f32.mrb[0].mxu0
  %v2110 = vadd.f32 0.0, %v2109
  %v2111 = vpop.f32.mrb[0].mxu0
  %v2112 = vpop.f32.mrb[0].mxu0
  %v2113 = vadd.f32 0.0, %v2112
  %v2114 = vpop.f32.mrb[0].mxu0
  %2115 = vmatprep.mubr.bf16.mxu0 0
  %2116 = vmatmul.mubr.bf16.gmra.mrb[0].mxu0 %v1373
  %v2117 = vpop.f32.mrb[0].mxu0
  %v2118 = vadd.f32 0.0, %v2117
  %v2119 = vpop.f32.mrb[0].mxu0
  %v2120 = vpop.f32.mrb[0].mxu0
  %v2121 = vadd.f32 0.0, %v2120
  %v2122 = vpop.f32.mrb[0].mxu0
  %2123 = vmatprep.mubr.bf16.mxu0 0
  %2124 = vmatmul.mubr.bf16.gmra.mrb[0].mxu0 %v1374
  %v2125 = vpop.f32.mrb[0].mxu0
  %v2126 = vadd.f32 0.0, %v2125
  %v2127 = vpop.f32.mrb[0].mxu0
  %v2128 = vpop.f32.mrb[0].mxu0
  %v2129 = vadd.f32 0.0, %v2128
  %v2130 = vpop.f32.mrb[0].mxu0
  %2131 = vmatprep.mubr.bf16.mxu0 0
  %2132 = vmatmul.mubr.bf16.gmra.mrb[0].mxu0 %v1375
  %v2133 = vpop.f32.mrb[0].mxu0
  %v2134 = vadd.f32 0.0, %v2133
  %v2135 = vpop.f32.mrb[0].mxu0
  %v2136 = vpop.f32.mrb[0].mxu0
  %v2137 = vadd.f32 0.0, %v2136
  %v2138 = vpop.f32.mrb[0].mxu0
  %2139 = vmatprep.mubr.bf16.mxu0 0
  %2140 = vmatmul.mubr.bf16.gmra.mrb[0].mxu0 %v1376
  %v2141 = vpop.f32.mrb[0].mxu0
  %v2142 = vadd.f32 0.0, %v2141
  %v2143 = vpop.f32.mrb[0].mxu0
  %v2144 = vpop.f32.mrb[0].mxu0
  %v2145 = vadd.f32 0.0, %v2144
  %v2146 = vpop.f32.mrb[0].mxu0
  %2147 = vmatprep.mubr.bf16.mxu0 0
  %2148 = vmatmul.mubr.bf16.gmra.mrb[0].mxu0 %v1377
  %v2149 = vpop.f32.mrb[0].mxu0
  %v2150 = vadd.f32 0.0, %v2149
  %v2151 = vpop.f32.mrb[0].mxu0
  %v2152 = vpop.f32.mrb[0].mxu0
  %v2153 = vadd.f32 0.0, %v2152
  %v2154 = vpop.f32.mrb[0].mxu0
  %2155 = vmatprep.mubr.bf16.mxu0 0
  %2156 = vmatmul.mubr.bf16.gmra.mrb[0].mxu0 %v1378
  %v2157 = vpop.f32.mrb[0].mxu0
  %v2158 = vadd.f32 0.0, %v2157
  %v2159 = vpop.f32.mrb[0].mxu0
  %v2160 = vpop.f32.mrb[0].mxu0
  %v2161 = vadd.f32 0.0, %v2160
  %v2162 = vpop.f32.mrb[0].mxu0
  %2163 = vmatprep.mubr.bf16.mxu0 0
  %2164 = vmatmul.mubr.bf16.gmra.mrb[0].mxu0 %v1379
  %v2165 = vpop.f32.mrb[0].mxu0
  %v2166 = vadd.f32 0.0, %v2165
  %v2167 = vpop.f32.mrb[0].mxu0
  %v2168 = vpop.f32.mrb[0].mxu0
  %v2169 = vadd.f32 0.0, %v2168
  %v2170 = vpop.f32.mrb[0].mxu0
  %2171 = vmatprep.mubr.bf16.mxu0 0
  %2172 = vmatmul.mubr.bf16.gmra.mrb[0].mxu0 %v1380
  %v2173 = vpop.f32.mrb[0].mxu0
  %v2174 = vadd.f32 0.0, %v2173
  %v2175 = vpop.f32.mrb[0].mxu0
  %v2176 = vpop.f32.mrb[0].mxu0
  %v2177 = vadd.f32 0.0, %v2176
  %v2178 = vpop.f32.mrb[0].mxu0
  %2179 = vmatprep.mubr.bf16.mxu0 0
  %2180 = vmatmul.mubr.bf16.gmra.mrb[0].mxu0 %v1381
  %v2181 = vpop.f32.mrb[0].mxu0
  %v2182 = vadd.f32 0.0, %v2181
  %v2183 = vpop.f32.mrb[0].mxu0
  %v2184 = vpop.f32.mrb[0].mxu0
  %v2185 = vadd.f32 0.0, %v2184
  %v2186 = vpop.f32.mrb[0].mxu0
  %2187 = vmatprep.mubr.bf16.mxu0 0
  %2188 = vmatmul.mubr.bf16.gmra.mrb[0].mxu0 %v1382
  %v2189 = vpop.f32.mrb[0].mxu0
  %v2190 = vadd.f32 0.0, %v2189
  %v2191 = vpop.f32.mrb[0].mxu0
  %v2192 = vpop.f32.mrb[0].mxu0
  %v2193 = vadd.f32 0.0, %v2192
  %v2194 = vpop.f32.mrb[0].mxu0
  %2195 = vmatprep.mubr.bf16.mxu0 0
  %2196 = vmatmul.mubr.bf16.gmra.mrb[0].mxu0 %v1383
  %v2197 = vpop.f32.mrb[0].mxu0
  %v2198 = vadd.f32 0.0, %v2197
  %v2199 = vpop.f32.mrb[0].mxu0
  %v2200 = vpop.f32.mrb[0].mxu0
  %v2201 = vadd.f32 0.0, %v2200
  %v2202 = vpop.f32.mrb[0].mxu0
  %2203 = vmatprep.mubr.bf16.mxu0 0
  %2204 = vmatmul.mubr.bf16.gmra.mrb[0].mxu0 %v1384
  %v2205 = vpop.f32.mrb[0].mxu0
  %v2206 = vadd.f32 0.0, %v2205
  %v2207 = vpop.f32.mrb[0].mxu0
  %v2208 = vpop.f32.mrb[0].mxu0
  %v2209 = vadd.f32 0.0, %v2208
  %v2210 = vpop.f32.mrb[0].mxu0
  %2211 = vmatprep.mubr.bf16.mxu0 0
  %2212 = vmatmul.mubr.bf16.gmra.mrb[0].mxu0 %v1385
  %v2213 = vpop.f32.mrb[0].mxu0
  %v2214 = vadd.f32 0.0, %v2213
  %v2215 = vpop.f32.mrb[0].mxu0
  %v2216 = vpop.f32.mrb[0].mxu0
  %v2217 = vadd.f32 0.0, %v2216
  %v2218 = vpop.f32.mrb[0].mxu0
  %2219 = vmatprep.mubr.bf16.mxu0 0
  %2220 = vmatmul.mubr.bf16.gmra.mrb[0].mxu0 %v1386
  %v2221 = vpop.f32.mrb[0].mxu0
  %v2222 = vadd.f32 0.0, %v2221
  %v2223 = vpop.f32.mrb[0].mxu0
  %v2224 = vpop.f32.mrb[0].mxu0
  %v2225 = vadd.f32 0.0, %v2224
  %v2226 = vpop.f32.mrb[0].mxu0
  %2227 = vmatprep.mubr.bf16.mxu0 0
  %2228 = vmatmul.mubr.bf16.gmra.mrb[0].mxu0 %v1387
  %v2229 = vpop.f32.mrb[0].mxu0
  %v2230 = vadd.f32 0.0, %v2229
  %v2231 = vpop.f32.mrb[0].mxu0
  %v2232 = vpop.f32.mrb[0].mxu0
  %v2233 = vadd.f32 0.0, %v2232
  %v2234 = vpop.f32.mrb[0].mxu0
  %2235 = vmatprep.mubr.bf16.mxu0 0
  %2236 = vmatmul.mubr.bf16.gmra.mrb[0].mxu0 %v1388
  %v2237 = vpop.f32.mrb[0].mxu0
  %v2238 = vadd.f32 0.0, %v2237
  %v2239 = vpop.f32.mrb[0].mxu0
  %v2240 = vpop.f32.mrb[0].mxu0
  %v2241 = vadd.f32 0.0, %v2240
  %v2242 = vpop.f32.mrb[0].mxu0
  %2243 = vmatprep.mubr.bf16.mxu0 0
  %2244 = vmatmul.mubr.bf16.gmra.mrb[0].mxu0 %v1389
  %v2245 = vpop.f32.mrb[0].mxu0
  %v2246 = vadd.f32 0.0, %v2245
  %v2247 = vpop.f32.mrb[0].mxu0
  %v2248 = vpop.f32.mrb[0].mxu0
  %v2249 = vadd.f32 0.0, %v2248
  %v2250 = vpop.f32.mrb[0].mxu0
  %2251 = vmatprep.mubr.bf16.mxu0 0
  %2252 = vmatmul.mubr.bf16.gmra.mrb[0].mxu0 %v1390
  %v2253 = vpop.f32.mrb[0].mxu0
  %v2254 = vadd.f32 0.0, %v2253
  %v2255 = vpop.f32.mrb[0].mxu0
  %v2256 = vpop.f32.mrb[0].mxu0
  %v2257 = vadd.f32 0.0, %v2256
  %v2258 = vpop.f32.mrb[0].mxu0
  %2259 = vmatprep.mubr.bf16.mxu0 0
  %2260 = vmatmul.mubr.bf16.gmra.mrb[0].mxu0 %v1391
  %v2261 = vpop.f32.mrb[0].mxu0
  %v2262 = vadd.f32 0.0, %v2261
  %v2263 = vpop.f32.mrb[0].mxu0
  %v2264 = vpop.f32.mrb[0].mxu0
  %v2265 = vadd.f32 0.0, %v2264
  %v2266 = vpop.f32.mrb[0].mxu0
  %2267 = vmatprep.mubr.bf16.mxu0 0
  %2268 = vmatmul.mubr.bf16.gmra.mrb[0].mxu0 %v1392
  %v2269 = vpop.f32.mrb[0].mxu0
  %v2270 = vadd.f32 0.0, %v2269
  %v2271 = vpop.f32.mrb[0].mxu0
  %v2272 = vpop.f32.mrb[0].mxu0
  %v2273 = vadd.f32 0.0, %v2272
  %v2274 = vpop.f32.mrb[0].mxu0
  %2275 = vmatprep.mubr.bf16.mxu0 0
  %2276 = vmatmul.mubr.bf16.gmra.mrb[0].mxu0 %v1393
  %v2277 = vpop.f32.mrb[0].mxu0
  %v2278 = vadd.f32 0.0, %v2277
  %v2279 = vpop.f32.mrb[0].mxu0
  %v2280 = vpop.f32.mrb[0].mxu0
  %v2281 = vadd.f32 0.0, %v2280
  %v2282 = vpop.f32.mrb[0].mxu0
  %2283 = vmatprep.mubr.bf16.mxu0 0
  %2284 = vmatmul.mubr.bf16.gmra.mrb[0].mxu0 %v1394
  %v2285 = vpop.f32.mrb[0].mxu0
  %v2286 = vadd.f32 0.0, %v2285
  %v2287 = vpop.f32.mrb[0].mxu0
  %v2288 = vpop.f32.mrb[0].mxu0
  %v2289 = vadd.f32 0.0, %v2288
  %v2290 = vpop.f32.mrb[0].mxu0
  %2291 = vmatprep.mubr.bf16.mxu0 0
  %2292 = vmatmul.mubr.bf16.gmra.mrb[0].mxu0 %v1395
  %v2293 = vpop.f32.mrb[0].mxu0
  %v2294 = vadd.f32 0.0, %v2293
  %v2295 = vpop.f32.mrb[0].mxu0
  %v2296 = vpop.f32.mrb[0].mxu0
  %v2297 = vadd.f32 0.0, %v2296
  %v2298 = vpop.f32.mrb[0].mxu0
  %2299 = vmatprep.mubr.bf16.mxu0 0
  %2300 = vmatmul.mubr.bf16.gmra.mrb[0].mxu0 %v1396
  %v2301 = vpop.f32.mrb[0].mxu0
  %v2302 = vadd.f32 0.0, %v2301
  %v2303 = vpop.f32.mrb[0].mxu0
  %v2304 = vpop.f32.mrb[0].mxu0
  %v2305 = vadd.f32 0.0, %v2304
  %v2306 = vpop.f32.mrb[0].mxu0
  %2307 = vmatprep.mubr.bf16.mxu0 0
  %2308 = vmatmul.mubr.bf16.gmra.mrb[0].mxu0 %v1397
  %v2309 = vpop.f32.mrb[0].mxu0
  %v2310 = vadd.f32 0.0, %v2309
  %v2311 = vpop.f32.mrb[0].mxu0
  %v2312 = vpop.f32.mrb[0].mxu0
  %v2313 = vadd.f32 0.0, %v2312
  %v2314 = vpop.f32.mrb[0].mxu0
  %2315 = vmatprep.mubr.bf16.mxu0 0
  %2316 = vmatmul.mubr.bf16.gmra.mrb[0].mxu0 %v1398
  %v2317 = vpop.f32.mrb[0].mxu0
  %v2318 = vadd.f32 0.0, %v2317
  %v2319 = vpop.f32.mrb[0].mxu0
  %v2320 = vpop.f32.mrb[0].mxu0
  %v2321 = vadd.f32 0.0, %v2320
  %v2322 = vpop.f32.mrb[0].mxu0
  %2323 = vmatprep.mubr.bf16.mxu0 0
  %2324 = vmatmul.mubr.bf16.gmra.mrb[0].mxu0 %v1399
  %v2325 = vpop.f32.mrb[0].mxu0
  %v2326 = vadd.f32 0.0, %v2325
  %v2327 = vpop.f32.mrb[0].mxu0
  %v2328 = vpop.f32.mrb[0].mxu0
  %v2329 = vadd.f32 0.0, %v2328
  %v2330 = vpop.f32.mrb[0].mxu0
  %2331 = vmatprep.mubr.bf16.mxu0 0
  %2332 = vmatmul.mubr.bf16.gmra.mrb[0].mxu0 %v1400
  %v2333 = vpop.f32.mrb[0].mxu0
  %v2334 = vadd.f32 0.0, %v2333
  %v2335 = vpop.f32.mrb[0].mxu0
  %v2336 = vpop.f32.mrb[0].mxu0
  %v2337 = vadd.f32 0.0, %v2336
  %v2338 = vpop.f32.mrb[0].mxu0
  %2339 = vmatprep.mubr.bf16.mxu0 0
  %2340 = vmatmul.mubr.bf16.gmra.mrb[0].mxu0 %v1401
  %v2341 = vpop.f32.mrb[0].mxu0
  %v2342 = vadd.f32 0.0, %v2341
  %v2343 = vpop.f32.mrb[0].mxu0
  %v2344 = vpop.f32.mrb[0].mxu0
  %v2345 = vadd.f32 0.0, %v2344
  %v2346 = vpop.f32.mrb[0].mxu0
  %2347 = vmatprep.mubr.bf16.mxu0 0
  %2348 = vmatmul.mubr.bf16.gmra.mrb[0].mxu0 %v1402
  %v2349 = vpop.f32.mrb[0].mxu0
  %v2350 = vadd.f32 0.0, %v2349
  %v2351 = vpop.f32.mrb[0].mxu0
  %v2352 = vpop.f32.mrb[0].mxu0
  %v2353 = vadd.f32 0.0, %v2352
  %v2354 = vpop.f32.mrb[0].mxu0
  %2355 = vmatprep.mubr.bf16.mxu0 0
  %2356 = vmatmul.mubr.bf16.gmra.mrb[0].mxu0 %v1403
  %v2357 = vpop.f32.mrb[0].mxu0
  %v2358 = vadd.f32 0.0, %v2357
  %v2359 = vpop.f32.mrb[0].mxu0
  %v2360 = vpop.f32.mrb[0].mxu0
  %v2361 = vadd.f32 0.0, %v2360
  %v2362 = vpop.f32.mrb[0].mxu0
  %2363 = vmatprep.mubr.bf16.mxu0 0
  %2364 = vmatmul.mubr.bf16.gmra.mrb[0].mxu0 %v1404
  %v2365 = vpop.f32.mrb[0].mxu0
  %v2366 = vadd.f32 0.0, %v2365
  %v2367 = vpop.f32.mrb[0].mxu0
  %v2368 = vpop.f32.mrb[0].mxu0
  %v2369 = vadd.f32 0.0, %v2368
  %v2370 = vpop.f32.mrb[0].mxu0
  %2371 = vmatprep.mubr.bf16.mxu0 0
  %2372 = vmatmul.mubr.bf16.gmra.mrb[0].mxu0 %v1405
  %v2373 = vpop.f32.mrb[0].mxu0
  %v2374 = vadd.f32 0.0, %v2373
  %v2375 = vpop.f32.mrb[0].mxu0
  %v2376 = vpop.f32.mrb[0].mxu0
  %v2377 = vadd.f32 0.0, %v2376
  %v2378 = vpop.f32.mrb[0].mxu0
  %2379 = vmatprep.mubr.bf16.mxu0 0
  %2380 = vmatmul.mubr.bf16.gmra.mrb[0].mxu0 %v1406
  %v2381 = vpop.f32.mrb[0].mxu0
  %v2382 = vadd.f32 0.0, %v2381
  %v2383 = vpop.f32.mrb[0].mxu0
  %v2384 = vpop.f32.mrb[0].mxu0
  %v2385 = vadd.f32 0.0, %v2384
  %v2386 = vpop.f32.mrb[0].mxu0
  %2387 = vmatprep.mubr.bf16.mxu0 0
  %2388 = vmatmul.mubr.bf16.gmra.mrb[0].mxu0 %v1407
  %v2389 = vpop.f32.mrb[0].mxu0
  %v2390 = vadd.f32 0.0, %v2389
  %v2391 = vpop.f32.mrb[0].mxu0
  %v2392 = vpop.f32.mrb[0].mxu0
  %v2393 = vadd.f32 0.0, %v2392
  %v2394 = vpop.f32.mrb[0].mxu0
  %2395 = vmatprep.mubr.bf16.mxu0 0
  %2396 = vmatmul.mubr.bf16.gmra.mrb[0].mxu0 %v1408
  %v2397 = vpop.f32.mrb[0].mxu0
  %v2398 = vadd.f32 0.0, %v2397
  %v2399 = vpop.f32.mrb[0].mxu0
  %v2400 = vpop.f32.mrb[0].mxu0
  %v2401 = vadd.f32 0.0, %v2400
  %v2402 = vpop.f32.mrb[0].mxu0
  %2403 = vmatprep.mubr.bf16.mxu0 0
  %2404 = vmatmul.mubr.bf16.gmra.mrb[0].mxu0 %v1409
  %v2405 = vpop.f32.mrb[0].mxu0
  %v2406 = vadd.f32 0.0, %v2405
  %v2407 = vpop.f32.mrb[0].mxu0
  %v2408 = vpop.f32.mrb[0].mxu0
  %v2409 = vadd.f32 0.0, %v2408
  %v2410 = vpop.f32.mrb[0].mxu0
  %2411 = vmatprep.mubr.bf16.mxu0 0
  %2412 = vmatmul.mubr.bf16.gmra.mrb[0].mxu0 %v1410
  %v2413 = vpop.f32.mrb[0].mxu0
  %v2414 = vadd.f32 0.0, %v2413
  %v2415 = vpop.f32.mrb[0].mxu0
  %v2416 = vpop.f32.mrb[0].mxu0
  %v2417 = vadd.f32 0.0, %v2416
  %v2418 = vpop.f32.mrb[0].mxu0
  %2419 = vmatprep.mubr.bf16.mxu0 0
  %2420 = vmatmul.mubr.bf16.gmra.mrb[0].mxu0 %v1411
  %v2421 = vpop.f32.mrb[0].mxu0
  %v2422 = vadd.f32 0.0, %v2421
  %v2423 = vpop.f32.mrb[0].mxu0
  %v2424 = vpop.f32.mrb[0].mxu0
  %v2425 = vadd.f32 0.0, %v2424
  %v2426 = vpop.f32.mrb[0].mxu0
  %2427 = vmatprep.mubr.bf16.mxu0 0
  %2428 = vmatmul.mubr.bf16.gmra.mrb[0].mxu0 %v1412
  %v2429 = vpop.f32.mrb[0].mxu0
  %v2430 = vadd.f32 0.0, %v2429
  %v2431 = vpop.f32.mrb[0].mxu0
  %v2432 = vpop.f32.mrb[0].mxu0
  %v2433 = vadd.f32 0.0, %v2432
  %v2434 = vpop.f32.mrb[0].mxu0
  %2435 = vmatprep.mubr.bf16.mxu0 0
  %2436 = vmatmul.mubr.bf16.gmra.mrb[0].mxu0 %v1413
  %v2437 = vpop.f32.mrb[0].mxu0
  %v2438 = vadd.f32 0.0, %v2437
  %v2439 = vpop.f32.mrb[0].mxu0
  %v2440 = vpop.f32.mrb[0].mxu0
  %v2441 = vadd.f32 0.0, %v2440
  %v2442 = vpop.f32.mrb[0].mxu0
  %2443 = vmatprep.mubr.bf16.mxu0 0
  %2444 = vmatmul.mubr.bf16.gmra.mrb[0].mxu0 %v1414
  %v2445 = vpop.f32.mrb[0].mxu0
  %v2446 = vadd.f32 0.0, %v2445
  %v2447 = vpop.f32.mrb[0].mxu0
  %v2448 = vpop.f32.mrb[0].mxu0
  %v2449 = vadd.f32 0.0, %v2448
  %v2450 = vpop.f32.mrb[0].mxu0
  %2451 = vmatprep.mubr.bf16.mxu0 0
  %2452 = vmatmul.mubr.bf16.gmra.mrb[0].mxu0 %v1415
  %v2453 = vpop.f32.mrb[0].mxu0
  %v2454 = vadd.f32 0.0, %v2453
  %v2455 = vpop.f32.mrb[0].mxu0
  %v2456 = vpop.f32.mrb[0].mxu0
  %v2457 = vadd.f32 0.0, %v2456
  %v2458 = vpop.f32.mrb[0].mxu0
  %2459 = vmatprep.mubr.bf16.mxu0 0
  %2460 = vmatmul.mubr.bf16.gmra.mrb[0].mxu0 %v1416
  %v2461 = vpop.f32.mrb[0].mxu0
  %v2462 = vadd.f32 0.0, %v2461
  %v2463 = vpop.f32.mrb[0].mxu0
  %v2464 = vpop.f32.mrb[0].mxu0
  %v2465 = vadd.f32 0.0, %v2464
  %v2466 = vpop.f32.mrb[0].mxu0
  %2467 = vmatprep.mubr.bf16.mxu0 0
  %2468 = vmatmul.mubr.bf16.gmra.mrb[0].mxu0 %v1417
  %v2469 = vpop.f32.mrb[0].mxu0
  %v2470 = vadd.f32 0.0, %v2469
  %v2471 = vpop.f32.mrb[0].mxu0
  %v2472 = vpop.f32.mrb[0].mxu0
  %v2473 = vadd.f32 0.0, %v2472
  %v2474 = vpop.f32.mrb[0].mxu0
  %2475 = vmatprep.mubr.bf16.mxu0 0
  %2476 = vmatmul.mubr.bf16.gmra.mrb[0].mxu0 %v1418
  %v2477 = vpop.f32.mrb[0].mxu0
  %v2478 = vadd.f32 0.0, %v2477
  %v2479 = vpop.f32.mrb[0].mxu0
  %v2480 = vpop.f32.mrb[0].mxu0
  %v2481 = vadd.f32 0.0, %v2480
  %v2482 = vpop.f32.mrb[0].mxu0
  %2483 = vmatprep.mubr.bf16.mxu0 0
  %2484 = vmatmul.mubr.bf16.gmra.mrb[0].mxu0 %v1419
  %v2485 = vpop.f32.mrb[0].mxu0
  %v2486 = vadd.f32 0.0, %v2485
  %v2487 = vpop.f32.mrb[0].mxu0
  %v2488 = vpop.f32.mrb[0].mxu0
  %v2489 = vadd.f32 0.0, %v2488
  %v2490 = vpop.f32.mrb[0].mxu0
  %2491 = vmatprep.mubr.bf16.mxu0 0
  %2492 = vmatmul.mubr.bf16.gmra.mrb[0].mxu0 %v1420
  %v2493 = vpop.f32.mrb[0].mxu0
  %v2494 = vadd.f32 0.0, %v2493
  %v2495 = vpop.f32.mrb[0].mxu0
  %v2496 = vpop.f32.mrb[0].mxu0
  %v2497 = vadd.f32 0.0, %v2496
  %v2498 = vpop.f32.mrb[0].mxu0
  %2499 = vmatprep.mubr.bf16.mxu0 0
  %2500 = vmatmul.mubr.bf16.gmra.mrb[0].mxu0 %v1421
  %v2501 = vpop.f32.mrb[0].mxu0
  %v2502 = vadd.f32 0.0, %v2501
  %v2503 = vpop.f32.mrb[0].mxu0
  %v2504 = vpop.f32.mrb[0].mxu0
  %v2505 = vadd.f32 0.0, %v2504
  %v2506 = vpop.f32.mrb[0].mxu0
  %2507 = vmatprep.mubr.bf16.mxu0 0
  %2508 = vmatmul.mubr.bf16.gmra.mrb[0].mxu0 %v1422
  %v2509 = vpop.f32.mrb[0].mxu0
  %v2510 = vadd.f32 0.0, %v2509
  %v2511 = vpop.f32.mrb[0].mxu0
  %v2512 = vpop.f32.mrb[0].mxu0
  %v2513 = vadd.f32 0.0, %v2512
  %v2514 = vpop.f32.mrb[0].mxu0
  %2515 = vmatprep.mubr.bf16.mxu0 0
  %2516 = vmatmul.mubr.bf16.gmra.mrb[0].mxu0 %v1423
  %v2517 = vpop.f32.mrb[0].mxu0
  %v2518 = vadd.f32 0.0, %v2517
  %v2519 = vpop.f32.mrb[0].mxu0
  %v2520 = vpop.f32.mrb[0].mxu0
  %v2521 = vadd.f32 0.0, %v2520
  %v2522 = vpop.f32.mrb[0].mxu0
  %2523 = vmatprep.mubr.bf16.mxu0 0
  %2524 = vmatmul.mubr.bf16.gmra.mrb[0].mxu0 %v1424
  %v2525 = vpop.f32.mrb[0].mxu0
  %v2526 = vadd.f32 0.0, %v2525
  %v2527 = vpop.f32.mrb[0].mxu0
  %v2528 = vpop.f32.mrb[0].mxu0
  %v2529 = vadd.f32 0.0, %v2528
  %v2530 = vpop.f32.mrb[0].mxu0
  %2531 = vmatprep.mubr.bf16.mxu0 0
  %2532 = vmatmul.mubr.bf16.gmra.mrb[0].mxu0 %v1425
  %v2533 = vpop.f32.mrb[0].mxu0
  %v2534 = vadd.f32 0.0, %v2533
  %v2535 = vpop.f32.mrb[0].mxu0
  %v2536 = vpop.f32.mrb[0].mxu0
  %v2537 = vadd.f32 0.0, %v2536
  %v2538 = vpop.f32.mrb[0].mxu0
  %2539 = vmatprep.mubr.bf16.mxu0 0
  %2540 = vmatmul.mubr.bf16.gmra.mrb[0].mxu0 %v1426
  %v2541 = vpop.f32.mrb[0].mxu0
  %v2542 = vadd.f32 0.0, %v2541
  %v2543 = vpop.f32.mrb[0].mxu0
  %v2544 = vpop.f32.mrb[0].mxu0
  %v2545 = vadd.f32 0.0, %v2544
  %v2546 = vpop.f32.mrb[0].mxu0
  %2547 = vdwg.mxu0
  %v2548 = vmax.f32 %v1526, 0.0
  %v2549 = vmax.f32 %v1529, 0.0
  %v2550 = vmax.f32 %v1534, 0.0
  %v2551 = vmax.f32 %v1537, 0.0
  %v2552 = vmax.f32 %v1542, 0.0
  %v2553 = vmax.f32 %v1545, 0.0
  %v2554 = vmax.f32 %v1550, 0.0
  %v2555 = vmax.f32 %v1553, 0.0
  %v2556 = vmax.f32 %v1558, 0.0
  %v2557 = vmax.f32 %v1561, 0.0
  %v2558 = vmax.f32 %v1566, 0.0
  %v2559 = vmax.f32 %v1569, 0.0
  %v2560 = vmax.f32 %v1574, 0.0
  %v2561 = vmax.f32 %v1577, 0.0
  %v2562 = vmax.f32 %v1582, 0.0
  %v2563 = vmax.f32 %v1585, 0.0
  %v2564 = vmax.f32 %v1590, 0.0
  %v2565 = vmax.f32 %v1593, 0.0
  %v2566 = vmax.f32 %v1598, 0.0
  %v2567 = vmax.f32 %v1601, 0.0
  %v2568 = vmax.f32 %v1606, 0.0
  %v2569 = vmax.f32 %v1609, 0.0
  %v2570 = vmax.f32 %v1614, 0.0
  %v2571 = vmax.f32 %v1617, 0.0
  %v2572 = vmax.f32 %v1622, 0.0
  %v2573 = vmax.f32 %v1625, 0.0
  %v2574 = vmax.f32 %v1630, 0.0
  %v2575 = vmax.f32 %v1633, 0.0
  %v2576 = vmax.f32 %v1638, 0.0
  %v2577 = vmax.f32 %v1641, 0.0
  %v2578 = vmax.f32 %v1646, 0.0
  %v2579 = vmax.f32 %v1649, 0.0
  %v2580 = vmax.f32 %v1654, 0.0
  %v2581 = vmax.f32 %v1657, 0.0
  %v2582 = vmax.f32 %v1662, 0.0
  %v2583 = vmax.f32 %v1665, 0.0
  %v2584 = vmax.f32 %v1670, 0.0
  %v2585 = vmax.f32 %v1673, 0.0
  %v2586 = vmax.f32 %v1678, 0.0
  %v2587 = vmax.f32 %v1681, 0.0
  %v2588 = vmax.f32 %v1686, 0.0
  %v2589 = vmax.f32 %v1689, 0.0
  %v2590 = vmax.f32 %v1694, 0.0
  %v2591 = vmax.f32 %v1697, 0.0
  %v2592 = vmax.f32 %v1702, 0.0
  %v2593 = vmax.f32 %v1705, 0.0
  %v2594 = vmax.f32 %v1710, 0.0
  %v2595 = vmax.f32 %v1713, 0.0
  %v2596 = vmax.f32 %v1718, 0.0
  %v2597 = vmax.f32 %v1721, 0.0
  %v2598 = vmax.f32 %v1726, 0.0
  %v2599 = vmax.f32 %v1729, 0.0
  %v2600 = vmax.f32 %v1734, 0.0
  %v2601 = vmax.f32 %v1737, 0.0
  %v2602 = vmax.f32 %v1742, 0.0
  %v2603 = vmax.f32 %v1745, 0.0
  %v2604 = vmax.f32 %v1750, 0.0
  %v2605 = vmax.f32 %v1753, 0.0
  %v2606 = vmax.f32 %v1758, 0.0
  %v2607 = vmax.f32 %v1761, 0.0
  %v2608 = vmax.f32 %v1766, 0.0
  %v2609 = vmax.f32 %v1769, 0.0
  %v2610 = vmax.f32 %v1774, 0.0
  %v2611 = vmax.f32 %v1777, 0.0
  %v2612 = vmax.f32 %v1782, 0.0
  %v2613 = vmax.f32 %v1785, 0.0
  %v2614 = vmax.f32 %v1790, 0.0
  %v2615 = vmax.f32 %v1793, 0.0
  %v2616 = vmax.f32 %v1798, 0.0
  %v2617 = vmax.f32 %v1801, 0.0
  %v2618 = vmax.f32 %v1806, 0.0
  %v2619 = vmax.f32 %v1809, 0.0
  %v2620 = vmax.f32 %v1814, 0.0
  %v2621 = vmax.f32 %v1817, 0.0
  %v2622 = vmax.f32 %v1822, 0.0
  %v2623 = vmax.f32 %v1825, 0.0
  %v2624 = vmax.f32 %v1830, 0.0
  %v2625 = vmax.f32 %v1833, 0.0
  %v2626 = vmax.f32 %v1838, 0.0
  %v2627 = vmax.f32 %v1841, 0.0
  %v2628 = vmax.f32 %v1846, 0.0
  %v2629 = vmax.f32 %v1849, 0.0
  %v2630 = vmax.f32 %v1854, 0.0
  %v2631 = vmax.f32 %v1857, 0.0
  %v2632 = vmax.f32 %v1862, 0.0
  %v2633 = vmax.f32 %v1865, 0.0
  %v2634 = vmax.f32 %v1870, 0.0
  %v2635 = vmax.f32 %v1873, 0.0
  %v2636 = vmax.f32 %v1878, 0.0
  %v2637 = vmax.f32 %v1881, 0.0
  %v2638 = vmax.f32 %v1886, 0.0
  %v2639 = vmax.f32 %v1889, 0.0
  %v2640 = vmax.f32 %v1894, 0.0
  %v2641 = vmax.f32 %v1897, 0.0
  %v2642 = vmax.f32 %v1902, 0.0
  %v2643 = vmax.f32 %v1905, 0.0
  %v2644 = vmax.f32 %v1910, 0.0
  %v2645 = vmax.f32 %v1913, 0.0
  %v2646 = vmax.f32 %v1918, 0.0
  %v2647 = vmax.f32 %v1921, 0.0
  %v2648 = vmax.f32 %v1926, 0.0
  %v2649 = vmax.f32 %v1929, 0.0
  %v2650 = vmax.f32 %v1934, 0.0
  %v2651 = vmax.f32 %v1937, 0.0
  %v2652 = vmax.f32 %v1942, 0.0
  %v2653 = vmax.f32 %v1945, 0.0
  %v2654 = vmax.f32 %v1950, 0.0
  %v2655 = vmax.f32 %v1953, 0.0
  %v2656 = vmax.f32 %v1958, 0.0
  %v2657 = vmax.f32 %v1961, 0.0
  %v2658 = vmax.f32 %v1966, 0.0
  %v2659 = vmax.f32 %v1969, 0.0
  %v2660 = vmax.f32 %v1974, 0.0
  %v2661 = vmax.f32 %v1977, 0.0
  %v2662 = vmax.f32 %v1982, 0.0
  %v2663 = vmax.f32 %v1985, 0.0
  %v2664 = vmax.f32 %v1990, 0.0
  %v2665 = vmax.f32 %v1993, 0.0
  %v2666 = vmax.f32 %v1998, 0.0
  %v2667 = vmax.f32 %v2001, 0.0
  %v2668 = vmax.f32 %v2006, 0.0
  %v2669 = vmax.f32 %v2009, 0.0
  %v2670 = vmax.f32 %v2014, 0.0
  %v2671 = vmax.f32 %v2017, 0.0
  %v2672 = vmax.f32 %v2022, 0.0
  %v2673 = vmax.f32 %v2025, 0.0
  %v2674 = vmax.f32 %v2030, 0.0
  %v2675 = vmax.f32 %v2033, 0.0
  %v2676 = vmax.f32 %v2038, 0.0
  %v2677 = vmax.f32 %v2041, 0.0
  %v2678 = vmax.f32 %v2046, 0.0
  %v2679 = vmax.f32 %v2049, 0.0
  %v2680 = vmax.f32 %v2054, 0.0
  %v2681 = vmax.f32 %v2057, 0.0
  %v2682 = vmax.f32 %v2062, 0.0
  %v2683 = vmax.f32 %v2065, 0.0
  %v2684 = vmax.f32 %v2070, 0.0
  %v2685 = vmax.f32 %v2073, 0.0
  %v2686 = vmax.f32 %v2078, 0.0
  %v2687 = vmax.f32 %v2081, 0.0
  %v2688 = vmax.f32 %v2086, 0.0
  %v2689 = vmax.f32 %v2089, 0.0
  %v2690 = vmax.f32 %v2094, 0.0
  %v2691 = vmax.f32 %v2097, 0.0
  %v2692 = vmax.f32 %v2102, 0.0
  %v2693 = vmax.f32 %v2105, 0.0
  %v2694 = vmax.f32 %v2110, 0.0
  %v2695 = vmax.f32 %v2113, 0.0
  %v2696 = vmax.f32 %v2118, 0.0
  %v2697 = vmax.f32 %v2121, 0.0
  %v2698 = vmax.f32 %v2126, 0.0
  %v2699 = vmax.f32 %v2129, 0.0
  %v2700 = vmax.f32 %v2134, 0.0
  %v2701 = vmax.f32 %v2137, 0.0
  %v2702 = vmax.f32 %v2142, 0.0
  %v2703 = vmax.f32 %v2145, 0.0
  %v2704 = vmax.f32 %v2150, 0.0
  %v2705 = vmax.f32 %v2153, 0.0
  %v2706 = vmax.f32 %v2158, 0.0
  %v2707 = vmax.f32 %v2161, 0.0
  %v2708 = vmax.f32 %v2166, 0.0
  %v2709 = vmax.f32 %v2169, 0.0
  %v2710 = vmax.f32 %v2174, 0.0
  %v2711 = vmax.f32 %v2177, 0.0
  %v2712 = vmax.f32 %v2182, 0.0
  %v2713 = vmax.f32 %v2185, 0.0
  %v2714 = vmax.f32 %v2190, 0.0
  %v2715 = vmax.f32 %v2193, 0.0
  %v2716 = vmax.f32 %v2198, 0.0
  %v2717 = vmax.f32 %v2201, 0.0
  %v2718 = vmax.f32 %v2206, 0.0
  %v2719 = vmax.f32 %v2209, 0.0
  %v2720 = vmax.f32 %v2214, 0.0
  %v2721 = vmax.f32 %v2217, 0.0
  %v2722 = vmax.f32 %v2222, 0.0
  %v2723 = vmax.f32 %v2225, 0.0
  %v2724 = vmax.f32 %v2230, 0.0
  %v2725 = vmax.f32 %v2233, 0.0
  %v2726 = vmax.f32 %v2238, 0.0
  %v2727 = vmax.f32 %v2241, 0.0
  %v2728 = vmax.f32 %v2246, 0.0
  %v2729 = vmax.f32 %v2249, 0.0
  %v2730 = vmax.f32 %v2254, 0.0
  %v2731 = vmax.f32 %v2257, 0.0
  %v2732 = vmax.f32 %v2262, 0.0
  %v2733 = vmax.f32 %v2265, 0.0
  %v2734 = vmax.f32 %v2270, 0.0
  %v2735 = vmax.f32 %v2273, 0.0
  %v2736 = vmax.f32 %v2278, 0.0
  %v2737 = vmax.f32 %v2281, 0.0
  %v2738 = vmax.f32 %v2286, 0.0
  %v2739 = vmax.f32 %v2289, 0.0
  %v2740 = vmax.f32 %v2294, 0.0
  %v2741 = vmax.f32 %v2297, 0.0
  %v2742 = vmax.f32 %v2302, 0.0
  %v2743 = vmax.f32 %v2305, 0.0
  %v2744 = vmax.f32 %v2310, 0.0
  %v2745 = vmax.f32 %v2313, 0.0
  %v2746 = vmax.f32 %v2318, 0.0
  %v2747 = vmax.f32 %v2321, 0.0
  %v2748 = vmax.f32 %v2326, 0.0
  %v2749 = vmax.f32 %v2329, 0.0
  %v2750 = vmax.f32 %v2334, 0.0
  %v2751 = vmax.f32 %v2337, 0.0
  %v2752 = vmax.f32 %v2342, 0.0
  %v2753 = vmax.f32 %v2345, 0.0
  %v2754 = vmax.f32 %v2350, 0.0
  %v2755 = vmax.f32 %v2353, 0.0
  %v2756 = vmax.f32 %v2358, 0.0
  %v2757 = vmax.f32 %v2361, 0.0
  %v2758 = vmax.f32 %v2366, 0.0
  %v2759 = vmax.f32 %v2369, 0.0
  %v2760 = vmax.f32 %v2374, 0.0
  %v2761 = vmax.f32 %v2377, 0.0
  %v2762 = vmax.f32 %v2382, 0.0
  %v2763 = vmax.f32 %v2385, 0.0
  %v2764 = vmax.f32 %v2390, 0.0
  %v2765 = vmax.f32 %v2393, 0.0
  %v2766 = vmax.f32 %v2398, 0.0
  %v2767 = vmax.f32 %v2401, 0.0
  %v2768 = vmax.f32 %v2406, 0.0
  %v2769 = vmax.f32 %v2409, 0.0
  %v2770 = vmax.f32 %v2414, 0.0
  %v2771 = vmax.f32 %v2417, 0.0
  %v2772 = vmax.f32 %v2422, 0.0
  %v2773 = vmax.f32 %v2425, 0.0
  %v2774 = vmax.f32 %v2430, 0.0
  %v2775 = vmax.f32 %v2433, 0.0
  %v2776 = vmax.f32 %v2438, 0.0
  %v2777 = vmax.f32 %v2441, 0.0
  %v2778 = vmax.f32 %v2446, 0.0
  %v2779 = vmax.f32 %v2449, 0.0
  %v2780 = vmax.f32 %v2454, 0.0
  %v2781 = vmax.f32 %v2457, 0.0
  %v2782 = vmax.f32 %v2462, 0.0
  %v2783 = vmax.f32 %v2465, 0.0
  %v2784 = vmax.f32 %v2470, 0.0
  %v2785 = vmax.f32 %v2473, 0.0
  %v2786 = vmax.f32 %v2478, 0.0
  %v2787 = vmax.f32 %v2481, 0.0
  %v2788 = vmax.f32 %v2486, 0.0
  %v2789 = vmax.f32 %v2489, 0.0
  %v2790 = vmax.f32 %v2494, 0.0
  %v2791 = vmax.f32 %v2497, 0.0
  %v2792 = vmax.f32 %v2502, 0.0
  %v2793 = vmax.f32 %v2505, 0.0
  %v2794 = vmax.f32 %v2510, 0.0
  %v2795 = vmax.f32 %v2513, 0.0
  %v2796 = vmax.f32 %v2518, 0.0
  %v2797 = vmax.f32 %v2521, 0.0
  %v2798 = vmax.f32 %v2526, 0.0
  %v2799 = vmax.f32 %v2529, 0.0
  %v2800 = vmax.f32 %v2534, 0.0
  %v2801 = vmax.f32 %v2537, 0.0
  %v2802 = vmax.f32 %v2542, 0.0
  %v2803 = vmax.f32 %v2545, 0.0
  %v2804 = vadd.f32 %v2548, %v2549
  %v2805 = vadd.f32 %v2804, %v2550
  %v2806 = vadd.f32 %v2805, %v2551
  %v2807 = vadd.f32 %v2806, %v2552
  %v2808 = vadd.f32 %v2807, %v2553
  %v2809 = vadd.f32 %v2808, %v2554
  %v2810 = vadd.f32 %v2809, %v2555
  %v2811 = vadd.f32 %v2810, %v2556
  %v2812 = vadd.f32 %v2811, %v2557
  %v2813 = vadd.f32 %v2812, %v2558
  %v2814 = vadd.f32 %v2813, %v2559
  %v2815 = vadd.f32 %v2814, %v2560
  %v2816 = vadd.f32 %v2815, %v2561
  %v2817 = vadd.f32 %v2816, %v2562
  %v2818 = vadd.f32 %v2817, %v2563
  %v2819 = vadd.f32 %v2818, %v2564
  %v2820 = vadd.f32 %v2819, %v2565
  %v2821 = vadd.f32 %v2820, %v2566
  %v2822 = vadd.f32 %v2821, %v2567
  %v2823 = vadd.f32 %v2822, %v2568
  %v2824 = vadd.f32 %v2823, %v2569
  %v2825 = vadd.f32 %v2824, %v2570
  %v2826 = vadd.f32 %v2825, %v2571
  %v2827 = vadd.f32 %v2826, %v2572
  %v2828 = vadd.f32 %v2827, %v2573
  %v2829 = vadd.f32 %v2828, %v2574
  %v2830 = vadd.f32 %v2829, %v2575
  %v2831 = vadd.f32 %v2830, %v2576
  %v2832 = vadd.f32 %v2831, %v2577
  %v2833 = vadd.f32 %v2832, %v2578
  %v2834 = vadd.f32 %v2833, %v2579
  %v2835 = vrot.slane %v2834, 4
  %v2836 = vadd.f32 %v2834, %v2835
  %v2837 = vrot.slane %v2836, 2
  %v2838 = vadd.f32 %v2836, %v2837
  %v2839 = vrot.slane %v2838, 1
  %v2840 = vadd.f32 %v2838, %v2839
  %v2841 = vadd.f32 %v2580, %v2581
  %v2842 = vadd.f32 %v2841, %v2582
  %v2843 = vadd.f32 %v2842, %v2583
  %v2844 = vadd.f32 %v2843, %v2584
  %v2845 = vadd.f32 %v2844, %v2585
  %v2846 = vadd.f32 %v2845, %v2586
  %v2847 = vadd.f32 %v2846, %v2587
  %v2848 = vadd.f32 %v2847, %v2588
  %v2849 = vadd.f32 %v2848, %v2589
  %v2850 = vadd.f32 %v2849, %v2590
  %v2851 = vadd.f32 %v2850, %v2591
  %v2852 = vadd.f32 %v2851, %v2592
  %v2853 = vadd.f32 %v2852, %v2593
  %v2854 = vadd.f32 %v2853, %v2594
  %v2855 = vadd.f32 %v2854, %v2595
  %v2856 = vadd.f32 %v2855, %v2596
  %v2857 = vadd.f32 %v2856, %v2597
  %v2858 = vadd.f32 %v2857, %v2598
  %v2859 = vadd.f32 %v2858, %v2599
  %v2860 = vadd.f32 %v2859, %v2600
  %v2861 = vadd.f32 %v2860, %v2601
  %v2862 = vadd.f32 %v2861, %v2602
  %v2863 = vadd.f32 %v2862, %v2603
  %v2864 = vadd.f32 %v2863, %v2604
  %v2865 = vadd.f32 %v2864, %v2605
  %v2866 = vadd.f32 %v2865, %v2606
  %v2867 = vadd.f32 %v2866, %v2607
  %v2868 = vadd.f32 %v2867, %v2608
  %v2869 = vadd.f32 %v2868, %v2609
  %v2870 = vadd.f32 %v2869, %v2610
  %v2871 = vadd.f32 %v2870, %v2611
  %v2872 = vrot.slane %v2871, 4
  %v2873 = vadd.f32 %v2871, %v2872
  %v2874 = vrot.slane %v2873, 2
  %v2875 = vadd.f32 %v2873, %v2874
  %v2876 = vrot.slane %v2875, 1
  %v2877 = vadd.f32 %v2875, %v2876
  %v2878 = vadd.f32 %v2612, %v2613
  %v2879 = vadd.f32 %v2878, %v2614
  %v2880 = vadd.f32 %v2879, %v2615
  %v2881 = vadd.f32 %v2880, %v2616
  %v2882 = vadd.f32 %v2881, %v2617
  %v2883 = vadd.f32 %v2882, %v2618
  %v2884 = vadd.f32 %v2883, %v2619
  %v2885 = vadd.f32 %v2884, %v2620
  %v2886 = vadd.f32 %v2885, %v2621
  %v2887 = vadd.f32 %v2886, %v2622
  %v2888 = vadd.f32 %v2887, %v2623
  %v2889 = vadd.f32 %v2888, %v2624
  %v2890 = vadd.f32 %v2889, %v2625
  %v2891 = vadd.f32 %v2890, %v2626
  %v2892 = vadd.f32 %v2891, %v2627
  %v2893 = vadd.f32 %v2892, %v2628
  %v2894 = vadd.f32 %v2893, %v2629
  %v2895 = vadd.f32 %v2894, %v2630
  %v2896 = vadd.f32 %v2895, %v2631
  %v2897 = vadd.f32 %v2896, %v2632
  %v2898 = vadd.f32 %v2897, %v2633
  %v2899 = vadd.f32 %v2898, %v2634
  %v2900 = vadd.f32 %v2899, %v2635
  %v2901 = vadd.f32 %v2900, %v2636
  %v2902 = vadd.f32 %v2901, %v2637
  %v2903 = vadd.f32 %v2902, %v2638
  %v2904 = vadd.f32 %v2903, %v2639
  %v2905 = vadd.f32 %v2904, %v2640
  %v2906 = vadd.f32 %v2905, %v2641
  %v2907 = vadd.f32 %v2906, %v2642
  %v2908 = vadd.f32 %v2907, %v2643
  %v2909 = vrot.slane %v2908, 4
  %v2910 = vadd.f32 %v2908, %v2909
  %v2911 = vrot.slane %v2910, 2
  %v2912 = vadd.f32 %v2910, %v2911
  %v2913 = vrot.slane %v2912, 1
  %v2914 = vadd.f32 %v2912, %v2913
  %v2915 = vadd.f32 %v2644, %v2645
  %v2916 = vadd.f32 %v2915, %v2646
  %v2917 = vadd.f32 %v2916, %v2647
  %v2918 = vadd.f32 %v2917, %v2648
  %v2919 = vadd.f32 %v2918, %v2649
  %v2920 = vadd.f32 %v2919, %v2650
  %v2921 = vadd.f32 %v2920, %v2651
  %v2922 = vadd.f32 %v2921, %v2652
  %v2923 = vadd.f32 %v2922, %v2653
  %v2924 = vadd.f32 %v2923, %v2654
  %v2925 = vadd.f32 %v2924, %v2655
  %v2926 = vadd.f32 %v2925, %v2656
  %v2927 = vadd.f32 %v2926, %v2657
  %v2928 = vadd.f32 %v2927, %v2658
  %v2929 = vadd.f32 %v2928, %v2659
  %v2930 = vadd.f32 %v2929, %v2660
  %v2931 = vadd.f32 %v2930, %v2661
  %v2932 = vadd.f32 %v2931, %v2662
  %v2933 = vadd.f32 %v2932, %v2663
  %v2934 = vadd.f32 %v2933, %v2664
  %v2935 = vadd.f32 %v2934, %v2665
  %v2936 = vadd.f32 %v2935, %v2666
  %v2937 = vadd.f32 %v2936, %v2667
  %v2938 = vadd.f32 %v2937, %v2668
  %v2939 = vadd.f32 %v2938, %v2669
  %v2940 = vadd.f32 %v2939, %v2670
  %v2941 = vadd.f32 %v2940, %v2671
  %v2942 = vadd.f32 %v2941, %v2672
  %v2943 = vadd.f32 %v2942, %v2673
  %v2944 = vadd.f32 %v2943, %v2674
  %v2945 = vadd.f32 %v2944, %v2675
  %v2946 = vrot.slane %v2945, 4
  %v2947 = vadd.f32 %v2945, %v2946
  %v2948 = vrot.slane %v2947, 2
  %v2949 = vadd.f32 %v2947, %v2948
  %v2950 = vrot.slane %v2949, 1
  %v2951 = vadd.f32 %v2949, %v2950
  %v2952 = vadd.f32 %v2676, %v2677
  %v2953 = vadd.f32 %v2952, %v2678
  %v2954 = vadd.f32 %v2953, %v2679
  %v2955 = vadd.f32 %v2954, %v2680
  %v2956 = vadd.f32 %v2955, %v2681
  %v2957 = vadd.f32 %v2956, %v2682
  %v2958 = vadd.f32 %v2957, %v2683
  %v2959 = vadd.f32 %v2958, %v2684
  %v2960 = vadd.f32 %v2959, %v2685
  %v2961 = vadd.f32 %v2960, %v2686
  %v2962 = vadd.f32 %v2961, %v2687
  %v2963 = vadd.f32 %v2962, %v2688
  %v2964 = vadd.f32 %v2963, %v2689
  %v2965 = vadd.f32 %v2964, %v2690
  %v2966 = vadd.f32 %v2965, %v2691
  %v2967 = vadd.f32 %v2966, %v2692
  %v2968 = vadd.f32 %v2967, %v2693
  %v2969 = vadd.f32 %v2968, %v2694
  %v2970 = vadd.f32 %v2969, %v2695
  %v2971 = vadd.f32 %v2970, %v2696
  %v2972 = vadd.f32 %v2971, %v2697
  %v2973 = vadd.f32 %v2972, %v2698
  %v2974 = vadd.f32 %v2973, %v2699
  %v2975 = vadd.f32 %v2974, %v2700
  %v2976 = vadd.f32 %v2975, %v2701
  %v2977 = vadd.f32 %v2976, %v2702
  %v2978 = vadd.f32 %v2977, %v2703
  %v2979 = vadd.f32 %v2978, %v2704
  %v2980 = vadd.f32 %v2979, %v2705
  %v2981 = vadd.f32 %v2980, %v2706
  %v2982 = vadd.f32 %v2981, %v2707
  %v2983 = vrot.slane %v2982, 4
  %v2984 = vadd.f32 %v2982, %v2983
  %v2985 = vrot.slane %v2984, 2
  %v2986 = vadd.f32 %v2984, %v2985
  %v2987 = vrot.slane %v2986, 1
  %v2988 = vadd.f32 %v2986, %v2987
  %v2989 = vadd.f32 %v2708, %v2709
  %v2990 = vadd.f32 %v2989, %v2710
  %v2991 = vadd.f32 %v2990, %v2711
  %v2992 = vadd.f32 %v2991, %v2712
  %v2993 = vadd.f32 %v2992, %v2713
  %v2994 = vadd.f32 %v2993, %v2714
  %v2995 = vadd.f32 %v2994, %v2715
  %v2996 = vadd.f32 %v2995, %v2716
  %v2997 = vadd.f32 %v2996, %v2717
  %v2998 = vadd.f32 %v2997, %v2718
  %v2999 = vadd.f32 %v2998, %v2719
  %v3000 = vadd.f32 %v2999, %v2720
  %v3001 = vadd.f32 %v3000, %v2721
  %v3002 = vadd.f32 %v3001, %v2722
  %v3003 = vadd.f32 %v3002, %v2723
  %v3004 = vadd.f32 %v3003, %v2724
  %v3005 = vadd.f32 %v3004, %v2725
  %v3006 = vadd.f32 %v3005, %v2726
  %v3007 = vadd.f32 %v3006, %v2727
  %v3008 = vadd.f32 %v3007, %v2728
  %v3009 = vadd.f32 %v3008, %v2729
  %v3010 = vadd.f32 %v3009, %v2730
  %v3011 = vadd.f32 %v3010, %v2731
  %v3012 = vadd.f32 %v3011, %v2732
  %v3013 = vadd.f32 %v3012, %v2733
  %v3014 = vadd.f32 %v3013, %v2734
  %v3015 = vadd.f32 %v3014, %v2735
  %v3016 = vadd.f32 %v3015, %v2736
  %v3017 = vadd.f32 %v3016, %v2737
  %v3018 = vadd.f32 %v3017, %v2738
  %v3019 = vadd.f32 %v3018, %v2739
  %v3020 = vrot.slane %v3019, 4
  %v3021 = vadd.f32 %v3019, %v3020
  %v3022 = vrot.slane %v3021, 2
  %v3023 = vadd.f32 %v3021, %v3022
  %v3024 = vrot.slane %v3023, 1
  %v3025 = vadd.f32 %v3023, %v3024
  %v3026 = vadd.f32 %v2740, %v2741
  %v3027 = vadd.f32 %v3026, %v2742
  %v3028 = vadd.f32 %v3027, %v2743
  %v3029 = vadd.f32 %v3028, %v2744
  %v3030 = vadd.f32 %v3029, %v2745
  %v3031 = vadd.f32 %v3030, %v2746
  %v3032 = vadd.f32 %v3031, %v2747
  %v3033 = vadd.f32 %v3032, %v2748
  %v3034 = vadd.f32 %v3033, %v2749
  %v3035 = vadd.f32 %v3034, %v2750
  %v3036 = vadd.f32 %v3035, %v2751
  %v3037 = vadd.f32 %v3036, %v2752
  %v3038 = vadd.f32 %v3037, %v2753
  %v3039 = vadd.f32 %v3038, %v2754
  %v3040 = vadd.f32 %v3039, %v2755
  %v3041 = vadd.f32 %v3040, %v2756
  %v3042 = vadd.f32 %v3041, %v2757
  %v3043 = vadd.f32 %v3042, %v2758
  %v3044 = vadd.f32 %v3043, %v2759
  %v3045 = vadd.f32 %v3044, %v2760
  %v3046 = vadd.f32 %v3045, %v2761
  %v3047 = vadd.f32 %v3046, %v2762
  %v3048 = vadd.f32 %v3047, %v2763
  %v3049 = vadd.f32 %v3048, %v2764
  %v3050 = vadd.f32 %v3049, %v2765
  %v3051 = vadd.f32 %v3050, %v2766
  %v3052 = vadd.f32 %v3051, %v2767
  %v3053 = vadd.f32 %v3052, %v2768
  %v3054 = vadd.f32 %v3053, %v2769
  %v3055 = vadd.f32 %v3054, %v2770
  %v3056 = vadd.f32 %v3055, %v2771
  %v3057 = vrot.slane %v3056, 4
  %v3058 = vadd.f32 %v3056, %v3057
  %v3059 = vrot.slane %v3058, 2
  %v3060 = vadd.f32 %v3058, %v3059
  %v3061 = vrot.slane %v3060, 1
  %v3062 = vadd.f32 %v3060, %v3061
  %v3063 = vadd.f32 %v2772, %v2773
  %v3064 = vadd.f32 %v3063, %v2774
  %v3065 = vadd.f32 %v3064, %v2775
  %v3066 = vadd.f32 %v3065, %v2776
  %v3067 = vadd.f32 %v3066, %v2777
  %v3068 = vadd.f32 %v3067, %v2778
  %v3069 = vadd.f32 %v3068, %v2779
  %v3070 = vadd.f32 %v3069, %v2780
  %v3071 = vadd.f32 %v3070, %v2781
  %v3072 = vadd.f32 %v3071, %v2782
  %v3073 = vadd.f32 %v3072, %v2783
  %v3074 = vadd.f32 %v3073, %v2784
  %v3075 = vadd.f32 %v3074, %v2785
  %v3076 = vadd.f32 %v3075, %v2786
  %v3077 = vadd.f32 %v3076, %v2787
  %v3078 = vadd.f32 %v3077, %v2788
  %v3079 = vadd.f32 %v3078, %v2789
  %v3080 = vadd.f32 %v3079, %v2790
  %v3081 = vadd.f32 %v3080, %v2791
  %v3082 = vadd.f32 %v3081, %v2792
  %v3083 = vadd.f32 %v3082, %v2793
  %v3084 = vadd.f32 %v3083, %v2794
  %v3085 = vadd.f32 %v3084, %v2795
  %v3086 = vadd.f32 %v3085, %v2796
  %v3087 = vadd.f32 %v3086, %v2797
  %v3088 = vadd.f32 %v3087, %v2798
  %v3089 = vadd.f32 %v3088, %v2799
  %v3090 = vadd.f32 %v3089, %v2800
  %v3091 = vadd.f32 %v3090, %v2801
  %v3092 = vadd.f32 %v3091, %v2802
  %v3093 = vadd.f32 %v3092, %v2803
  %v3094 = vrot.slane %v3093, 4
  %v3095 = vadd.f32 %v3093, %v3094
  %v3096 = vrot.slane %v3095, 2
  %v3097 = vadd.f32 %v3095, %v3096
  %v3098 = vrot.slane %v3097, 1
  %v3099 = vadd.f32 %v3097, %v3098
  %v3100 = vpack.c.bf16 %v2840, %v2840
  %v3101 = vpack.c.bf16 %v2877, %v2877
  %v3102 = vpack.c.bf16 %v2914, %v2914
  %v3103 = vpack.c.bf16 %v2951, %v2951
  %v3104 = vpack.c.bf16 %v2988, %v2988
  %v3105 = vpack.c.bf16 %v3025, %v3025
  %v3106 = vpack.c.bf16 %v3062, %v3062
  %v3107 = vpack.c.bf16 %v3099, %v3099
  %v3108 = vld [vmem:[%s2] sm:$0xf]
  %v3109 = vld [vmem:[%s2 + $0x4] sm:$0xf]
  %v3110 = vld [vmem:[%s2 + $0x8] sm:$0xf]
  %v3111 = vld [vmem:[%s2 + $0xc] sm:$0xf]
  %v3112 = vld [vmem:[%s2 + $0x10] sm:$0xf]
  %v3113 = vld [vmem:[%s2 + $0x14] sm:$0xf]
  %v3114 = vld [vmem:[%s2 + $0x18] sm:$0xf]
  %v3115 = vld [vmem:[%s2 + $0x1c] sm:$0xf]
  %v3116 = vld [vmem:[%s2 + $0x20] sm:$0xf]
  %v3117 = vld [vmem:[%s2 + $0x24] sm:$0xf]
  %v3118 = vld [vmem:[%s2 + $0x28] sm:$0xf]
  %v3119 = vld [vmem:[%s2 + $0x2c] sm:$0xf]
  %v3120 = vld [vmem:[%s2 + $0x30] sm:$0xf]
  %v3121 = vld [vmem:[%s2 + $0x34] sm:$0xf]
  %v3122 = vld [vmem:[%s2 + $0x38] sm:$0xf]
  %v3123 = vld [vmem:[%s2 + $0x3c] sm:$0xf]
  %v3124 = vld [vmem:[%s3] sm:$0x1]
  %v3126 = vlaneseq
  %v3127 = vshrl.u32 %v3126, 7
  %v3128 = vsub.s32 0, %v3127
  %v3129 = vrot.slane %v3124, %v3128
  %v3139 = vunpack.c.l.b16 %v3100
  %v3140 = vunpack.c.l.b16 %v3101
  %v3141 = vunpack.c.l.b16 %v3102
  %v3142 = vunpack.c.l.b16 %v3103
  %v3143 = vunpack.c.l.b16 %v3104
  %v3144 = vunpack.c.l.b16 %v3105
  %v3145 = vunpack.c.l.b16 %v3106
  %v3146 = vunpack.c.l.b16 %v3107
  %vm3147 = vcmask 1041409
  %v3148 = vsel %vm3147, %v3140, %v3139
  %vm3149 = vcmask 1042434
  %v3150 = vsel %vm3149, %v3141, %v3148
  %vm3151 = vcmask 1043459
  %v3152 = vsel %vm3151, %v3142, %v3150
  %vm3153 = vcmask 1044484
  %v3154 = vsel %vm3153, %v3143, %v3152
  %vm3155 = vcmask 1045509
  %v3156 = vsel %vm3155, %v3144, %v3154
  %vm3157 = vcmask 1046534
  %v3158 = vsel %vm3157, %v3145, %v3156
  %vm3159 = vcmask 1047559
  %v3160 = vsel %vm3159, %v3146, %v3158
  %v3161 = vpack.c.b16 %v3160, %v3160
  %v3179 = vunpack.c.l.b16 %v3108
  %v3180 = vunpack.c.l.b16 %v3109
  %v3181 = vunpack.c.l.b16 %v3110
  %v3182 = vunpack.c.l.b16 %v3111
  %v3183 = vunpack.c.l.b16 %v3112
  %v3184 = vunpack.c.l.b16 %v3113
  %v3185 = vunpack.c.l.b16 %v3114
  %v3186 = vunpack.c.l.b16 %v3115
  %v3187 = vunpack.c.l.b16 %v3116
  %v3188 = vunpack.c.l.b16 %v3117
  %v3189 = vunpack.c.l.b16 %v3118
  %v3190 = vunpack.c.l.b16 %v3119
  %v3191 = vunpack.c.l.b16 %v3120
  %v3192 = vunpack.c.l.b16 %v3121
  %v3193 = vunpack.c.l.b16 %v3122
  %v3194 = vunpack.c.l.b16 %v3123
  %v3195 = vpack.c.b16 %v3180, %v3179
  %v3196 = vpack.c.b16 %v3182, %v3181
  %v3197 = vpack.c.b16 %v3184, %v3183
  %v3198 = vpack.c.b16 %v3186, %v3185
  %v3199 = vpack.c.b16 %v3188, %v3187
  %v3200 = vpack.c.b16 %v3190, %v3189
  %v3201 = vpack.c.b16 %v3192, %v3191
  %v3202 = vpack.c.b16 %v3194, %v3193
  %3211 = vmatprep.subr.bf16.mxu0 0
  %3212 = vmatpush1.bf16.msra.mxu0 %v3195
  %3213 = vmatprep.subr.bf16.mxu0 0
  %3214 = vmatpush1.bf16.msra.mxu0 %v3196
  %3215 = vmatprep.subr.bf16.mxu0 0
  %3216 = vmatpush1.bf16.msra.mxu0 %v3197
  %3217 = vmatprep.subr.bf16.mxu0 0
  %3218 = vmatpush1.bf16.msra.mxu0 %v3198
  %3219 = vmatprep.subr.bf16.mxu0 0
  %3220 = vmatpush1.bf16.msra.mxu0 %v3199
  %3221 = vmatprep.subr.bf16.mxu0 0
  %3222 = vmatpush1.bf16.msra.mxu0 %v3200
  %3223 = vmatprep.subr.bf16.mxu0 0
  %3224 = vmatpush1.bf16.msra.mxu0 %v3201
  %3225 = vmatprep.subr.bf16.mxu0 0
  %3226 = vmatpush1.bf16.msra.mxu0 %v3202
  %3227 = vmatprep.subr.bf16.mxu0 0
  %3228 = vmatpush1.bf16.msra.mxu0 0
  %3229 = vmatprep.subr.bf16.mxu0 0
  %3230 = vmatpush1.bf16.msra.mxu0 0
  %3231 = vmatprep.subr.bf16.mxu0 0
  %3232 = vmatpush1.bf16.msra.mxu0 0
  %3233 = vmatprep.subr.bf16.mxu0 0
  %3234 = vmatpush1.bf16.msra.mxu0 0
  %3235 = vmatprep.subr.bf16.mxu0 0
  %3236 = vmatpush1.bf16.msra.mxu0 0
  %3237 = vmatprep.subr.bf16.mxu0 0
  %3238 = vmatpush1.bf16.msra.mxu0 0
  %3239 = vmatprep.subr.bf16.mxu0 0
  %3240 = vmatpush1.bf16.msra.mxu0 0
  %3241 = vmatprep.subr.bf16.mxu0 0
  %3242 = vmatpush1.bf16.msra.mxu0 0
  %3243 = vmatprep.mubr.bf16.mxu0 0
  %3244 = vmatmul.mubr.bf16.gmra.mrb[0].mxu0 %v3161
  %v3245 = vpop.f32.mrb[0].mxu0
  %v3246 = vadd.f32 %v3129, %v3245
  %v3247 = vpop.f32.mrb[0].mxu0
  %v3248 = vpop.f32.mrb[0].mxu0
  %v3249 = vpop.f32.mrb[0].mxu0
  %3250 = vdwg.mxu0
  %3251 = vst [vmem:[%s4] sm:$0xff] %v3246
  // Predicated region
  $region18: #{base_model_forward.1} parent=0 // pred_check
    _
  $region19: #{base_model_forward.1} parent=0 // pred_check_branch
    %3253 = sbr.rel (0) target = $region21
  $region20: #{base_model_forward.1} parent=0 // pred_region
    _
  $region21: #{base_model_forward.1} parent=0 // pred_fallthru
    _
  // Predicated region
  $region22: #{base_model_forward.1} parent=0 // pred_check
    _
  $region23: #{base_model_forward.1} parent=0 // pred_check_branch
    %3255 = sbr.rel (0) target = $region25
  $region24: #{base_model_forward.1} parent=0 // pred_region
    _
  $region25: #{base_model_forward.1} parent=0 // pred_fallthru
    _

</llo_original>
